<compile_context>
chip_gen: v6e
topology: v6e:2x2x1
jax: 0.10.0
libtpu: 0.0.40
codegen_flags: <defaults>
</compile_context>

<pallas_src>
import functools

import jax
import jax.numpy as jnp
from jax.experimental import pallas as pl
from jax.experimental.pallas import tpu as pltpu


# ------------------------------- helpers -----------------------------------

def _round_up(x, m):
    return ((x + m - 1) // m) * m


def _pick_row_tile(M, cap=512):
    """Largest row tile that divides M, is a multiple of 8, and (when possible)
    leaves >= 2 grid steps for pipelining / megacore sharding."""
    caps = (min(cap, M // 2), min(cap, M)) if M >= 16 else (min(cap, M),)
    for hi in caps:
        for tm in range(hi, 7, -1):
            if tm % 8 == 0 and M % tm == 0:
                return tm
    return M


def _lane_factor(M, C, target=512):
    """How many (C)-channel rows to pack side-by-side for lane-dense stores."""
    f = max(1, target // C)
    while f > 1 and M % f:
        f //= 2
    return f


# --------------------------- Pallas kernels ---------------------------------

def _conv3x3_kernel(xf_ref, w_ref, b_ref, m_ref, y_ref, st_ref, *, S):
    """Implicit-GEMM 3x3 'same' convolution for one batch element.

    xf_ref : (1, Lp, C)   zero-padded, spatially flattened input, f32
    w_ref  : (9, C, Cout) taps, bf16
    b_ref  : (1, Cout)    bias, f32
    m_ref  : (1, G)       validity mask over wide output rows ((g % S) < W), f32
    y_ref  : (1, G, Cout) wide conv output (garbage in the last 2 cols per row)
    st_ref : (1, 2, Cout) masked per-channel [sum, sum_of_squares] (BN pass 1)
    """
    G = y_ref.shape[1]
    cout = y_ref.shape[2]
    acc = jnp.zeros((G, cout), jnp.float32)
    for ki in range(3):
        for kj in range(3):
            off = ki * S + kj                              # flat tap offset
            a = xf_ref[0, off:off + G, :].astype(jnp.bfloat16)
            acc = acc + jnp.dot(a, w_ref[ki * 3 + kj],
                                preferred_element_type=jnp.float32)
    y = acc + b_ref[...]                                   # fused bias epilogue
    y_ref[0] = y
    # BN partial statistics via ones-vector matmuls (MXU), garbage cols masked.
    m = m_ref[...]
    st_ref[0, 0:1, :] = jnp.dot(m, y, preferred_element_type=jnp.float32)
    st_ref[0, 1:2, :] = jnp.dot(m, y * y, preferred_element_type=jnp.float32)


def conv3x3_bias_stats(xf, w, b, mask, *, H, W):
    """xf: (N, Lp, C) padded-flattened f32; w: (3,3,C,Cout); b: (Cout,).
    Returns (wide conv output (N, H*(W+2), Cout), per-image stats (N, 2, Cout))."""
    N, Lp, C = xf.shape
    cout = w.shape[-1]
    S = W + 2
    G = H * S
    w9 = w.reshape(9, C, cout).astype(jnp.bfloat16)
    kernel = functools.partial(_conv3x3_kernel, S=S)
    return pl.pallas_call(
        kernel,
        out_shape=(jax.ShapeDtypeStruct((N, G, cout), jnp.float32),
                   jax.ShapeDtypeStruct((N, 2, cout), jnp.float32)),
        grid=(N,),
        in_specs=[
            pl.BlockSpec((1, Lp, C), lambda n: (n, 0, 0)),
            pl.BlockSpec((9, C, cout), lambda n: (0, 0, 0)),
            pl.BlockSpec((1, cout), lambda n: (0, 0)),
            pl.BlockSpec((1, G), lambda n: (0, 0)),
        ],
        out_specs=(
            pl.BlockSpec((1, G, cout), lambda n: (n, 0, 0)),
            pl.BlockSpec((1, 2, cout), lambda n: (n, 0, 0)),
        ),
        compiler_params=pltpu.CompilerParams(
            dimension_semantics=("parallel",)),
    )(xf, w9, b.reshape(1, cout).astype(jnp.float32), mask)


def _bn_prelu_kernel(y_ref, sc_ref, sh_ref, a_ref, o_ref):
    v = y_ref[...] * sc_ref[...] + sh_ref[...]
    o_ref[...] = jnp.where(v >= 0, v, a_ref[0] * v)


def _bn_add_kernel(y_ref, r_ref, sc_ref, sh_ref, o_ref):
    o_ref[...] = r_ref[...] + y_ref[...] * sc_ref[...] + sh_ref[...]


def bn_prelu(y2d, scale, shift, alpha):
    """prelu(y * scale + shift) -- fused BN normalize + PReLU, lane-dense."""
    M, C = y2d.shape
    f = _lane_factor(M, C)
    L, M2 = C * f, M // f
    tm = _pick_row_tile(M2)
    out = pl.pallas_call(
        _bn_prelu_kernel,
        out_shape=jax.ShapeDtypeStruct((M2, L), jnp.float32),
        grid=(M2 // tm,),
        in_specs=[
            pl.BlockSpec((tm, L), lambda i: (i, 0)),
            pl.BlockSpec((1, L), lambda i: (0, 0)),
            pl.BlockSpec((1, L), lambda i: (0, 0)),
            pl.BlockSpec(memory_space=pltpu.MemorySpace.SMEM),
        ],
        out_specs=pl.BlockSpec((tm, L), lambda i: (i, 0)),
        compiler_params=pltpu.CompilerParams(dimension_semantics=("parallel",)),
    )(y2d.reshape(M2, L),
      jnp.tile(scale, f).reshape(1, L),
      jnp.tile(shift, f).reshape(1, L),
      alpha)
    return out.reshape(M, C)


def bn_add_residual(y2d, res2d, scale, shift):
    """res + (y * scale + shift) -- fused BN normalize + residual add."""
    M, C = y2d.shape
    f = _lane_factor(M, C)
    L, M2 = C * f, M // f
    tm = _pick_row_tile(M2)
    out = pl.pallas_call(
        _bn_add_kernel,
        out_shape=jax.ShapeDtypeStruct((M2, L), jnp.float32),
        grid=(M2 // tm,),
        in_specs=[
            pl.BlockSpec((tm, L), lambda i: (i, 0)),
            pl.BlockSpec((tm, L), lambda i: (i, 0)),
            pl.BlockSpec((1, L), lambda i: (0, 0)),
            pl.BlockSpec((1, L), lambda i: (0, 0)),
        ],
        out_specs=pl.BlockSpec((tm, L), lambda i: (i, 0)),
        compiler_params=pltpu.CompilerParams(dimension_semantics=("parallel",)),
    )(y2d.reshape(M2, L), res2d.reshape(M2, L),
      jnp.tile(scale, f).reshape(1, L), jnp.tile(shift, f).reshape(1, L))
    return out.reshape(M, C)


# ----------------------------- plain-JAX glue -------------------------------

def _pad_flatten(x_nhwc, Lp):
    """(N,H,W,C) -> zero-padded, spatially flattened (N, Lp, C)."""
    N, H, W, C = x_nhwc.shape
    S = W + 2
    xp = jnp.pad(x_nhwc, ((0, 0), (1, 1), (1, 1), (0, 0)))
    xf = xp.reshape(N, (H + 2) * S, C)
    return jnp.pad(xf, ((0, 0), (0, Lp - (H + 2) * S), (0, 0)))


def _extract_valid(y_wide, N, H, W, C):
    """Wide layout (N, H*(W+2), C) -> (N, H, W, C) (drop the 2 garbage cols/row)."""
    S = W + 2
    return y_wide.reshape(N, H, S, C)[:, :, :W, :]


def _bn_scale_shift(stats, gamma, beta, count, eps):
    s = jnp.sum(stats, axis=0)             # (2, C): [sum, sum_of_squares]
    mean = s[0] / count
    var = s[1] / count - mean * mean       # biased variance (PyTorch train mode)
    scale = gamma * jax.lax.rsqrt(var + eps)
    shift = beta - mean * scale
    return scale, shift


# -------------------------------- forward -----------------------------------

def residual_block_forward(params, x_nchw):
    x = jnp.transpose(x_nchw, (0, 2, 3, 1)).astype(jnp.float32)   # NCHW -> NHWC
    N, H, W, C = x.shape
    S = W + 2
    G = H * S
    Lp = _round_up((H + 2) * S + 2, 8)     # +2 rows of slack for the last taps
    cnt = N * H * W
    mask = (jnp.arange(G) % S < W).astype(jnp.float32).reshape(1, G)

    # conv1 (+ bias, + BN1 partial stats fused in the conv epilogue)
    y1w, st1 = conv3x3_bias_stats(_pad_flatten(x, Lp),
                                  params["w1"], params["b1"], mask, H=H, W=W)
    sc1, sh1 = _bn_scale_shift(st1, params["g1"], params["be1"], cnt, eps=0.8)

    # fused BN1 normalize + PReLU (done in the wide layout; garbage columns are
    # dropped when the conv2 input is rebuilt)
    z1w = bn_prelu(y1w.reshape(N * G, C), sc1, sh1, params["alpha"])
    z1 = _extract_valid(z1w.reshape(N, G, C), N, H, W, C)

    # conv2 (+ bias, + BN2 partial stats)
    y2w, st2 = conv3x3_bias_stats(_pad_flatten(z1, Lp),
                                  params["w2"], params["b2"], mask, H=H, W=W)
    sc2, sh2 = _bn_scale_shift(st2, params["g2"], params["be2"], cnt, eps=0.8)

    # fused BN2 normalize + residual add
    y2 = _extract_valid(y2w, N, H, W, C).reshape(N * H * W, C)
    out = bn_add_residual(y2, x.reshape(N * H * W, C), sc2, sh2)
    return jnp.transpose(out.reshape(N, H, W, C), (0, 3, 1, 2))   # NHWC -> NCHW


# ------------------------------- parameters ----------------------------------

def make_params(key, c):
    ks = jax.random.split(key, 8)

    def conv_w(k, cin, cout):
        return jax.random.normal(k, (3, 3, cin, cout), jnp.float32) * (9 * cin) ** -0.5

    return {
        "w1": conv_w(ks[0], c, c),
        "b1": 0.01 * jax.random.normal(ks[1], (c,), jnp.float32),
        "g1": 1.0 + 0.1 * jax.random.normal(ks[2], (c,), jnp.float32),
        "be1": 0.1 * jax.random.normal(ks[3], (c,), jnp.float32),
        "alpha": jnp.full((1,), 0.25, jnp.float32),        # PyTorch PReLU default
        "w2": conv_w(ks[4], c, c),
        "b2": 0.01 * jax.random.normal(ks[5], (c,), jnp.float32),
        "g2": 1.0 + 0.1 * jax.random.normal(ks[6], (c,), jnp.float32),
        "be2": 0.1 * jax.random.normal(ks[7], (c,), jnp.float32),
    }


def reference_forward(params, x_nchw):
    """Pure-JAX (XLA) reference of the PyTorch ResidualBlock forward."""
    x = jnp.transpose(x_nchw, (0, 2, 3, 1)).astype(jnp.float32)

    def conv(h, w, b):
        return jax.lax.conv_general_dilated(
            h, w, window_strides=(1, 1), padding=((1, 1), (1, 1)),
            dimension_numbers=("NHWC", "HWIO", "NHWC"),
            precision=jax.lax.Precision.HIGHEST) + b

    def bn(h, g, be, eps):
        m = jnp.mean(h, axis=(0, 1, 2))
        v = jnp.mean(jnp.square(h - m), axis=(0, 1, 2))
        return (h - m) * jax.lax.rsqrt(v + eps) * g + be

    h = conv(x, params["w1"], params["b1"])
    h = bn(h, params["g1"], params["be1"], 0.8)
    h = jnp.where(h >= 0, h, params["alpha"][0] * h)
    h = conv(h, params["w2"], params["b2"])
    h = bn(h, params["g2"], params["be2"], 0.8)
    return jnp.transpose(x + h, (0, 3, 1, 2))


# TODO(synk): BatchNorm running-mean/var buffer updates (a training-mode side
# effect) are omitted; they do not affect the forward output values.

if __name__ == "__main__":
    key = jax.random.PRNGKey(0)
    kp, kx = jax.random.split(key)
    C = 64                                                  # SRGAN in_features
    params = make_params(kp, C)
    x = jax.random.normal(kx, (2, C, 16, 16), jnp.float32)  # NCHW, like PyTorch

    fwd = jax.jit(residual_block_forward)
    y = fwd(params, x)
    jax.block_until_ready(y)

    assert y.shape == x.shape, y.shape
    assert bool(jnp.all(jnp.isfinite(y)))

    # bf16-MXU tolerance check against a pure-JAX f32 reference.
    y_ref = jax.jit(reference_forward)(params, x)
    err = float(jnp.max(jnp.abs(y - y_ref)))
    assert err < 1e-1, f"max abs error vs reference: {err}"
    print("KERNEL_OK")
</pallas_src>

<mosaic_0001>
module attributes {stable_mosaic.version = 11 : i64} {
  func.func @_conv3x3_kernel(%arg0: i32, %arg1: memref<1x328x64xf32, #tpu.memory_space<vmem>>, %arg2: memref<9x64x64xbf16, #tpu.memory_space<vmem>>, %arg3: memref<1x64xf32, #tpu.memory_space<vmem>>, %arg4: memref<1x288xf32, #tpu.memory_space<vmem>>, %arg5: memref<1x288x64xf32, #tpu.memory_space<vmem>>, %arg6: memref<1x2x64xf32, #tpu.memory_space<vmem>>) attributes {dimension_semantics = [#tpu.dimension_semantics<parallel>], iteration_bounds = array<i64: 2>, scalar_prefetch = 0 : i64, scratch_operands = 0 : i64, tpu.core_type = #tpu.core_type<tc>, window_params = [{transform_indices = @transform_0, window_bounds = array<i64: 1, 328, 64>}, {pipeline_mode = #tpu.pipeline_mode<synchronous>, transform_indices = @transform_1, window_bounds = array<i64: 9, 64, 64>}, {pipeline_mode = #tpu.pipeline_mode<synchronous>, transform_indices = @transform_2, window_bounds = array<i64: 1, 64>}, {pipeline_mode = #tpu.pipeline_mode<synchronous>, transform_indices = @transform_3, window_bounds = array<i64: 1, 288>}, {transform_indices = @transform_4, window_bounds = array<i64: 1, 288, 64>}, {transform_indices = @transform_5, window_bounds = array<i64: 1, 2, 64>}]} {
    %cst = arith.constant 0.000000e+00 : f32
    %0 = vector.broadcast %cst : f32 to vector<288x64xf32>
    %c0 = arith.constant 0 : index
    %c0_0 = arith.constant 0 : index
    %c0_1 = arith.constant 0 : index
    %1 = vector.load %arg1[%c0, %c0_0, %c0_1] : memref<1x328x64xf32, #tpu.memory_space<vmem>>, vector<1x288x64xf32>
    %2 = vector.shape_cast %1 : vector<1x288x64xf32> to vector<288x64xf32>
    %3 = arith.truncf %2 : vector<288x64xf32> to vector<288x64xbf16>
    %c0_2 = arith.constant 0 : index
    %c0_3 = arith.constant 0 : index
    %c0_4 = arith.constant 0 : index
    %4 = vector.load %arg2[%c0_2, %c0_3, %c0_4] : memref<9x64x64xbf16, #tpu.memory_space<vmem>>, vector<1x64x64xbf16>
    %5 = vector.shape_cast %4 : vector<1x64x64xbf16> to vector<64x64xbf16>
    %cst_5 = arith.constant dense<0.000000e+00> : vector<288x64xf32>
    %6 = tpu.matmul %3, %5, %cst_5 {dimension_numbers = #tpu.dot_dimension_numbers<[1], [0], [0], [1], [0, 0, 1, 1], [], []>} : vector<288x64xbf16>, vector<64x64xbf16>, vector<288x64xf32> -> vector<288x64xf32>
    %7 = arith.addf %0, %6 : vector<288x64xf32>
    %c0_6 = arith.constant 0 : index
    %c1 = arith.constant 1 : index
    %c0_7 = arith.constant 0 : index
    %8 = vector.load %arg1[%c0_6, %c1, %c0_7] : memref<1x328x64xf32, #tpu.memory_space<vmem>>, vector<1x288x64xf32>
    %9 = vector.shape_cast %8 : vector<1x288x64xf32> to vector<288x64xf32>
    %10 = arith.truncf %9 : vector<288x64xf32> to vector<288x64xbf16>
    %c1_8 = arith.constant 1 : index
    %c0_9 = arith.constant 0 : index
    %c0_10 = arith.constant 0 : index
    %11 = vector.load %arg2[%c1_8, %c0_9, %c0_10] : memref<9x64x64xbf16, #tpu.memory_space<vmem>>, vector<1x64x64xbf16>
    %12 = vector.shape_cast %11 : vector<1x64x64xbf16> to vector<64x64xbf16>
    %cst_11 = arith.constant dense<0.000000e+00> : vector<288x64xf32>
    %13 = tpu.matmul %10, %12, %cst_11 {dimension_numbers = #tpu.dot_dimension_numbers<[1], [0], [0], [1], [0, 0, 1, 1], [], []>} : vector<288x64xbf16>, vector<64x64xbf16>, vector<288x64xf32> -> vector<288x64xf32>
    %14 = arith.addf %7, %13 : vector<288x64xf32>
    %c0_12 = arith.constant 0 : index
    %c2 = arith.constant 2 : index
    %c0_13 = arith.constant 0 : index
    %15 = vector.load %arg1[%c0_12, %c2, %c0_13] : memref<1x328x64xf32, #tpu.memory_space<vmem>>, vector<1x288x64xf32>
    %16 = vector.shape_cast %15 : vector<1x288x64xf32> to vector<288x64xf32>
    %17 = arith.truncf %16 : vector<288x64xf32> to vector<288x64xbf16>
    %c2_14 = arith.constant 2 : index
    %c0_15 = arith.constant 0 : index
    %c0_16 = arith.constant 0 : index
    %18 = vector.load %arg2[%c2_14, %c0_15, %c0_16] : memref<9x64x64xbf16, #tpu.memory_space<vmem>>, vector<1x64x64xbf16>
    %19 = vector.shape_cast %18 : vector<1x64x64xbf16> to vector<64x64xbf16>
    %cst_17 = arith.constant dense<0.000000e+00> : vector<288x64xf32>
    %20 = tpu.matmul %17, %19, %cst_17 {dimension_numbers = #tpu.dot_dimension_numbers<[1], [0], [0], [1], [0, 0, 1, 1], [], []>} : vector<288x64xbf16>, vector<64x64xbf16>, vector<288x64xf32> -> vector<288x64xf32>
    %21 = arith.addf %14, %20 : vector<288x64xf32>
    %c0_18 = arith.constant 0 : index
    %c18 = arith.constant 18 : index
    %c0_19 = arith.constant 0 : index
    %22 = vector.load %arg1[%c0_18, %c18, %c0_19] : memref<1x328x64xf32, #tpu.memory_space<vmem>>, vector<1x288x64xf32>
    %23 = vector.shape_cast %22 : vector<1x288x64xf32> to vector<288x64xf32>
    %24 = arith.truncf %23 : vector<288x64xf32> to vector<288x64xbf16>
    %c3 = arith.constant 3 : index
    %c0_20 = arith.constant 0 : index
    %c0_21 = arith.constant 0 : index
    %25 = vector.load %arg2[%c3, %c0_20, %c0_21] : memref<9x64x64xbf16, #tpu.memory_space<vmem>>, vector<1x64x64xbf16>
    %26 = vector.shape_cast %25 : vector<1x64x64xbf16> to vector<64x64xbf16>
    %cst_22 = arith.constant dense<0.000000e+00> : vector<288x64xf32>
    %27 = tpu.matmul %24, %26, %cst_22 {dimension_numbers = #tpu.dot_dimension_numbers<[1], [0], [0], [1], [0, 0, 1, 1], [], []>} : vector<288x64xbf16>, vector<64x64xbf16>, vector<288x64xf32> -> vector<288x64xf32>
    %28 = arith.addf %21, %27 : vector<288x64xf32>
    %c0_23 = arith.constant 0 : index
    %c19 = arith.constant 19 : index
    %c0_24 = arith.constant 0 : index
    %29 = vector.load %arg1[%c0_23, %c19, %c0_24] : memref<1x328x64xf32, #tpu.memory_space<vmem>>, vector<1x288x64xf32>
    %30 = vector.shape_cast %29 : vector<1x288x64xf32> to vector<288x64xf32>
    %31 = arith.truncf %30 : vector<288x64xf32> to vector<288x64xbf16>
    %c4 = arith.constant 4 : index
    %c0_25 = arith.constant 0 : index
    %c0_26 = arith.constant 0 : index
    %32 = vector.load %arg2[%c4, %c0_25, %c0_26] : memref<9x64x64xbf16, #tpu.memory_space<vmem>>, vector<1x64x64xbf16>
    %33 = vector.shape_cast %32 : vector<1x64x64xbf16> to vector<64x64xbf16>
    %cst_27 = arith.constant dense<0.000000e+00> : vector<288x64xf32>
    %34 = tpu.matmul %31, %33, %cst_27 {dimension_numbers = #tpu.dot_dimension_numbers<[1], [0], [0], [1], [0, 0, 1, 1], [], []>} : vector<288x64xbf16>, vector<64x64xbf16>, vector<288x64xf32> -> vector<288x64xf32>
    %35 = arith.addf %28, %34 : vector<288x64xf32>
    %c0_28 = arith.constant 0 : index
    %c20 = arith.constant 20 : index
    %c0_29 = arith.constant 0 : index
    %36 = vector.load %arg1[%c0_28, %c20, %c0_29] : memref<1x328x64xf32, #tpu.memory_space<vmem>>, vector<1x288x64xf32>
    %37 = vector.shape_cast %36 : vector<1x288x64xf32> to vector<288x64xf32>
    %38 = arith.truncf %37 : vector<288x64xf32> to vector<288x64xbf16>
    %c5 = arith.constant 5 : index
    %c0_30 = arith.constant 0 : index
    %c0_31 = arith.constant 0 : index
    %39 = vector.load %arg2[%c5, %c0_30, %c0_31] : memref<9x64x64xbf16, #tpu.memory_space<vmem>>, vector<1x64x64xbf16>
    %40 = vector.shape_cast %39 : vector<1x64x64xbf16> to vector<64x64xbf16>
    %cst_32 = arith.constant dense<0.000000e+00> : vector<288x64xf32>
    %41 = tpu.matmul %38, %40, %cst_32 {dimension_numbers = #tpu.dot_dimension_numbers<[1], [0], [0], [1], [0, 0, 1, 1], [], []>} : vector<288x64xbf16>, vector<64x64xbf16>, vector<288x64xf32> -> vector<288x64xf32>
    %42 = arith.addf %35, %41 : vector<288x64xf32>
    %c0_33 = arith.constant 0 : index
    %c36 = arith.constant 36 : index
    %c0_34 = arith.constant 0 : index
    %43 = vector.load %arg1[%c0_33, %c36, %c0_34] : memref<1x328x64xf32, #tpu.memory_space<vmem>>, vector<1x288x64xf32>
    %44 = vector.shape_cast %43 : vector<1x288x64xf32> to vector<288x64xf32>
    %45 = arith.truncf %44 : vector<288x64xf32> to vector<288x64xbf16>
    %c6 = arith.constant 6 : index
    %c0_35 = arith.constant 0 : index
    %c0_36 = arith.constant 0 : index
    %46 = vector.load %arg2[%c6, %c0_35, %c0_36] : memref<9x64x64xbf16, #tpu.memory_space<vmem>>, vector<1x64x64xbf16>
    %47 = vector.shape_cast %46 : vector<1x64x64xbf16> to vector<64x64xbf16>
    %cst_37 = arith.constant dense<0.000000e+00> : vector<288x64xf32>
    %48 = tpu.matmul %45, %47, %cst_37 {dimension_numbers = #tpu.dot_dimension_numbers<[1], [0], [0], [1], [0, 0, 1, 1], [], []>} : vector<288x64xbf16>, vector<64x64xbf16>, vector<288x64xf32> -> vector<288x64xf32>
    %49 = arith.addf %42, %48 : vector<288x64xf32>
    %c0_38 = arith.constant 0 : index
    %c37 = arith.constant 37 : index
    %c0_39 = arith.constant 0 : index
    %50 = vector.load %arg1[%c0_38, %c37, %c0_39] : memref<1x328x64xf32, #tpu.memory_space<vmem>>, vector<1x288x64xf32>
    %51 = vector.shape_cast %50 : vector<1x288x64xf32> to vector<288x64xf32>
    %52 = arith.truncf %51 : vector<288x64xf32> to vector<288x64xbf16>
    %c7 = arith.constant 7 : index
    %c0_40 = arith.constant 0 : index
    %c0_41 = arith.constant 0 : index
    %53 = vector.load %arg2[%c7, %c0_40, %c0_41] : memref<9x64x64xbf16, #tpu.memory_space<vmem>>, vector<1x64x64xbf16>
    %54 = vector.shape_cast %53 : vector<1x64x64xbf16> to vector<64x64xbf16>
    %cst_42 = arith.constant dense<0.000000e+00> : vector<288x64xf32>
    %55 = tpu.matmul %52, %54, %cst_42 {dimension_numbers = #tpu.dot_dimension_numbers<[1], [0], [0], [1], [0, 0, 1, 1], [], []>} : vector<288x64xbf16>, vector<64x64xbf16>, vector<288x64xf32> -> vector<288x64xf32>
    %56 = arith.addf %49, %55 : vector<288x64xf32>
    %c0_43 = arith.constant 0 : index
    %c38 = arith.constant 38 : index
    %c0_44 = arith.constant 0 : index
    %57 = vector.load %arg1[%c0_43, %c38, %c0_44] : memref<1x328x64xf32, #tpu.memory_space<vmem>>, vector<1x288x64xf32>
    %58 = vector.shape_cast %57 : vector<1x288x64xf32> to vector<288x64xf32>
    %59 = arith.truncf %58 : vector<288x64xf32> to vector<288x64xbf16>
    %c8 = arith.constant 8 : index
    %c0_45 = arith.constant 0 : index
    %c0_46 = arith.constant 0 : index
    %60 = vector.load %arg2[%c8, %c0_45, %c0_46] : memref<9x64x64xbf16, #tpu.memory_space<vmem>>, vector<1x64x64xbf16>
    %61 = vector.shape_cast %60 : vector<1x64x64xbf16> to vector<64x64xbf16>
    %cst_47 = arith.constant dense<0.000000e+00> : vector<288x64xf32>
    %62 = tpu.matmul %59, %61, %cst_47 {dimension_numbers = #tpu.dot_dimension_numbers<[1], [0], [0], [1], [0, 0, 1, 1], [], []>} : vector<288x64xbf16>, vector<64x64xbf16>, vector<288x64xf32> -> vector<288x64xf32>
    %63 = arith.addf %56, %62 : vector<288x64xf32>
    %c0_48 = arith.constant 0 : index
    %c0_49 = arith.constant 0 : index
    %64 = vector.load %arg3[%c0_48, %c0_49] : memref<1x64xf32, #tpu.memory_space<vmem>>, vector<1x64xf32>
    %65 = vector.broadcast %64 : vector<1x64xf32> to vector<288x64xf32>
    %66 = arith.addf %63, %65 : vector<288x64xf32>
    %c0_50 = arith.constant 0 : index
    %c0_51 = arith.constant 0 : index
    %c0_52 = arith.constant 0 : index
    %67 = vector.load %arg5[%c0_50, %c0_51, %c0_52] : memref<1x288x64xf32, #tpu.memory_space<vmem>>, vector<1x288x64xf32>
    %68 = vector.shape_cast %67 : vector<1x288x64xf32> to vector<288x64xf32>
    %69 = vector.shape_cast %66 : vector<288x64xf32> to vector<1x288x64xf32>
    tpu.vector_store %arg5[%c0_50, %c0_51, %c0_52], %69 {strides = array<i32>} : memref<1x288x64xf32, #tpu.memory_space<vmem>>, vector<1x288x64xf32>,
    %c0_53 = arith.constant 0 : index
    %c0_54 = arith.constant 0 : index
    %70 = vector.load %arg4[%c0_53, %c0_54] : memref<1x288xf32, #tpu.memory_space<vmem>>, vector<1x288xf32>
    %cst_55 = arith.constant dense<0.000000e+00> : vector<1x64xf32>
    %71 = tpu.matmul %70, %66, %cst_55 {dimension_numbers = #tpu.dot_dimension_numbers<[1], [0], [0], [1], [0, 0, 1, 1], [], []>} : vector<1x288xf32>, vector<288x64xf32>, vector<1x64xf32> -> vector<1x64xf32>
    %c0_56 = arith.constant 0 : index
    %c0_57 = arith.constant 0 : index
    %c0_58 = arith.constant 0 : index
    %72 = vector.load %arg6[%c0_56, %c0_57, %c0_58] : memref<1x2x64xf32, #tpu.memory_space<vmem>>, vector<1x1x64xf32>
    %73 = vector.shape_cast %72 : vector<1x1x64xf32> to vector<1x64xf32>
    %74 = vector.shape_cast %71 : vector<1x64xf32> to vector<1x1x64xf32>
    tpu.vector_store %arg6[%c0_56, %c0_57, %c0_58], %74 {strides = array<i32>} : memref<1x2x64xf32, #tpu.memory_space<vmem>>, vector<1x1x64xf32>,
    %75 = arith.mulf %66, %66 : vector<288x64xf32>
    %cst_59 = arith.constant dense<0.000000e+00> : vector<1x64xf32>
    %76 = tpu.matmul %70, %75, %cst_59 {dimension_numbers = #tpu.dot_dimension_numbers<[1], [0], [0], [1], [0, 0, 1, 1], [], []>} : vector<1x288xf32>, vector<288x64xf32>, vector<1x64xf32> -> vector<1x64xf32>
    %c0_60 = arith.constant 0 : index
    %c1_61 = arith.constant 1 : index
    %c0_62 = arith.constant 0 : index
    %77 = vector.load %arg6[%c0_60, %c1_61, %c0_62] : memref<1x2x64xf32, #tpu.memory_space<vmem>>, vector<1x1x64xf32>
    %78 = vector.shape_cast %77 : vector<1x1x64xf32> to vector<1x64xf32>
    %79 = vector.shape_cast %76 : vector<1x64xf32> to vector<1x1x64xf32>
    tpu.vector_store %arg6[%c0_60, %c1_61, %c0_62], %79 {strides = array<i32>} : memref<1x2x64xf32, #tpu.memory_space<vmem>>, vector<1x1x64xf32>,
    return
  }
  func.func @transform_0(%arg0: i32) -> (i32, i32, i32) {
    %c0_i32 = arith.constant 0 : i32
    %c0_i32_0 = arith.constant 0 : i32
    %c0_i32_1 = arith.constant 0 : i32
    return %arg0, %c0_i32, %c0_i32_0 : i32, i32, i32
  }
  func.func @transform_1(%arg0: i32) -> (i32, i32, i32) {
    %c0_i32 = arith.constant 0 : i32
    %c0_i32_0 = arith.constant 0 : i32
    %c0_i32_1 = arith.constant 0 : i32
    %c0_i32_2 = arith.constant 0 : i32
    return %c0_i32, %c0_i32_0, %c0_i32_1 : i32, i32, i32
  }
  func.func @transform_2(%arg0: i32) -> (i32, i32) {
    %c0_i32 = arith.constant 0 : i32
    %c0_i32_0 = arith.constant 0 : i32
    %c0_i32_1 = arith.constant 0 : i32
    return %c0_i32, %c0_i32_0 : i32, i32
  }
  func.func @transform_3(%arg0: i32) -> (i32, i32) {
    %c0_i32 = arith.constant 0 : i32
    %c0_i32_0 = arith.constant 0 : i32
    %c0_i32_1 = arith.constant 0 : i32
    return %c0_i32, %c0_i32_0 : i32, i32
  }
  func.func @transform_4(%arg0: i32) -> (i32, i32, i32) {
    %c0_i32 = arith.constant 0 : i32
    %c0_i32_0 = arith.constant 0 : i32
    %c0_i32_1 = arith.constant 0 : i32
    return %arg0, %c0_i32, %c0_i32_0 : i32, i32, i32
  }
  func.func @transform_5(%arg0: i32) -> (i32, i32, i32) {
    %c0_i32 = arith.constant 0 : i32
    %c0_i32_0 = arith.constant 0 : i32
    %c0_i32_1 = arith.constant 0 : i32
    return %arg0, %c0_i32, %c0_i32_0 : i32, i32, i32
  }
}

module attributes {stable_mosaic.version = 11 : i64} {
  func.func @_bn_prelu_kernel(%arg0: i32, %arg1: memref<24x512xf32, #tpu.memory_space<vmem>>, %arg2: memref<1x512xf32, #tpu.memory_space<vmem>>, %arg3: memref<1x512xf32, #tpu.memory_space<vmem>>, %arg4: memref<1xf32, #tpu.memory_space<smem>>, %arg5: memref<24x512xf32, #tpu.memory_space<vmem>>) attributes {dimension_semantics = [#tpu.dimension_semantics<parallel>], iteration_bounds = array<i64: 3>, scalar_prefetch = 0 : i64, scratch_operands = 0 : i64, tpu.core_type = #tpu.core_type<tc>, window_params = [{transform_indices = @transform_0, window_bounds = array<i64: 24, 512>}, {pipeline_mode = #tpu.pipeline_mode<synchronous>, transform_indices = @transform_1, window_bounds = array<i64: 1, 512>}, {pipeline_mode = #tpu.pipeline_mode<synchronous>, transform_indices = @transform_2, window_bounds = array<i64: 1, 512>}, {transform_indices = @transform_3, window_bounds = array<i64: 1>}, {transform_indices = @transform_4, window_bounds = array<i64: 24, 512>}]} {
    %c0 = arith.constant 0 : index
    %c0_0 = arith.constant 0 : index
    %0 = vector.load %arg1[%c0, %c0_0] : memref<24x512xf32, #tpu.memory_space<vmem>>, vector<24x512xf32>
    %c0_1 = arith.constant 0 : index
    %c0_2 = arith.constant 0 : index
    %1 = vector.load %arg2[%c0_1, %c0_2] : memref<1x512xf32, #tpu.memory_space<vmem>>, vector<1x512xf32>
    %2 = vector.broadcast %1 : vector<1x512xf32> to vector<24x512xf32>
    %3 = arith.mulf %0, %2 : vector<24x512xf32>
    %c0_3 = arith.constant 0 : index
    %c0_4 = arith.constant 0 : index
    %4 = vector.load %arg3[%c0_3, %c0_4] : memref<1x512xf32, #tpu.memory_space<vmem>>, vector<1x512xf32>
    %5 = vector.broadcast %4 : vector<1x512xf32> to vector<24x512xf32>
    %6 = arith.addf %3, %5 : vector<24x512xf32>
    %cst = arith.constant 0.000000e+00 : f32
    %7 = vector.broadcast %cst : f32 to vector<24x512xf32>
    %8 = arith.cmpf oge, %6, %7 : vector<24x512xf32>
    %c0_5 = arith.constant 0 : index
    %9 = memref.load %arg4[%c0_5] : memref<1xf32, #tpu.memory_space<smem>>
    %10 = vector.broadcast %9 : f32 to vector<24x512xf32>
    %11 = arith.mulf %10, %6 : vector<24x512xf32>
    %12 = arith.select %8, %6, %11 : vector<24x512xi1>, vector<24x512xf32>
    %c0_6 = arith.constant 0 : index
    %c0_7 = arith.constant 0 : index
    %13 = vector.load %arg5[%c0_6, %c0_7] : memref<24x512xf32, #tpu.memory_space<vmem>>, vector<24x512xf32>
    tpu.vector_store %arg5[%c0_6, %c0_7], %12 {strides = array<i32>} : memref<24x512xf32, #tpu.memory_space<vmem>>, vector<24x512xf32>,
    return
  }
  func.func @transform_0(%arg0: i32) -> (i32, i32) {
    %c0_i32 = arith.constant 0 : i32
    %c0_i32_0 = arith.constant 0 : i32
    return %arg0, %c0_i32 : i32, i32
  }
  func.func @transform_1(%arg0: i32) -> (i32, i32) {
    %c0_i32 = arith.constant 0 : i32
    %c0_i32_0 = arith.constant 0 : i32
    %c0_i32_1 = arith.constant 0 : i32
    return %c0_i32, %c0_i32_0 : i32, i32
  }
  func.func @transform_2(%arg0: i32) -> (i32, i32) {
    %c0_i32 = arith.constant 0 : i32
    %c0_i32_0 = arith.constant 0 : i32
    %c0_i32_1 = arith.constant 0 : i32
    return %c0_i32, %c0_i32_0 : i32, i32
  }
  func.func @transform_3(%arg0: i32) -> i32 {
    %c0_i32 = arith.constant 0 : i32
    %c0_i32_0 = arith.constant 0 : i32
    return %c0_i32 : i32
  }
  func.func @transform_4(%arg0: i32) -> (i32, i32) {
    %c0_i32 = arith.constant 0 : i32
    %c0_i32_0 = arith.constant 0 : i32
    return %arg0, %c0_i32 : i32, i32
  }
}

module attributes {stable_mosaic.version = 11 : i64} {
  func.func @_bn_add_kernel(%arg0: i32, %arg1: memref<32x512xf32, #tpu.memory_space<vmem>>, %arg2: memref<32x512xf32, #tpu.memory_space<vmem>>, %arg3: memref<1x512xf32, #tpu.memory_space<vmem>>, %arg4: memref<1x512xf32, #tpu.memory_space<vmem>>, %arg5: memref<32x512xf32, #tpu.memory_space<vmem>>) attributes {dimension_semantics = [#tpu.dimension_semantics<parallel>], iteration_bounds = array<i64: 2>, scalar_prefetch = 0 : i64, scratch_operands = 0 : i64, tpu.core_type = #tpu.core_type<tc>, window_params = [{transform_indices = @transform_0, window_bounds = array<i64: 32, 512>}, {transform_indices = @transform_1, window_bounds = array<i64: 32, 512>}, {pipeline_mode = #tpu.pipeline_mode<synchronous>, transform_indices = @transform_2, window_bounds = array<i64: 1, 512>}, {pipeline_mode = #tpu.pipeline_mode<synchronous>, transform_indices = @transform_3, window_bounds = array<i64: 1, 512>}, {transform_indices = @transform_4, window_bounds = array<i64: 32, 512>}]} {
    %c0 = arith.constant 0 : index
    %c0_0 = arith.constant 0 : index
    %0 = vector.load %arg2[%c0, %c0_0] : memref<32x512xf32, #tpu.memory_space<vmem>>, vector<32x512xf32>
    %c0_1 = arith.constant 0 : index
    %c0_2 = arith.constant 0 : index
    %1 = vector.load %arg1[%c0_1, %c0_2] : memref<32x512xf32, #tpu.memory_space<vmem>>, vector<32x512xf32>
    %c0_3 = arith.constant 0 : index
    %c0_4 = arith.constant 0 : index
    %2 = vector.load %arg3[%c0_3, %c0_4] : memref<1x512xf32, #tpu.memory_space<vmem>>, vector<1x512xf32>
    %3 = vector.broadcast %2 : vector<1x512xf32> to vector<32x512xf32>
    %4 = arith.mulf %1, %3 : vector<32x512xf32>
    %5 = arith.addf %0, %4 : vector<32x512xf32>
    %c0_5 = arith.constant 0 : index
    %c0_6 = arith.constant 0 : index
    %6 = vector.load %arg4[%c0_5, %c0_6] : memref<1x512xf32, #tpu.memory_space<vmem>>, vector<1x512xf32>
    %7 = vector.broadcast %6 : vector<1x512xf32> to vector<32x512xf32>
    %8 = arith.addf %5, %7 : vector<32x512xf32>
    %c0_7 = arith.constant 0 : index
    %c0_8 = arith.constant 0 : index
    %9 = vector.load %arg5[%c0_7, %c0_8] : memref<32x512xf32, #tpu.memory_space<vmem>>, vector<32x512xf32>
    tpu.vector_store %arg5[%c0_7, %c0_8], %8 {strides = array<i32>} : memref<32x512xf32, #tpu.memory_space<vmem>>, vector<32x512xf32>,
    return
  }
  func.func @transform_0(%arg0: i32) -> (i32, i32) {
    %c0_i32 = arith.constant 0 : i32
    %c0_i32_0 = arith.constant 0 : i32
    return %arg0, %c0_i32 : i32, i32
  }
  func.func @transform_1(%arg0: i32) -> (i32, i32) {
    %c0_i32 = arith.constant 0 : i32
    %c0_i32_0 = arith.constant 0 : i32
    return %arg0, %c0_i32 : i32, i32
  }
  func.func @transform_2(%arg0: i32) -> (i32, i32) {
    %c0_i32 = arith.constant 0 : i32
    %c0_i32_0 = arith.constant 0 : i32
    %c0_i32_1 = arith.constant 0 : i32
    return %c0_i32, %c0_i32_0 : i32, i32
  }
  func.func @transform_3(%arg0: i32) -> (i32, i32) {
    %c0_i32 = arith.constant 0 : i32
    %c0_i32_0 = arith.constant 0 : i32
    %c0_i32_1 = arith.constant 0 : i32
    return %c0_i32, %c0_i32_0 : i32, i32
  }
  func.func @transform_4(%arg0: i32) -> (i32, i32) {
    %c0_i32 = arith.constant 0 : i32
    %c0_i32_0 = arith.constant 0 : i32
    return %arg0, %c0_i32 : i32, i32
  }
}

</mosaic_0001>

<llo_original>
// kernel: tile.23
$region0: #{tile.23}
  #allocation0 [shape = 's32[1]{0}', space=sflag, size = 0x4, scoped, tag = 'scoped memory for tile.23']
  %s0 = inlined_call_operand.vmem [shape: f32[64], index: 0, kind: input, shape index: {}]
  %s1 = inlined_call_operand.vmem [shape: f32[8,64], index: 1, kind: output, shape index: {}]
  // Predicated region
  $region2: #{tile.23} parent=0 // pred_check
    _
  $region3: #{tile.23} parent=0 // pred_check_branch
    %3 = sbr.rel (0) target = $region5
  $region4: #{tile.23} parent=0 // pred_region
    _
  $region5: #{tile.23} parent=0 // pred_fallthru
    _
  %v4 = vld [vmem:[%s0] ss:$0 sm:$0xff]
  %5 = vst [vmem:[%s1] sm:$0xff] %v4

// kernel: tile.24
$region0: #{tile.24}
  %s0 = inlined_call_operand.vmem [shape: f32[8,64], index: 0, kind: input, shape index: {}]
  %s1 = inlined_call_operand.vmem [shape: f32[1,512], index: 1, kind: output, shape index: {}]
  $region1: #{tile.24} parent=0
    #allocation0 [shape = 'u8[16384]{0}', space=vmem, size = 0x4000, scoped, tag = 'scoped mem for output reshape']
    %v2 = vld [vmem:[%s0] ss:$2 sm:$0xf]
    %vm3 = vcmask 523264
    %4 = vst.msk [vmem:[#allocation0] ss:$8 sm:$0xf] %vm3, %v2
    %s5 = scalar_lea.vmem %s0, 1
    %v6 = vld [vmem:[%s5] ss:$2 sm:$0xf]
    %7 = vrot.lane.b32.xlu0 %v6, 64
    %v8 = vpop.permute.xlu0 %7
    %vm9 = vcmask 1048064
    %10 = vst.msk [vmem:[#allocation0] ss:$8 sm:$0xf] %vm9, %v8
    %s12 = sshll.u32 1, 1
    %s13 = ssub.s32 %s12, 1
    %v15 = vld [vmem:[#allocation0] sm:%s13]
    %s16 = sshll.u32 1, 1
    %s17 = ssub.s32 %s16, 1
    %18 = vst [vmem:[%s1] sm:%s17] %v15
    %s19 = scalar_lea.vmem [#allocation0], 8
    %v20 = vld [vmem:[%s19] sm:%s13]
    %s21 = sshll.u32 1, 1
    %s22 = ssub.s32 %s21, 1
    %s23 = scalar_lea.vmem %s1, 1
    %24 = vst [vmem:[%s23] sm:%s22] %v20
    %s25 = scalar_lea.vmem [#allocation0], 16
    %v26 = vld [vmem:[%s25] sm:%s13]
    %s27 = sshll.u32 1, 1
    %s28 = ssub.s32 %s27, 1
    %s29 = smul.addr 1, 2
    %s30 = scalar_lea.vmem %s1, %s29
    %31 = vst [vmem:[%s30] sm:%s28] %v26
    %s32 = scalar_lea.vmem [#allocation0], 24
    %v33 = vld [vmem:[%s32] sm:%s13]
    %s34 = sshll.u32 1, 1
    %s35 = ssub.s32 %s34, 1
    %s36 = smul.addr 1, 3
    %s37 = scalar_lea.vmem %s1, %s36
    %38 = vst [vmem:[%s37] sm:%s35] %v33

// kernel: residual_block_forward.5
$region0: #{residual_block_forward.5}
  #allocation0 [shape = 'u32[]', space=smem, size = 0x4, offset = 0x4, fixed_abs, tag = 'smem constant byte address 0x4 - core index']
  #allocation1 [shape = 'u32[144,128]{1,0:T(1,128)}', space=vmem, size = 0x12000, scoped, tag = 'internal scratch']
  #allocation2 [shape = 'f32[1]{0:T(128)S(6)}', space=smem, size = 0x200, scoped, tag = 'scoped memory for residual_block_forward.5']
  %s0 = inlined_call_operand.vmem [shape: f32[72,512], index: 0, kind: input, shape index: {}]
  %s1 = inlined_call_operand.vmem [shape: f32[1,512], index: 1, kind: input, shape index: {}]
  %s2 = inlined_call_operand.vmem [shape: f32[1,512], index: 2, kind: input, shape index: {}]
  %s3 = inlined_call_operand.<no memory space> [shape: f32[1], index: 3, kind: input, shape index: {}]
  %s4 = inlined_call_operand.vmem [shape: f32[72,512], index: 4, kind: output, shape index: {}]
  %s5 = sld [smem:[#allocation0]]
  $region49: #{residual_block_forward.5} parent=0
    _
  %s7 = ssub.s32 1, %s5
  %s8 = scalar_select 0, %s7, %s5
  %9 = sst [smem:[#allocation2]] %s3
  loop: start=0, step=1, limit=5
  $region2: #{residual_block_forward.5} parent=0 // loop_pre_header
    _
  $region3: #{residual_block_forward.5} parent=0 // loop_header
    %s11 = sphi 0, %s15
    %p12 = scmp.ge.s32.totalorder %s11, 5
    %s21 = sphi 0, %s23
    %s24 = sphi 0, %s21
    %s25 = sphi 0, %s24
    %s41 = sphi 0, %s25
    %s45 = sphi 0, %s45
    %s47 = sphi 0, %s45
    %s48 = sphi 0, %s47
    %s62 = sphi 0, %s48
    %s66 = sphi 0, %s66
    %s68 = sphi 0, %s66
    %s69 = sphi 0, %s68
    %s83 = sphi 0, %s69
    %s87 = sphi 0, %s87
    %s89 = sphi 0, %s87
    %s90 = sphi 0, %s89
    %s104 = sphi 0, %s90
    %s110 = sphi 0, %s112
    %s113 = sphi 0, %s110
    %s114 = sphi 0, %s113
    %s130 = sphi 0, %s114
  $region4: #{residual_block_forward.5} parent=0 // loop_header_branch
    %14 = sbr.rel (%p12) target = $region8
  $region5: #{residual_block_forward.5} parent=0 // loop_body
    %s16 = ssub.s32 %s11, 1
    %s17 = ssub.s32 %s11, 2
    %s18 = sadd.s32 %s11, 1
    %s19 = ssub.s32 %s11, %s18
    %p20 = scmp.eq.s32.totalorder %s19, 0
    %s22 = sadd.s32 %s21, 1
    %s23 = scalar_select %p20, %s21, %s22
    %p26 = pneg %p20
    %p27 = scmp.eq.s32.totalorder %s11, 2
    %p28 = por %p26, %p27
    %p29 = scmp.ne.s32.totalorder %s21, %s24
    %p30 = scmp.eq.s32.totalorder %s11, 0
    %p31 = por %p29, %p30
    %p32 = scmp.ne.s32.totalorder %s21, %s24
    %p33 = scmp.eq.s32.totalorder %s16, 2
    %p34 = por %p32, %p33
    %p35 = scmp.ne.s32.totalorder %s24, %s25
    %p36 = scmp.eq.s32.totalorder %s16, 0
    %p37 = por %p35, %p36
    %p38 = scmp.ne.s32.totalorder %s24, %s25
    %p39 = scmp.eq.s32.totalorder %s17, 2
    %p40 = por %p38, %p39
    %p42 = scmp.ne.s32.totalorder %s25, %s41
    %p43 = scmp.eq.s32.totalorder %s17, 0
    %p44 = por %p42, %p43
    %s46 = sadd.s32 %s45, 1
    %p49 = scmp.eq.s32.totalorder %s11, 2
    %p50 = scmp.ne.s32.totalorder %s45, %s47
    %p51 = scmp.eq.s32.totalorder %s11, 0
    %p52 = por %p50, %p51
    %p53 = scmp.ne.s32.totalorder %s45, %s47
    %p54 = scmp.eq.s32.totalorder %s16, 2
    %p55 = por %p53, %p54
    %p56 = scmp.ne.s32.totalorder %s47, %s48
    %p57 = scmp.eq.s32.totalorder %s16, 0
    %p58 = por %p56, %p57
    %p59 = scmp.ne.s32.totalorder %s47, %s48
    %p60 = scmp.eq.s32.totalorder %s17, 2
    %p61 = por %p59, %p60
    %p63 = scmp.ne.s32.totalorder %s48, %s62
    %p64 = scmp.eq.s32.totalorder %s17, 0
    %p65 = por %p63, %p64
    %s67 = sadd.s32 %s66, 1
    %p70 = scmp.eq.s32.totalorder %s11, 2
    %p71 = scmp.ne.s32.totalorder %s66, %s68
    %p72 = scmp.eq.s32.totalorder %s11, 0
    %p73 = por %p71, %p72
    %p74 = scmp.ne.s32.totalorder %s66, %s68
    %p75 = scmp.eq.s32.totalorder %s16, 2
    %p76 = por %p74, %p75
    %p77 = scmp.ne.s32.totalorder %s68, %s69
    %p78 = scmp.eq.s32.totalorder %s16, 0
    %p79 = por %p77, %p78
    %p80 = scmp.ne.s32.totalorder %s68, %s69
    %p81 = scmp.eq.s32.totalorder %s17, 2
    %p82 = por %p80, %p81
    %p84 = scmp.ne.s32.totalorder %s69, %s83
    %p85 = scmp.eq.s32.totalorder %s17, 0
    %p86 = por %p84, %p85
    %s88 = sadd.s32 %s87, 1
    %p91 = scmp.eq.s32.totalorder %s11, 2
    %p92 = scmp.ne.s32.totalorder %s87, %s89
    %p93 = scmp.eq.s32.totalorder %s11, 0
    %p94 = por %p92, %p93
    %p95 = scmp.ne.s32.totalorder %s87, %s89
    %p96 = scmp.eq.s32.totalorder %s16, 2
    %p97 = por %p95, %p96
    %p98 = scmp.ne.s32.totalorder %s89, %s90
    %p99 = scmp.eq.s32.totalorder %s16, 0
    %p100 = por %p98, %p99
    %p101 = scmp.ne.s32.totalorder %s89, %s90
    %p102 = scmp.eq.s32.totalorder %s17, 2
    %p103 = por %p101, %p102
    %p105 = scmp.ne.s32.totalorder %s90, %s104
    %p106 = scmp.eq.s32.totalorder %s17, 0
    %p107 = por %p105, %p106
    %s108 = ssub.s32 %s11, %s18
    %p109 = scmp.eq.s32.totalorder %s108, 0
    %s111 = sadd.s32 %s110, 1
    %s112 = scalar_select %p109, %s110, %s111
    %p115 = pneg %p109
    %p116 = scmp.eq.s32.totalorder %s11, 2
    %p117 = por %p115, %p116
    %p118 = scmp.ne.s32.totalorder %s110, %s113
    %p119 = scmp.eq.s32.totalorder %s11, 0
    %p120 = por %p118, %p119
    %p121 = scmp.ne.s32.totalorder %s110, %s113
    %p122 = scmp.eq.s32.totalorder %s16, 2
    %p123 = por %p121, %p122
    %p124 = scmp.ne.s32.totalorder %s113, %s114
    %p125 = scmp.eq.s32.totalorder %s16, 0
    %p126 = por %p124, %p125
    %p127 = scmp.ne.s32.totalorder %s113, %s114
    %p128 = scmp.eq.s32.totalorder %s17, 2
    %p129 = por %p127, %p128
    %p131 = scmp.ne.s32.totalorder %s114, %s130
    %p132 = scmp.eq.s32.totalorder %s17, 0
    %p133 = por %p131, %p132
    %p134 = scmp.le.s32.totalorder 1, %s11
    %p135 = scmp.lt.s32.totalorder %s11, 4
    %p136 = pnand %p134, %p135
    %p137 = pneg %p136
    // Predicated region
    $region9: #{residual_block_forward.5} parent=5 // pred_check
      _
    $region10: #{residual_block_forward.5} parent=5 // pred_check_branch
      %139 = sbr.rel (%p136) target = $region12
    $region11: #{residual_block_forward.5} parent=5 // pred_region
      %s140 = ssub.s32 %s11, 1
      // Predicated region
      $region13: #{residual_block_forward.5} parent=11 // pred_check
        %p141 = pneg %p58
      $region14: #{residual_block_forward.5} parent=11 // pred_check_branch
        %143 = sbr.rel (%p141) target = $region16
      $region15: #{residual_block_forward.5} parent=11 // pred_region
        _
      $region16: #{residual_block_forward.5} parent=11 // pred_fallthru
        _
      // Predicated region
      $region17: #{residual_block_forward.5} parent=11 // pred_check
        %p144 = pneg %p79
      $region18: #{residual_block_forward.5} parent=11 // pred_check_branch
        %146 = sbr.rel (%p144) target = $region20
      $region19: #{residual_block_forward.5} parent=11 // pred_region
        _
      $region20: #{residual_block_forward.5} parent=11 // pred_fallthru
        _
      // Predicated region
      $region21: #{residual_block_forward.5} parent=11 // pred_check
        %p147 = pneg %p100
      $region22: #{residual_block_forward.5} parent=11 // pred_check_branch
        %149 = sbr.rel (%p147) target = $region24
      $region23: #{residual_block_forward.5} parent=11 // pred_region
        _
      $region24: #{residual_block_forward.5} parent=11 // pred_fallthru
        _
    $region12: #{residual_block_forward.5} parent=5 // pred_fallthru
      _
    %p150 = scmp.lt.s32.totalorder %s11, 3
    // Predicated region
    $region25: #{residual_block_forward.5} parent=5 // pred_check
      %p151 = pneg %p150
    $region26: #{residual_block_forward.5} parent=5 // pred_check_branch
      %153 = sbr.rel (%p151) target = $region28
    $region27: #{residual_block_forward.5} parent=5 // pred_region
      // Predicated region
      $region29: #{residual_block_forward.5} parent=27 // pred_check
        %p154 = pneg %p31
      $region30: #{residual_block_forward.5} parent=27 // pred_check_branch
        %156 = sbr.rel (%p154) target = $region32
      $region31: #{residual_block_forward.5} parent=27 // pred_region
        %s157 = smul.u32 3, %s11
        %p158 = scmp.lt.s32.totalorder %s157, 8
        %s159 = scalar_select %p158, %s157, 8
        %s160 = smul.addr %s159, 4
        %s161 = smul.addr %s160, 8
        %s162 = scalar_lea.vmem %s0, %s161
        %s163 = smul.u32 3, %s11
      $region32: #{residual_block_forward.5} parent=27 // pred_fallthru
        _
    $region28: #{residual_block_forward.5} parent=5 // pred_fallthru
      _
    %p164 = scmp.le.s32.totalorder 1, %s11
    %p165 = scmp.lt.s32.totalorder %s11, 4
    %p166 = pnand %p164, %p165
    %p167 = pneg %p166
    // Predicated region
    $region33: #{residual_block_forward.5} parent=5 // pred_check
      _
    $region34: #{residual_block_forward.5} parent=5 // pred_check_branch
      %169 = sbr.rel (%p166) target = $region36
    $region35: #{residual_block_forward.5} parent=5 // pred_region
      %s170 = ssub.s32 %s11, 1
      %s171 = smul.u32 3, %s16
      %p172 = scmp.lt.s32.totalorder %s171, 8
      %s173 = scalar_select %p172, %s171, 8
      %s174 = smul.addr %s173, 4
      %s175 = smul.addr %s174, 8
      %s176 = scalar_lea.vmem %s0, %s175
      %p177 = pneg %p37
      %p178 = pneg %p34
      %p179 = pneg %p58
      %p180 = pneg %p55
      %p181 = pneg %p79
      %p182 = pneg %p76
      %p183 = pneg %p100
      %p184 = pneg %p97
      %p185 = pneg %p126
      %p186 = pneg %p123
      %s187 = smul.u32 3, %s16
      %p188 = scmp.lt.s32.totalorder %s187, 8
      %s189 = scalar_select %p188, %s187, 8
      %s190 = smul.addr %s189, 4
      %s191 = smul.addr %s190, 8
      %s192 = scalar_lea.vmem %s4, %s191
      %s193 = smul.u32 3, %s16
      %p194 = scmp.lt.s32.totalorder %s193, 8
      %s195 = scalar_select %p194, %s193, 8
      %s196 = smul.addr %s195, 4
      %s197 = smul.addr %s196, 8
      %s198 = scalar_lea.vmem %s0, %s197
      %s199 = smul.u32 3, %s16
      %s200 = smul.u32 3, %s16
      %p201 = scmp.lt.s32.totalorder %s200, 8
      %s202 = scalar_select %p201, %s200, 8
      %s203 = smul.addr %s202, 4
      %s204 = smul.addr %s203, 8
      %s205 = scalar_lea.vmem %s4, %s204
      %s206 = smul.u32 3, %s16
      %v207 = vld [vmem:[%s198] sm:$0xff]
      %v208 = vld [vmem:[%s198 + $0x8] sm:$0xff]
      %v209 = vld [vmem:[%s198 + $0x10] sm:$0xff]
      %v210 = vld [vmem:[%s198 + $0x18] sm:$0xff]
      %v211 = vld [vmem:[%s198 + $0x20] sm:$0xff]
      %v212 = vld [vmem:[%s198 + $0x28] sm:$0xff]
      %v213 = vld [vmem:[%s198 + $0x30] sm:$0xff]
      %v214 = vld [vmem:[%s198 + $0x38] sm:$0xff]
      %v215 = vld [vmem:[%s198 + $0x40] sm:$0xff]
      %v216 = vld [vmem:[%s198 + $0x48] sm:$0xff]
      %v217 = vld [vmem:[%s198 + $0x50] sm:$0xff]
      %v218 = vld [vmem:[%s198 + $0x58] sm:$0xff]
      %v219 = vld [vmem:[%s1] sm:$0xf]
      %v221 = vlaneseq
      %v222 = vshrl.u32 %v221, 7
      %v223 = vsub.s32 0, %v222
      %v224 = vrot.slane %v219, %v223
      %v225 = vlaneseq
      %v226 = vshrl.u32 %v225, 7
      %v227 = vsub.s32 1, %v226
      %v228 = vrot.slane %v219, %v227
      %v229 = vlaneseq
      %v230 = vshrl.u32 %v229, 7
      %v231 = vsub.s32 2, %v230
      %v232 = vrot.slane %v219, %v231
      %v233 = vlaneseq
      %v234 = vshrl.u32 %v233, 7
      %v235 = vsub.s32 3, %v234
      %v236 = vrot.slane %v219, %v235
      %v241 = vmul.f32 %v207, %v224
      %v242 = vmul.f32 %v208, %v228
      %v243 = vmul.f32 %v209, %v232
      %v244 = vmul.f32 %v210, %v236
      %v245 = vmul.f32 %v211, %v224
      %v246 = vmul.f32 %v212, %v228
      %v247 = vmul.f32 %v213, %v232
      %v248 = vmul.f32 %v214, %v236
      %v249 = vmul.f32 %v215, %v224
      %v250 = vmul.f32 %v216, %v228
      %v251 = vmul.f32 %v217, %v232
      %v252 = vmul.f32 %v218, %v236
      %v253 = vld [vmem:[%s2] sm:$0xf]
      %v255 = vlaneseq
      %v256 = vshrl.u32 %v255, 7
      %v257 = vsub.s32 0, %v256
      %v258 = vrot.slane %v253, %v257
      %v259 = vlaneseq
      %v260 = vshrl.u32 %v259, 7
      %v261 = vsub.s32 1, %v260
      %v262 = vrot.slane %v253, %v261
      %v263 = vlaneseq
      %v264 = vshrl.u32 %v263, 7
      %v265 = vsub.s32 2, %v264
      %v266 = vrot.slane %v253, %v265
      %v267 = vlaneseq
      %v268 = vshrl.u32 %v267, 7
      %v269 = vsub.s32 3, %v268
      %v270 = vrot.slane %v253, %v269
      %v275 = vadd.f32 %v241, %v258
      %v276 = vadd.f32 %v242, %v262
      %v277 = vadd.f32 %v243, %v266
      %v278 = vadd.f32 %v244, %v270
      %v279 = vadd.f32 %v245, %v258
      %v280 = vadd.f32 %v246, %v262
      %v281 = vadd.f32 %v247, %v266
      %v282 = vadd.f32 %v248, %v270
      %v283 = vadd.f32 %v249, %v258
      %v284 = vadd.f32 %v250, %v262
      %v285 = vadd.f32 %v251, %v266
      %v286 = vadd.f32 %v252, %v270
      %vm287 = vcmp.ge.f32.partialorder %v275, 0.0
      %vm288 = vcmp.ge.f32.partialorder %v276, 0.0
      %vm289 = vcmp.ge.f32.partialorder %v277, 0.0
      %vm290 = vcmp.ge.f32.partialorder %v278, 0.0
      %vm291 = vcmp.ge.f32.partialorder %v279, 0.0
      %vm292 = vcmp.ge.f32.partialorder %v280, 0.0
      %vm293 = vcmp.ge.f32.partialorder %v281, 0.0
      %vm294 = vcmp.ge.f32.partialorder %v282, 0.0
      %vm295 = vcmp.ge.f32.partialorder %v283, 0.0
      %vm296 = vcmp.ge.f32.partialorder %v284, 0.0
      %vm297 = vcmp.ge.f32.partialorder %v285, 0.0
      %vm298 = vcmp.ge.f32.partialorder %v286, 0.0
      %s299 = sld [smem:[#allocation2]]
      %v300 = vstv %s299
      %v301 = vmul.f32 %v300, %v275
      %v302 = vmul.f32 %v300, %v276
      %v303 = vmul.f32 %v300, %v277
      %v304 = vmul.f32 %v300, %v278
      %v305 = vmul.f32 %v300, %v279
      %v306 = vmul.f32 %v300, %v280
      %v307 = vmul.f32 %v300, %v281
      %v308 = vmul.f32 %v300, %v282
      %v309 = vmul.f32 %v300, %v283
      %v310 = vmul.f32 %v300, %v284
      %v311 = vmul.f32 %v300, %v285
      %v312 = vmul.f32 %v300, %v286
      %v313 = vsel %vm287, %v275, %v301
      %v314 = vsel %vm288, %v276, %v302
      %v315 = vsel %vm289, %v277, %v303
      %v316 = vsel %vm290, %v278, %v304
      %v317 = vsel %vm291, %v279, %v305
      %v318 = vsel %vm292, %v280, %v306
      %v319 = vsel %vm293, %v281, %v307
      %v320 = vsel %vm294, %v282, %v308
      %v321 = vsel %vm295, %v283, %v309
      %v322 = vsel %vm296, %v284, %v310
      %v323 = vsel %vm297, %v285, %v311
      %v324 = vsel %vm298, %v286, %v312
      %325 = vst [vmem:[%s205] sm:$0xff] %v313
      %326 = vst [vmem:[%s205 + $0x8] sm:$0xff] %v314
      %327 = vst [vmem:[%s205 + $0x10] sm:$0xff] %v315
      %328 = vst [vmem:[%s205 + $0x18] sm:$0xff] %v316
      %329 = vst [vmem:[%s205 + $0x20] sm:$0xff] %v317
      %330 = vst [vmem:[%s205 + $0x28] sm:$0xff] %v318
      %331 = vst [vmem:[%s205 + $0x30] sm:$0xff] %v319
      %332 = vst [vmem:[%s205 + $0x38] sm:$0xff] %v320
      %333 = vst [vmem:[%s205 + $0x40] sm:$0xff] %v321
      %334 = vst [vmem:[%s205 + $0x48] sm:$0xff] %v322
      %335 = vst [vmem:[%s205 + $0x50] sm:$0xff] %v323
      %336 = vst [vmem:[%s205 + $0x58] sm:$0xff] %v324
      %s337 = smul.u32 3, %s16
      %p338 = scmp.lt.s32.totalorder %s337, 8
      %s339 = scalar_select %p338, %s337, 8
      %s340 = smul.addr %s339, 4
      %s341 = smul.addr %s340, 8
      %s342 = scalar_lea.vmem %s4, %s341
      // Predicated region
      $region37: #{residual_block_forward.5} parent=35 // pred_check
        %p343 = pneg %p123
      $region38: #{residual_block_forward.5} parent=35 // pred_check_branch
        %345 = sbr.rel (%p343) target = $region40
      $region39: #{residual_block_forward.5} parent=35 // pred_region
        %s346 = smul.u32 3, %s16
      $region40: #{residual_block_forward.5} parent=35 // pred_fallthru
        _
    $region36: #{residual_block_forward.5} parent=5 // pred_fallthru
      _
    %p347 = scmp.le.s32.totalorder 2, %s11
    // Predicated region
    $region41: #{residual_block_forward.5} parent=5 // pred_check
      %p348 = pneg %p347
    $region42: #{residual_block_forward.5} parent=5 // pred_check_branch
      %350 = sbr.rel (%p348) target = $region44
    $region43: #{residual_block_forward.5} parent=5 // pred_region
      %s351 = ssub.s32 %s11, 2
      // Predicated region
      $region45: #{residual_block_forward.5} parent=43 // pred_check
        %p352 = pneg %p129
      $region46: #{residual_block_forward.5} parent=43 // pred_check_branch
        %354 = sbr.rel (%p352) target = $region48
      $region47: #{residual_block_forward.5} parent=43 // pred_region
        %s355 = smul.u32 3, %s17
        %p356 = scmp.lt.s32.totalorder %s355, 8
        %s357 = scalar_select %p356, %s355, 8
        %s358 = smul.addr %s357, 4
        %s359 = smul.addr %s358, 8
        %s360 = scalar_lea.vmem %s4, %s359
      $region48: #{residual_block_forward.5} parent=43 // pred_fallthru
        _
    $region44: #{residual_block_forward.5} parent=5 // pred_fallthru
      _
  $region6: #{residual_block_forward.5} parent=0 // loop_footer
    %s15 = sadd.s32 1, %s11
  $region7: #{residual_block_forward.5} parent=0 // loop_footer_branch
    %10 = sbr.rel target = $region3
  $region8: #{residual_block_forward.5} parent=0 // loop_exit
    _

// kernel: residual_block_forward.7
$region0: #{residual_block_forward.7}
  #allocation0 [shape = 'u32[]', space=smem, size = 0x4, offset = 0x4, fixed_abs, tag = 'smem constant byte address 0x4 - core index']
  #allocation1 [shape = 'u32[144,128]{1,0:T(1,128)}', space=vmem, size = 0x12000, scoped, tag = 'internal scratch']
  %s0 = inlined_call_operand.vmem [shape: f32[64,512], index: 0, kind: input, shape index: {}]
  %s1 = inlined_call_operand.vmem [shape: f32[64,512], index: 1, kind: input, shape index: {}]
  %s2 = inlined_call_operand.vmem [shape: f32[1,512], index: 2, kind: input, shape index: {}]
  %s3 = inlined_call_operand.vmem [shape: f32[1,512], index: 3, kind: input, shape index: {}]
  %s4 = inlined_call_operand.vmem [shape: f32[64,512], index: 4, kind: output, shape index: {}]
  %s5 = sld [smem:[#allocation0]]
  $region49: #{residual_block_forward.7} parent=0
    _
  %s7 = ssub.s32 1, %s5
  %s8 = scalar_select 0, %s7, %s5
  loop: start=0, step=1, limit=4
  $region2: #{residual_block_forward.7} parent=0 // loop_pre_header
    _
  $region3: #{residual_block_forward.7} parent=0 // loop_header
    %s10 = sphi 0, %s14
    %p11 = scmp.ge.s32.totalorder %s10, 4
    %s20 = sphi 0, %s22
    %s23 = sphi 0, %s20
    %s24 = sphi 0, %s23
    %s40 = sphi 0, %s24
    %s46 = sphi 0, %s48
    %s49 = sphi 0, %s46
    %s50 = sphi 0, %s49
    %s66 = sphi 0, %s50
    %s70 = sphi 0, %s70
    %s72 = sphi 0, %s70
    %s73 = sphi 0, %s72
    %s87 = sphi 0, %s73
    %s91 = sphi 0, %s91
    %s93 = sphi 0, %s91
    %s94 = sphi 0, %s93
    %s108 = sphi 0, %s94
    %s114 = sphi 0, %s116
    %s117 = sphi 0, %s114
    %s118 = sphi 0, %s117
    %s134 = sphi 0, %s118
  $region4: #{residual_block_forward.7} parent=0 // loop_header_branch
    %13 = sbr.rel (%p11) target = $region8
  $region5: #{residual_block_forward.7} parent=0 // loop_body
    %s15 = ssub.s32 %s10, 1
    %s16 = ssub.s32 %s10, 2
    %s17 = sadd.s32 %s10, 1
    %s18 = ssub.s32 %s10, %s17
    %p19 = scmp.eq.s32.totalorder %s18, 0
    %s21 = sadd.s32 %s20, 1
    %s22 = scalar_select %p19, %s20, %s21
    %p25 = pneg %p19
    %p26 = scmp.eq.s32.totalorder %s10, 1
    %p27 = por %p25, %p26
    %p28 = scmp.ne.s32.totalorder %s20, %s23
    %p29 = scmp.eq.s32.totalorder %s10, 0
    %p30 = por %p28, %p29
    %p31 = scmp.ne.s32.totalorder %s20, %s23
    %p32 = scmp.eq.s32.totalorder %s15, 1
    %p33 = por %p31, %p32
    %p34 = scmp.ne.s32.totalorder %s23, %s24
    %p35 = scmp.eq.s32.totalorder %s15, 0
    %p36 = por %p34, %p35
    %p37 = scmp.ne.s32.totalorder %s23, %s24
    %p38 = scmp.eq.s32.totalorder %s16, 1
    %p39 = por %p37, %p38
    %p41 = scmp.ne.s32.totalorder %s24, %s40
    %p42 = scmp.eq.s32.totalorder %s16, 0
    %p43 = por %p41, %p42
    %s44 = ssub.s32 %s10, %s17
    %p45 = scmp.eq.s32.totalorder %s44, 0
    %s47 = sadd.s32 %s46, 1
    %s48 = scalar_select %p45, %s46, %s47
    %p51 = pneg %p45
    %p52 = scmp.eq.s32.totalorder %s10, 1
    %p53 = por %p51, %p52
    %p54 = scmp.ne.s32.totalorder %s46, %s49
    %p55 = scmp.eq.s32.totalorder %s10, 0
    %p56 = por %p54, %p55
    %p57 = scmp.ne.s32.totalorder %s46, %s49
    %p58 = scmp.eq.s32.totalorder %s15, 1
    %p59 = por %p57, %p58
    %p60 = scmp.ne.s32.totalorder %s49, %s50
    %p61 = scmp.eq.s32.totalorder %s15, 0
    %p62 = por %p60, %p61
    %p63 = scmp.ne.s32.totalorder %s49, %s50
    %p64 = scmp.eq.s32.totalorder %s16, 1
    %p65 = por %p63, %p64
    %p67 = scmp.ne.s32.totalorder %s50, %s66
    %p68 = scmp.eq.s32.totalorder %s16, 0
    %p69 = por %p67, %p68
    %s71 = sadd.s32 %s70, 1
    %p74 = scmp.eq.s32.totalorder %s10, 1
    %p75 = scmp.ne.s32.totalorder %s70, %s72
    %p76 = scmp.eq.s32.totalorder %s10, 0
    %p77 = por %p75, %p76
    %p78 = scmp.ne.s32.totalorder %s70, %s72
    %p79 = scmp.eq.s32.totalorder %s15, 1
    %p80 = por %p78, %p79
    %p81 = scmp.ne.s32.totalorder %s72, %s73
    %p82 = scmp.eq.s32.totalorder %s15, 0
    %p83 = por %p81, %p82
    %p84 = scmp.ne.s32.totalorder %s72, %s73
    %p85 = scmp.eq.s32.totalorder %s16, 1
    %p86 = por %p84, %p85
    %p88 = scmp.ne.s32.totalorder %s73, %s87
    %p89 = scmp.eq.s32.totalorder %s16, 0
    %p90 = por %p88, %p89
    %s92 = sadd.s32 %s91, 1
    %p95 = scmp.eq.s32.totalorder %s10, 1
    %p96 = scmp.ne.s32.totalorder %s91, %s93
    %p97 = scmp.eq.s32.totalorder %s10, 0
    %p98 = por %p96, %p97
    %p99 = scmp.ne.s32.totalorder %s91, %s93
    %p100 = scmp.eq.s32.totalorder %s15, 1
    %p101 = por %p99, %p100
    %p102 = scmp.ne.s32.totalorder %s93, %s94
    %p103 = scmp.eq.s32.totalorder %s15, 0
    %p104 = por %p102, %p103
    %p105 = scmp.ne.s32.totalorder %s93, %s94
    %p106 = scmp.eq.s32.totalorder %s16, 1
    %p107 = por %p105, %p106
    %p109 = scmp.ne.s32.totalorder %s94, %s108
    %p110 = scmp.eq.s32.totalorder %s16, 0
    %p111 = por %p109, %p110
    %s112 = ssub.s32 %s10, %s17
    %p113 = scmp.eq.s32.totalorder %s112, 0
    %s115 = sadd.s32 %s114, 1
    %s116 = scalar_select %p113, %s114, %s115
    %p119 = pneg %p113
    %p120 = scmp.eq.s32.totalorder %s10, 1
    %p121 = por %p119, %p120
    %p122 = scmp.ne.s32.totalorder %s114, %s117
    %p123 = scmp.eq.s32.totalorder %s10, 0
    %p124 = por %p122, %p123
    %p125 = scmp.ne.s32.totalorder %s114, %s117
    %p126 = scmp.eq.s32.totalorder %s15, 1
    %p127 = por %p125, %p126
    %p128 = scmp.ne.s32.totalorder %s117, %s118
    %p129 = scmp.eq.s32.totalorder %s15, 0
    %p130 = por %p128, %p129
    %p131 = scmp.ne.s32.totalorder %s117, %s118
    %p132 = scmp.eq.s32.totalorder %s16, 1
    %p133 = por %p131, %p132
    %p135 = scmp.ne.s32.totalorder %s118, %s134
    %p136 = scmp.eq.s32.totalorder %s16, 0
    %p137 = por %p135, %p136
    %p138 = scmp.le.s32.totalorder 1, %s10
    %p139 = scmp.lt.s32.totalorder %s10, 3
    %p140 = pnand %p138, %p139
    %p141 = pneg %p140
    // Predicated region
    $region9: #{residual_block_forward.7} parent=5 // pred_check
      _
    $region10: #{residual_block_forward.7} parent=5 // pred_check_branch
      %143 = sbr.rel (%p140) target = $region12
    $region11: #{residual_block_forward.7} parent=5 // pred_region
      %s144 = ssub.s32 %s10, 1
      // Predicated region
      $region13: #{residual_block_forward.7} parent=11 // pred_check
        %p145 = pneg %p83
      $region14: #{residual_block_forward.7} parent=11 // pred_check_branch
        %147 = sbr.rel (%p145) target = $region16
      $region15: #{residual_block_forward.7} parent=11 // pred_region
        _
      $region16: #{residual_block_forward.7} parent=11 // pred_fallthru
        _
      // Predicated region
      $region17: #{residual_block_forward.7} parent=11 // pred_check
        %p148 = pneg %p104
      $region18: #{residual_block_forward.7} parent=11 // pred_check_branch
        %150 = sbr.rel (%p148) target = $region20
      $region19: #{residual_block_forward.7} parent=11 // pred_region
        _
      $region20: #{residual_block_forward.7} parent=11 // pred_fallthru
        _
    $region12: #{residual_block_forward.7} parent=5 // pred_fallthru
      _
    %p151 = scmp.lt.s32.totalorder %s10, 2
    // Predicated region
    $region21: #{residual_block_forward.7} parent=5 // pred_check
      %p152 = pneg %p151
    $region22: #{residual_block_forward.7} parent=5 // pred_check_branch
      %154 = sbr.rel (%p152) target = $region24
    $region23: #{residual_block_forward.7} parent=5 // pred_region
      // Predicated region
      $region25: #{residual_block_forward.7} parent=23 // pred_check
        %p155 = pneg %p30
      $region26: #{residual_block_forward.7} parent=23 // pred_check_branch
        %157 = sbr.rel (%p155) target = $region28
      $region27: #{residual_block_forward.7} parent=23 // pred_region
        %s158 = smul.u32 4, %s10
        %p159 = scmp.lt.s32.totalorder %s158, 7
        %s160 = scalar_select %p159, %s158, 7
        %s161 = smul.addr %s160, 4
        %s162 = smul.addr %s161, 8
        %s163 = scalar_lea.vmem %s0, %s162
        %s164 = smul.u32 4, %s10
      $region28: #{residual_block_forward.7} parent=23 // pred_fallthru
        _
      // Predicated region
      $region29: #{residual_block_forward.7} parent=23 // pred_check
        %p165 = pneg %p56
      $region30: #{residual_block_forward.7} parent=23 // pred_check_branch
        %167 = sbr.rel (%p165) target = $region32
      $region31: #{residual_block_forward.7} parent=23 // pred_region
        %s168 = smul.u32 4, %s10
        %p169 = scmp.lt.s32.totalorder %s168, 7
        %s170 = scalar_select %p169, %s168, 7
        %s171 = smul.addr %s170, 4
        %s172 = smul.addr %s171, 8
        %s173 = scalar_lea.vmem %s1, %s172
        %s174 = smul.u32 4, %s10
      $region32: #{residual_block_forward.7} parent=23 // pred_fallthru
        _
    $region24: #{residual_block_forward.7} parent=5 // pred_fallthru
      _
    %p175 = scmp.le.s32.totalorder 1, %s10
    %p176 = scmp.lt.s32.totalorder %s10, 3
    %p177 = pnand %p175, %p176
    %p178 = pneg %p177
    // Predicated region
    $region33: #{residual_block_forward.7} parent=5 // pred_check
      _
    $region34: #{residual_block_forward.7} parent=5 // pred_check_branch
      %180 = sbr.rel (%p177) target = $region36
    $region35: #{residual_block_forward.7} parent=5 // pred_region
      %s181 = ssub.s32 %s10, 1
      %s182 = smul.u32 4, %s15
      %p183 = scmp.lt.s32.totalorder %s182, 7
      %s184 = scalar_select %p183, %s182, 7
      %s185 = smul.addr %s184, 4
      %s186 = smul.addr %s185, 8
      %s187 = scalar_lea.vmem %s0, %s186
      %p188 = pneg %p36
      %p189 = pneg %p33
      %s190 = smul.u32 4, %s15
      %p191 = scmp.lt.s32.totalorder %s190, 7
      %s192 = scalar_select %p191, %s190, 7
      %s193 = smul.addr %s192, 4
      %s194 = smul.addr %s193, 8
      %s195 = scalar_lea.vmem %s1, %s194
      %p196 = pneg %p62
      %p197 = pneg %p59
      %p198 = pneg %p83
      %p199 = pneg %p80
      %p200 = pneg %p104
      %p201 = pneg %p101
      %p202 = pneg %p130
      %p203 = pneg %p127
      %s204 = smul.u32 4, %s15
      %p205 = scmp.lt.s32.totalorder %s204, 7
      %s206 = scalar_select %p205, %s204, 7
      %s207 = smul.addr %s206, 4
      %s208 = smul.addr %s207, 8
      %s209 = scalar_lea.vmem %s4, %s208
      %s210 = smul.u32 4, %s15
      %p211 = scmp.lt.s32.totalorder %s210, 7
      %s212 = scalar_select %p211, %s210, 7
      %s213 = smul.addr %s212, 4
      %s214 = smul.addr %s213, 8
      %s215 = scalar_lea.vmem %s0, %s214
      %s216 = smul.u32 4, %s15
      %s217 = smul.u32 4, %s15
      %p218 = scmp.lt.s32.totalorder %s217, 7
      %s219 = scalar_select %p218, %s217, 7
      %s220 = smul.addr %s219, 4
      %s221 = smul.addr %s220, 8
      %s222 = scalar_lea.vmem %s1, %s221
      %s223 = smul.u32 4, %s15
      %s224 = smul.u32 4, %s15
      %p225 = scmp.lt.s32.totalorder %s224, 7
      %s226 = scalar_select %p225, %s224, 7
      %s227 = smul.addr %s226, 4
      %s228 = smul.addr %s227, 8
      %s229 = scalar_lea.vmem %s4, %s228
      %s230 = smul.u32 4, %s15
      %v231 = vld [vmem:[%s222] sm:$0xff]
      %v232 = vld [vmem:[%s222 + $0x8] sm:$0xff]
      %v233 = vld [vmem:[%s222 + $0x10] sm:$0xff]
      %v234 = vld [vmem:[%s222 + $0x18] sm:$0xff]
      %v235 = vld [vmem:[%s222 + $0x20] sm:$0xff]
      %v236 = vld [vmem:[%s222 + $0x28] sm:$0xff]
      %v237 = vld [vmem:[%s222 + $0x30] sm:$0xff]
      %v238 = vld [vmem:[%s222 + $0x38] sm:$0xff]
      %v239 = vld [vmem:[%s222 + $0x40] sm:$0xff]
      %v240 = vld [vmem:[%s222 + $0x48] sm:$0xff]
      %v241 = vld [vmem:[%s222 + $0x50] sm:$0xff]
      %v242 = vld [vmem:[%s222 + $0x58] sm:$0xff]
      %v243 = vld [vmem:[%s222 + $0x60] sm:$0xff]
      %v244 = vld [vmem:[%s222 + $0x68] sm:$0xff]
      %v245 = vld [vmem:[%s222 + $0x70] sm:$0xff]
      %v246 = vld [vmem:[%s222 + $0x78] sm:$0xff]
      %v247 = vld [vmem:[%s215] sm:$0xff]
      %v248 = vld [vmem:[%s215 + $0x8] sm:$0xff]
      %v249 = vld [vmem:[%s215 + $0x10] sm:$0xff]
      %v250 = vld [vmem:[%s215 + $0x18] sm:$0xff]
      %v251 = vld [vmem:[%s215 + $0x20] sm:$0xff]
      %v252 = vld [vmem:[%s215 + $0x28] sm:$0xff]
      %v253 = vld [vmem:[%s215 + $0x30] sm:$0xff]
      %v254 = vld [vmem:[%s215 + $0x38] sm:$0xff]
      %v255 = vld [vmem:[%s215 + $0x40] sm:$0xff]
      %v256 = vld [vmem:[%s215 + $0x48] sm:$0xff]
      %v257 = vld [vmem:[%s215 + $0x50] sm:$0xff]
      %v258 = vld [vmem:[%s215 + $0x58] sm:$0xff]
      %v259 = vld [vmem:[%s215 + $0x60] sm:$0xff]
      %v260 = vld [vmem:[%s215 + $0x68] sm:$0xff]
      %v261 = vld [vmem:[%s215 + $0x70] sm:$0xff]
      %v262 = vld [vmem:[%s215 + $0x78] sm:$0xff]
      %v263 = vld [vmem:[%s2] sm:$0xf]
      %v265 = vlaneseq
      %v266 = vshrl.u32 %v265, 7
      %v267 = vsub.s32 0, %v266
      %v268 = vrot.slane %v263, %v267
      %v269 = vlaneseq
      %v270 = vshrl.u32 %v269, 7
      %v271 = vsub.s32 1, %v270
      %v272 = vrot.slane %v263, %v271
      %v273 = vlaneseq
      %v274 = vshrl.u32 %v273, 7
      %v275 = vsub.s32 2, %v274
      %v276 = vrot.slane %v263, %v275
      %v277 = vlaneseq
      %v278 = vshrl.u32 %v277, 7
      %v279 = vsub.s32 3, %v278
      %v280 = vrot.slane %v263, %v279
      %v285 = vmul.f32 %v247, %v268
      %v286 = vmul.f32 %v248, %v272
      %v287 = vmul.f32 %v249, %v276
      %v288 = vmul.f32 %v250, %v280
      %v289 = vmul.f32 %v251, %v268
      %v290 = vmul.f32 %v252, %v272
      %v291 = vmul.f32 %v253, %v276
      %v292 = vmul.f32 %v254, %v280
      %v293 = vmul.f32 %v255, %v268
      %v294 = vmul.f32 %v256, %v272
      %v295 = vmul.f32 %v257, %v276
      %v296 = vmul.f32 %v258, %v280
      %v297 = vmul.f32 %v259, %v268
      %v298 = vmul.f32 %v260, %v272
      %v299 = vmul.f32 %v261, %v276
      %v300 = vmul.f32 %v262, %v280
      %v301 = vadd.f32 %v231, %v285
      %v302 = vadd.f32 %v232, %v286
      %v303 = vadd.f32 %v233, %v287
      %v304 = vadd.f32 %v234, %v288
      %v305 = vadd.f32 %v235, %v289
      %v306 = vadd.f32 %v236, %v290
      %v307 = vadd.f32 %v237, %v291
      %v308 = vadd.f32 %v238, %v292
      %v309 = vadd.f32 %v239, %v293
      %v310 = vadd.f32 %v240, %v294
      %v311 = vadd.f32 %v241, %v295
      %v312 = vadd.f32 %v242, %v296
      %v313 = vadd.f32 %v243, %v297
      %v314 = vadd.f32 %v244, %v298
      %v315 = vadd.f32 %v245, %v299
      %v316 = vadd.f32 %v246, %v300
      %v317 = vld [vmem:[%s3] sm:$0xf]
      %v319 = vlaneseq
      %v320 = vshrl.u32 %v319, 7
      %v321 = vsub.s32 0, %v320
      %v322 = vrot.slane %v317, %v321
      %v323 = vlaneseq
      %v324 = vshrl.u32 %v323, 7
      %v325 = vsub.s32 1, %v324
      %v326 = vrot.slane %v317, %v325
      %v327 = vlaneseq
      %v328 = vshrl.u32 %v327, 7
      %v329 = vsub.s32 2, %v328
      %v330 = vrot.slane %v317, %v329
      %v331 = vlaneseq
      %v332 = vshrl.u32 %v331, 7
      %v333 = vsub.s32 3, %v332
      %v334 = vrot.slane %v317, %v333
      %v339 = vadd.f32 %v301, %v322
      %v340 = vadd.f32 %v302, %v326
      %v341 = vadd.f32 %v303, %v330
      %v342 = vadd.f32 %v304, %v334
      %v343 = vadd.f32 %v305, %v322
      %v344 = vadd.f32 %v306, %v326
      %v345 = vadd.f32 %v307, %v330
      %v346 = vadd.f32 %v308, %v334
      %v347 = vadd.f32 %v309, %v322
      %v348 = vadd.f32 %v310, %v326
      %v349 = vadd.f32 %v311, %v330
      %v350 = vadd.f32 %v312, %v334
      %v351 = vadd.f32 %v313, %v322
      %v352 = vadd.f32 %v314, %v326
      %v353 = vadd.f32 %v315, %v330
      %v354 = vadd.f32 %v316, %v334
      %355 = vst [vmem:[%s229] sm:$0xff] %v339
      %356 = vst [vmem:[%s229 + $0x8] sm:$0xff] %v340
      %357 = vst [vmem:[%s229 + $0x10] sm:$0xff] %v341
      %358 = vst [vmem:[%s229 + $0x18] sm:$0xff] %v342
      %359 = vst [vmem:[%s229 + $0x20] sm:$0xff] %v343
      %360 = vst [vmem:[%s229 + $0x28] sm:$0xff] %v344
      %361 = vst [vmem:[%s229 + $0x30] sm:$0xff] %v345
      %362 = vst [vmem:[%s229 + $0x38] sm:$0xff] %v346
      %363 = vst [vmem:[%s229 + $0x40] sm:$0xff] %v347
      %364 = vst [vmem:[%s229 + $0x48] sm:$0xff] %v348
      %365 = vst [vmem:[%s229 + $0x50] sm:$0xff] %v349
      %366 = vst [vmem:[%s229 + $0x58] sm:$0xff] %v350
      %367 = vst [vmem:[%s229 + $0x60] sm:$0xff] %v351
      %368 = vst [vmem:[%s229 + $0x68] sm:$0xff] %v352
      %369 = vst [vmem:[%s229 + $0x70] sm:$0xff] %v353
      %370 = vst [vmem:[%s229 + $0x78] sm:$0xff] %v354
      %s371 = smul.u32 4, %s15
      %p372 = scmp.lt.s32.totalorder %s371, 7
      %s373 = scalar_select %p372, %s371, 7
      %s374 = smul.addr %s373, 4
      %s375 = smul.addr %s374, 8
      %s376 = scalar_lea.vmem %s4, %s375
      // Predicated region
      $region37: #{residual_block_forward.7} parent=35 // pred_check
        %p377 = pneg %p127
      $region38: #{residual_block_forward.7} parent=35 // pred_check_branch
        %379 = sbr.rel (%p377) target = $region40
      $region39: #{residual_block_forward.7} parent=35 // pred_region
        %s380 = smul.u32 4, %s15
      $region40: #{residual_block_forward.7} parent=35 // pred_fallthru
        _
    $region36: #{residual_block_forward.7} parent=5 // pred_fallthru
      _
    %p381 = scmp.le.s32.totalorder 2, %s10
    // Predicated region
    $region41: #{residual_block_forward.7} parent=5 // pred_check
      %p382 = pneg %p381
    $region42: #{residual_block_forward.7} parent=5 // pred_check_branch
      %384 = sbr.rel (%p382) target = $region44
    $region43: #{residual_block_forward.7} parent=5 // pred_region
      %s385 = ssub.s32 %s10, 2
      // Predicated region
      $region45: #{residual_block_forward.7} parent=43 // pred_check
        %p386 = pneg %p133
      $region46: #{residual_block_forward.7} parent=43 // pred_check_branch
        %388 = sbr.rel (%p386) target = $region48
      $region47: #{residual_block_forward.7} parent=43 // pred_region
        %s389 = smul.u32 4, %s16
        %p390 = scmp.lt.s32.totalorder %s389, 7
        %s391 = scalar_select %p390, %s389, 7
        %s392 = smul.addr %s391, 4
        %s393 = smul.addr %s392, 8
        %s394 = scalar_lea.vmem %s4, %s393
      $region48: #{residual_block_forward.7} parent=43 // pred_fallthru
        _
    $region44: #{residual_block_forward.7} parent=5 // pred_fallthru
      _
  $region6: #{residual_block_forward.7} parent=0 // loop_footer
    %s14 = sadd.s32 1, %s10
  $region7: #{residual_block_forward.7} parent=0 // loop_footer_branch
    %9 = sbr.rel target = $region3
  $region8: #{residual_block_forward.7} parent=0 // loop_exit
    _

// kernel: residual_block_forward.4
$region0: #{residual_block_forward.4}
  #allocation0 [shape = 'u32[]', space=smem, size = 0x4, offset = 0x4, fixed_abs, tag = 'smem constant byte address 0x4 - core index']
  #allocation1 [shape = 'u32[144,128]{1,0:T(1,128)}', space=vmem, size = 0x12000, scoped, tag = 'internal scratch']
  %s0 = inlined_call_operand.vmem [shape: f32[2,328,64], index: 0, kind: input, shape index: {}]
  %s1 = inlined_call_operand.vmem [shape: bf16[9,64,64], index: 1, kind: input, shape index: {}]
  %s2 = inlined_call_operand.vmem [shape: f32[1,64], index: 2, kind: input, shape index: {}]
  %s3 = inlined_call_operand.vmem [shape: f32[1,288], index: 3, kind: input, shape index: {}]
  %s4 = inlined_call_operand.vmem [shape: f32[2,288,64], index: 4, kind: output, shape index: {0}]
  %s5 = inlined_call_operand.vmem [shape: f32[2,2,64], index: 5, kind: output, shape index: {1}]
  %6 = xla_tuple %s4, %s5
  %s7 = sld [smem:[#allocation0]]
  $region57: #{residual_block_forward.4} parent=0
    _
  %s9 = ssub.s32 1, %s7
  %s10 = scalar_select 0, %s9, %s7
  loop: start=0, step=1, limit=4
  $region2: #{residual_block_forward.4} parent=0 // loop_pre_header
    _
  $region3: #{residual_block_forward.4} parent=0 // loop_header
    %s12 = sphi 0, %s16
    %p13 = scmp.ge.s32.totalorder %s12, 4
    %s22 = sphi 0, %s24
    %s25 = sphi 0, %s22
    %s26 = sphi 0, %s25
    %s42 = sphi 0, %s26
    %s46 = sphi 0, %s46
    %s48 = sphi 0, %s46
    %s49 = sphi 0, %s48
    %s63 = sphi 0, %s49
    %s67 = sphi 0, %s67
    %s69 = sphi 0, %s67
    %s70 = sphi 0, %s69
    %s84 = sphi 0, %s70
    %s88 = sphi 0, %s88
    %s90 = sphi 0, %s88
    %s91 = sphi 0, %s90
    %s105 = sphi 0, %s91
    %s111 = sphi 0, %s113
    %s114 = sphi 0, %s111
    %s115 = sphi 0, %s114
    %s131 = sphi 0, %s115
    %s137 = sphi 0, %s139
    %s140 = sphi 0, %s137
    %s141 = sphi 0, %s140
    %s157 = sphi 0, %s141
  $region4: #{residual_block_forward.4} parent=0 // loop_header_branch
    %15 = sbr.rel (%p13) target = $region8
  $region5: #{residual_block_forward.4} parent=0 // loop_body
    %s17 = ssub.s32 %s12, 1
    %s18 = ssub.s32 %s12, 2
    %s19 = sadd.s32 %s12, 1
    %s20 = ssub.s32 %s12, %s19
    %p21 = scmp.eq.s32.totalorder %s20, 0
    %s23 = sadd.s32 %s22, 1
    %s24 = scalar_select %p21, %s22, %s23
    %p27 = pneg %p21
    %p28 = scmp.eq.s32.totalorder %s12, 1
    %p29 = por %p27, %p28
    %p30 = scmp.ne.s32.totalorder %s22, %s25
    %p31 = scmp.eq.s32.totalorder %s12, 0
    %p32 = por %p30, %p31
    %p33 = scmp.ne.s32.totalorder %s22, %s25
    %p34 = scmp.eq.s32.totalorder %s17, 1
    %p35 = por %p33, %p34
    %p36 = scmp.ne.s32.totalorder %s25, %s26
    %p37 = scmp.eq.s32.totalorder %s17, 0
    %p38 = por %p36, %p37
    %p39 = scmp.ne.s32.totalorder %s25, %s26
    %p40 = scmp.eq.s32.totalorder %s18, 1
    %p41 = por %p39, %p40
    %p43 = scmp.ne.s32.totalorder %s26, %s42
    %p44 = scmp.eq.s32.totalorder %s18, 0
    %p45 = por %p43, %p44
    %s47 = sadd.s32 %s46, 1
    %p50 = scmp.eq.s32.totalorder %s12, 1
    %p51 = scmp.ne.s32.totalorder %s46, %s48
    %p52 = scmp.eq.s32.totalorder %s12, 0
    %p53 = por %p51, %p52
    %p54 = scmp.ne.s32.totalorder %s46, %s48
    %p55 = scmp.eq.s32.totalorder %s17, 1
    %p56 = por %p54, %p55
    %p57 = scmp.ne.s32.totalorder %s48, %s49
    %p58 = scmp.eq.s32.totalorder %s17, 0
    %p59 = por %p57, %p58
    %p60 = scmp.ne.s32.totalorder %s48, %s49
    %p61 = scmp.eq.s32.totalorder %s18, 1
    %p62 = por %p60, %p61
    %p64 = scmp.ne.s32.totalorder %s49, %s63
    %p65 = scmp.eq.s32.totalorder %s18, 0
    %p66 = por %p64, %p65
    %s68 = sadd.s32 %s67, 1
    %p71 = scmp.eq.s32.totalorder %s12, 1
    %p72 = scmp.ne.s32.totalorder %s67, %s69
    %p73 = scmp.eq.s32.totalorder %s12, 0
    %p74 = por %p72, %p73
    %p75 = scmp.ne.s32.totalorder %s67, %s69
    %p76 = scmp.eq.s32.totalorder %s17, 1
    %p77 = por %p75, %p76
    %p78 = scmp.ne.s32.totalorder %s69, %s70
    %p79 = scmp.eq.s32.totalorder %s17, 0
    %p80 = por %p78, %p79
    %p81 = scmp.ne.s32.totalorder %s69, %s70
    %p82 = scmp.eq.s32.totalorder %s18, 1
    %p83 = por %p81, %p82
    %p85 = scmp.ne.s32.totalorder %s70, %s84
    %p86 = scmp.eq.s32.totalorder %s18, 0
    %p87 = por %p85, %p86
    %s89 = sadd.s32 %s88, 1
    %p92 = scmp.eq.s32.totalorder %s12, 1
    %p93 = scmp.ne.s32.totalorder %s88, %s90
    %p94 = scmp.eq.s32.totalorder %s12, 0
    %p95 = por %p93, %p94
    %p96 = scmp.ne.s32.totalorder %s88, %s90
    %p97 = scmp.eq.s32.totalorder %s17, 1
    %p98 = por %p96, %p97
    %p99 = scmp.ne.s32.totalorder %s90, %s91
    %p100 = scmp.eq.s32.totalorder %s17, 0
    %p101 = por %p99, %p100
    %p102 = scmp.ne.s32.totalorder %s90, %s91
    %p103 = scmp.eq.s32.totalorder %s18, 1
    %p104 = por %p102, %p103
    %p106 = scmp.ne.s32.totalorder %s91, %s105
    %p107 = scmp.eq.s32.totalorder %s18, 0
    %p108 = por %p106, %p107
    %s109 = ssub.s32 %s12, %s19
    %p110 = scmp.eq.s32.totalorder %s109, 0
    %s112 = sadd.s32 %s111, 1
    %s113 = scalar_select %p110, %s111, %s112
    %p116 = pneg %p110
    %p117 = scmp.eq.s32.totalorder %s12, 1
    %p118 = por %p116, %p117
    %p119 = scmp.ne.s32.totalorder %s111, %s114
    %p120 = scmp.eq.s32.totalorder %s12, 0
    %p121 = por %p119, %p120
    %p122 = scmp.ne.s32.totalorder %s111, %s114
    %p123 = scmp.eq.s32.totalorder %s17, 1
    %p124 = por %p122, %p123
    %p125 = scmp.ne.s32.totalorder %s114, %s115
    %p126 = scmp.eq.s32.totalorder %s17, 0
    %p127 = por %p125, %p126
    %p128 = scmp.ne.s32.totalorder %s114, %s115
    %p129 = scmp.eq.s32.totalorder %s18, 1
    %p130 = por %p128, %p129
    %p132 = scmp.ne.s32.totalorder %s115, %s131
    %p133 = scmp.eq.s32.totalorder %s18, 0
    %p134 = por %p132, %p133
    %s135 = ssub.s32 %s12, %s19
    %p136 = scmp.eq.s32.totalorder %s135, 0
    %s138 = sadd.s32 %s137, 1
    %s139 = scalar_select %p136, %s137, %s138
    %p142 = pneg %p136
    %p143 = scmp.eq.s32.totalorder %s12, 1
    %p144 = por %p142, %p143
    %p145 = scmp.ne.s32.totalorder %s137, %s140
    %p146 = scmp.eq.s32.totalorder %s12, 0
    %p147 = por %p145, %p146
    %p148 = scmp.ne.s32.totalorder %s137, %s140
    %p149 = scmp.eq.s32.totalorder %s17, 1
    %p150 = por %p148, %p149
    %p151 = scmp.ne.s32.totalorder %s140, %s141
    %p152 = scmp.eq.s32.totalorder %s17, 0
    %p153 = por %p151, %p152
    %p154 = scmp.ne.s32.totalorder %s140, %s141
    %p155 = scmp.eq.s32.totalorder %s18, 1
    %p156 = por %p154, %p155
    %p158 = scmp.ne.s32.totalorder %s141, %s157
    %p159 = scmp.eq.s32.totalorder %s18, 0
    %p160 = por %p158, %p159
    %p161 = scmp.le.s32.totalorder 1, %s12
    %p162 = scmp.lt.s32.totalorder %s12, 3
    %p163 = pnand %p161, %p162
    %p164 = pneg %p163
    // Predicated region
    $region9: #{residual_block_forward.4} parent=5 // pred_check
      _
    $region10: #{residual_block_forward.4} parent=5 // pred_check_branch
      %166 = sbr.rel (%p163) target = $region12
    $region11: #{residual_block_forward.4} parent=5 // pred_region
      %s167 = ssub.s32 %s12, 1
      // Predicated region
      $region13: #{residual_block_forward.4} parent=11 // pred_check
        %p168 = pneg %p59
      $region14: #{residual_block_forward.4} parent=11 // pred_check_branch
        %170 = sbr.rel (%p168) target = $region16
      $region15: #{residual_block_forward.4} parent=11 // pred_region
        _
      $region16: #{residual_block_forward.4} parent=11 // pred_fallthru
        _
      // Predicated region
      $region17: #{residual_block_forward.4} parent=11 // pred_check
        %p171 = pneg %p80
      $region18: #{residual_block_forward.4} parent=11 // pred_check_branch
        %173 = sbr.rel (%p171) target = $region20
      $region19: #{residual_block_forward.4} parent=11 // pred_region
        _
      $region20: #{residual_block_forward.4} parent=11 // pred_fallthru
        _
      // Predicated region
      $region21: #{residual_block_forward.4} parent=11 // pred_check
        %p174 = pneg %p101
      $region22: #{residual_block_forward.4} parent=11 // pred_check_branch
        %176 = sbr.rel (%p174) target = $region24
      $region23: #{residual_block_forward.4} parent=11 // pred_region
        _
      $region24: #{residual_block_forward.4} parent=11 // pred_fallthru
        _
    $region12: #{residual_block_forward.4} parent=5 // pred_fallthru
      _
    %p177 = scmp.lt.s32.totalorder %s12, 2
    // Predicated region
    $region25: #{residual_block_forward.4} parent=5 // pred_check
      %p178 = pneg %p177
    $region26: #{residual_block_forward.4} parent=5 // pred_check_branch
      %180 = sbr.rel (%p178) target = $region28
    $region27: #{residual_block_forward.4} parent=5 // pred_region
      // Predicated region
      $region29: #{residual_block_forward.4} parent=27 // pred_check
        %p181 = pneg %p32
      $region30: #{residual_block_forward.4} parent=27 // pred_check_branch
        %183 = sbr.rel (%p181) target = $region32
      $region31: #{residual_block_forward.4} parent=27 // pred_region
        %p184 = scmp.lt.s32.totalorder %s12, 1
        %s185 = scalar_select %p184, %s12, 1
        %s186 = smul.addr %s185, 41
        %s187 = smul.addr %s186, 8
        %s188 = scalar_lea.vmem %s0, %s187
      $region32: #{residual_block_forward.4} parent=27 // pred_fallthru
        _
    $region28: #{residual_block_forward.4} parent=5 // pred_fallthru
      _
    %p189 = scmp.le.s32.totalorder 1, %s12
    %p190 = scmp.lt.s32.totalorder %s12, 3
    %p191 = pnand %p189, %p190
    %p192 = pneg %p191
    // Predicated region
    $region33: #{residual_block_forward.4} parent=5 // pred_check
      _
    $region34: #{residual_block_forward.4} parent=5 // pred_check_branch
      %194 = sbr.rel (%p191) target = $region36
    $region35: #{residual_block_forward.4} parent=5 // pred_region
      %s195 = ssub.s32 %s12, 1
      %p196 = scmp.lt.s32.totalorder %s17, 1
      %s197 = scalar_select %p196, %s17, 1
      %s198 = smul.addr %s197, 41
      %s199 = smul.addr %s198, 8
      %s200 = scalar_lea.vmem %s0, %s199
      %p201 = pneg %p38
      %p202 = pneg %p35
      %p203 = pneg %p59
      %p204 = pneg %p56
      %p205 = pneg %p80
      %p206 = pneg %p77
      %p207 = pneg %p101
      %p208 = pneg %p98
      %p209 = pneg %p127
      %p210 = pneg %p124
      %p211 = scmp.lt.s32.totalorder %s17, 1
      %s212 = scalar_select %p211, %s17, 1
      %s213 = smul.addr %s212, 36
      %s214 = smul.addr %s213, 8
      %s215 = scalar_lea.vmem %s4, %s214
      %p216 = pneg %p153
      %p217 = pneg %p150
      %p218 = scmp.lt.s32.totalorder %s17, 1
      %s219 = scalar_select %p218, %s17, 1
      %s220 = smul.addr %s219, 2
      %s221 = scalar_lea.vmem %s5, %s220
      %p222 = scmp.lt.s32.totalorder %s17, 1
      %s223 = scalar_select %p222, %s17, 1
      %s224 = smul.addr %s223, 41
      %s225 = smul.addr %s224, 8
      %s226 = scalar_lea.vmem %s0, %s225
      %p227 = scmp.lt.s32.totalorder %s17, 1
      %s228 = scalar_select %p227, %s17, 1
      %s229 = smul.addr %s228, 36
      %s230 = smul.addr %s229, 8
      %s231 = scalar_lea.vmem %s4, %s230
      %p232 = scmp.lt.s32.totalorder %s17, 1
      %s233 = scalar_select %p232, %s17, 1
      %s234 = smul.addr %s233, 2
      %s235 = scalar_lea.vmem %s5, %s234
      %v237 = vld [vmem:[%s226] sm:$0xff]
      %v238 = vld [vmem:[%s226 + $0x8] sm:$0xff]
      %v239 = vld [vmem:[%s226 + $0x10] sm:$0xff]
      %v240 = vld [vmem:[%s226 + $0x18] sm:$0xff]
      %v241 = vld [vmem:[%s226 + $0x20] sm:$0xff]
      %v242 = vld [vmem:[%s226 + $0x28] sm:$0xff]
      %v243 = vld [vmem:[%s226 + $0x30] sm:$0xff]
      %v244 = vld [vmem:[%s226 + $0x38] sm:$0xff]
      %v245 = vld [vmem:[%s226 + $0x40] sm:$0xff]
      %v246 = vld [vmem:[%s226 + $0x48] sm:$0xff]
      %v247 = vld [vmem:[%s226 + $0x50] sm:$0xff]
      %v248 = vld [vmem:[%s226 + $0x58] sm:$0xff]
      %v249 = vld [vmem:[%s226 + $0x60] sm:$0xff]
      %v250 = vld [vmem:[%s226 + $0x68] sm:$0xff]
      %v251 = vld [vmem:[%s226 + $0x70] sm:$0xff]
      %v252 = vld [vmem:[%s226 + $0x78] sm:$0xff]
      %v253 = vld [vmem:[%s226 + $0x80] sm:$0xff]
      %v254 = vld [vmem:[%s226 + $0x88] sm:$0xff]
      %v255 = vld [vmem:[%s226 + $0x90] sm:$0xff]
      %v256 = vld [vmem:[%s226 + $0x98] sm:$0xff]
      %v257 = vld [vmem:[%s226 + $0xa0] sm:$0xff]
      %v258 = vld [vmem:[%s226 + $0xa8] sm:$0xff]
      %v259 = vld [vmem:[%s226 + $0xb0] sm:$0xff]
      %v260 = vld [vmem:[%s226 + $0xb8] sm:$0xff]
      %v261 = vld [vmem:[%s226 + $0xc0] sm:$0xff]
      %v262 = vld [vmem:[%s226 + $0xc8] sm:$0xff]
      %v263 = vld [vmem:[%s226 + $0xd0] sm:$0xff]
      %v264 = vld [vmem:[%s226 + $0xd8] sm:$0xff]
      %v265 = vld [vmem:[%s226 + $0xe0] sm:$0xff]
      %v266 = vld [vmem:[%s226 + $0xe8] sm:$0xff]
      %v267 = vld [vmem:[%s226 + $0xf0] sm:$0xff]
      %v268 = vld [vmem:[%s226 + $0xf8] sm:$0xff]
      %v269 = vld [vmem:[%s226 + $0x100] sm:$0xff]
      %v270 = vld [vmem:[%s226 + $0x108] sm:$0xff]
      %v271 = vld [vmem:[%s226 + $0x110] sm:$0xff]
      %v272 = vld [vmem:[%s226 + $0x118] sm:$0xff]
      %v273 = vpack.c.bf16 %v238, %v237
      %v274 = vpack.c.bf16 %v240, %v239
      %v275 = vpack.c.bf16 %v242, %v241
      %v276 = vpack.c.bf16 %v244, %v243
      %v277 = vpack.c.bf16 %v246, %v245
      %v278 = vpack.c.bf16 %v248, %v247
      %v279 = vpack.c.bf16 %v250, %v249
      %v280 = vpack.c.bf16 %v252, %v251
      %v281 = vpack.c.bf16 %v254, %v253
      %v282 = vpack.c.bf16 %v256, %v255
      %v283 = vpack.c.bf16 %v258, %v257
      %v284 = vpack.c.bf16 %v260, %v259
      %v285 = vpack.c.bf16 %v262, %v261
      %v286 = vpack.c.bf16 %v264, %v263
      %v287 = vpack.c.bf16 %v266, %v265
      %v288 = vpack.c.bf16 %v268, %v267
      %v289 = vpack.c.bf16 %v270, %v269
      %v290 = vpack.c.bf16 %v272, %v271
      %v291 = vld [vmem:[%s1] sm:$0xf]
      %v292 = vld [vmem:[%s1 + $0x4] sm:$0xf]
      %v293 = vld [vmem:[%s1 + $0x8] sm:$0xf]
      %v294 = vld [vmem:[%s1 + $0xc] sm:$0xf]
      %v295 = vld [vmem:[%s1 + $0x10] sm:$0xf]
      %v296 = vld [vmem:[%s1 + $0x14] sm:$0xf]
      %v297 = vld [vmem:[%s1 + $0x18] sm:$0xf]
      %v298 = vld [vmem:[%s1 + $0x1c] sm:$0xf]
      %v299 = vld [vmem:[%s226 + $0x1] sm:$0xff]
      %v300 = vld [vmem:[%s226 + $0x9] sm:$0xff]
      %v301 = vld [vmem:[%s226 + $0x11] sm:$0xff]
      %v302 = vld [vmem:[%s226 + $0x19] sm:$0xff]
      %v303 = vld [vmem:[%s226 + $0x21] sm:$0xff]
      %v304 = vld [vmem:[%s226 + $0x29] sm:$0xff]
      %v305 = vld [vmem:[%s226 + $0x31] sm:$0xff]
      %v306 = vld [vmem:[%s226 + $0x39] sm:$0xff]
      %v307 = vld [vmem:[%s226 + $0x41] sm:$0xff]
      %v308 = vld [vmem:[%s226 + $0x49] sm:$0xff]
      %v309 = vld [vmem:[%s226 + $0x51] sm:$0xff]
      %v310 = vld [vmem:[%s226 + $0x59] sm:$0xff]
      %v311 = vld [vmem:[%s226 + $0x61] sm:$0xff]
      %v312 = vld [vmem:[%s226 + $0x69] sm:$0xff]
      %v313 = vld [vmem:[%s226 + $0x71] sm:$0xff]
      %v314 = vld [vmem:[%s226 + $0x79] sm:$0xff]
      %v315 = vld [vmem:[%s226 + $0x81] sm:$0xff]
      %v316 = vld [vmem:[%s226 + $0x89] sm:$0xff]
      %v317 = vld [vmem:[%s226 + $0x91] sm:$0xff]
      %v318 = vld [vmem:[%s226 + $0x99] sm:$0xff]
      %v319 = vld [vmem:[%s226 + $0xa1] sm:$0xff]
      %v320 = vld [vmem:[%s226 + $0xa9] sm:$0xff]
      %v321 = vld [vmem:[%s226 + $0xb1] sm:$0xff]
      %v322 = vld [vmem:[%s226 + $0xb9] sm:$0xff]
      %v323 = vld [vmem:[%s226 + $0xc1] sm:$0xff]
      %v324 = vld [vmem:[%s226 + $0xc9] sm:$0xff]
      %v325 = vld [vmem:[%s226 + $0xd1] sm:$0xff]
      %v326 = vld [vmem:[%s226 + $0xd9] sm:$0xff]
      %v327 = vld [vmem:[%s226 + $0xe1] sm:$0xff]
      %v328 = vld [vmem:[%s226 + $0xe9] sm:$0xff]
      %v329 = vld [vmem:[%s226 + $0xf1] sm:$0xff]
      %v330 = vld [vmem:[%s226 + $0xf9] sm:$0xff]
      %v331 = vld [vmem:[%s226 + $0x101] sm:$0xff]
      %v332 = vld [vmem:[%s226 + $0x109] sm:$0xff]
      %v333 = vld [vmem:[%s226 + $0x111] sm:$0xff]
      %v334 = vld [vmem:[%s226 + $0x119] sm:$0xff]
      %v335 = vpack.c.bf16 %v300, %v299
      %v336 = vpack.c.bf16 %v302, %v301
      %v337 = vpack.c.bf16 %v304, %v303
      %v338 = vpack.c.bf16 %v306, %v305
      %v339 = vpack.c.bf16 %v308, %v307
      %v340 = vpack.c.bf16 %v310, %v309
      %v341 = vpack.c.bf16 %v312, %v311
      %v342 = vpack.c.bf16 %v314, %v313
      %v343 = vpack.c.bf16 %v316, %v315
      %v344 = vpack.c.bf16 %v318, %v317
      %v345 = vpack.c.bf16 %v320, %v319
      %v346 = vpack.c.bf16 %v322, %v321
      %v347 = vpack.c.bf16 %v324, %v323
      %v348 = vpack.c.bf16 %v326, %v325
      %v349 = vpack.c.bf16 %v328, %v327
      %v350 = vpack.c.bf16 %v330, %v329
      %v351 = vpack.c.bf16 %v332, %v331
      %v352 = vpack.c.bf16 %v334, %v333
      %s353 = scalar_lea.vmem %s1, 32
      %v354 = vld [vmem:[%s353] sm:$0xf]
      %v355 = vld [vmem:[%s353 + $0x4] sm:$0xf]
      %v356 = vld [vmem:[%s353 + $0x8] sm:$0xf]
      %v357 = vld [vmem:[%s353 + $0xc] sm:$0xf]
      %v358 = vld [vmem:[%s353 + $0x10] sm:$0xf]
      %v359 = vld [vmem:[%s353 + $0x14] sm:$0xf]
      %v360 = vld [vmem:[%s353 + $0x18] sm:$0xf]
      %v361 = vld [vmem:[%s353 + $0x1c] sm:$0xf]
      %v370 = vunpack.c.l.b16 %v354
      %v371 = vunpack.c.l.b16 %v355
      %v372 = vunpack.c.l.b16 %v356
      %v373 = vunpack.c.l.b16 %v357
      %v374 = vunpack.c.l.b16 %v358
      %v375 = vunpack.c.l.b16 %v359
      %v376 = vunpack.c.l.b16 %v360
      %v377 = vunpack.c.l.b16 %v361
      %v378 = vpack.c.b16 %v371, %v370
      %v379 = vpack.c.b16 %v373, %v372
      %v380 = vpack.c.b16 %v375, %v374
      %v381 = vpack.c.b16 %v377, %v376
      %vm386 = vcmask 523264
      %v388 = vsel %vm386, %v335, 0
      %v391 = vsel %vm386, %v336, 0
      %v394 = vsel %vm386, %v337, 0
      %v397 = vsel %vm386, %v338, 0
      %v400 = vsel %vm386, %v339, 0
      %v403 = vsel %vm386, %v340, 0
      %v406 = vsel %vm386, %v341, 0
      %v409 = vsel %vm386, %v342, 0
      %v412 = vsel %vm386, %v343, 0
      %v415 = vsel %vm386, %v344, 0
      %v418 = vsel %vm386, %v345, 0
      %v421 = vsel %vm386, %v346, 0
      %v424 = vsel %vm386, %v347, 0
      %v427 = vsel %vm386, %v348, 0
      %v430 = vsel %vm386, %v349, 0
      %v433 = vsel %vm386, %v350, 0
      %v436 = vsel %vm386, %v351, 0
      %v439 = vsel %vm386, %v352, 0
      %441 = vmatprep.subr.bf16.mxu0 0
      %442 = vmatpush1.bf16.msra.mxu0 0
      %443 = vmatprep.subr.bf16.mxu0 0
      %444 = vmatpush1.bf16.msra.mxu0 0
      %445 = vmatprep.subr.bf16.mxu0 0
      %446 = vmatpush1.bf16.msra.mxu0 0
      %447 = vmatprep.subr.bf16.mxu0 0
      %448 = vmatpush1.bf16.msra.mxu0 0
      %449 = vmatprep.subr.bf16.mxu0 0
      %450 = vmatpush1.bf16.msra.mxu0 %v381
      %451 = vmatprep.subr.bf16.mxu0 0
      %452 = vmatpush1.bf16.msra.mxu0 %v380
      %453 = vmatprep.subr.bf16.mxu0 0
      %454 = vmatpush1.bf16.msra.mxu0 %v379
      %455 = vmatprep.subr.bf16.mxu0 0
      %456 = vmatpush1.bf16.msra.mxu0 %v378
      %457 = vmatprep.subr.bf16.mxu0 0
      %458 = vmatpush2.bf16.msra.mxu0 0
      %459 = vmatprep.subr.bf16.mxu0 0
      %460 = vmatpush2.bf16.msra.mxu0 0
      %461 = vmatprep.subr.bf16.mxu0 0
      %462 = vmatpush2.bf16.msra.mxu0 0
      %463 = vmatprep.subr.bf16.mxu0 0
      %464 = vmatpush2.bf16.msra.mxu0 0
      %465 = vmatprep.subr.bf16.mxu0 0
      %466 = vmatpush2.bf16.msra.mxu0 0
      %467 = vmatprep.subr.bf16.mxu0 0
      %468 = vmatpush2.bf16.msra.mxu0 0
      %469 = vmatprep.subr.bf16.mxu0 0
      %470 = vmatpush2.bf16.msra.mxu0 0
      %471 = vmatprep.subr.bf16.mxu0 0
      %472 = vmatpush2.bf16.msra.mxu0 0
      %473 = vmatprep.mubr.bf16.mxu0 0
      %474 = vmatmul.mubr.bf16.gmra.mxu0 %v388
      %v475 = vpop.f32.mrf.mxu0
      %v476 = vadd.f32 0.0, %v475
      %v477 = vpop.f32.mrf.mxu0
      %v478 = vpop.f32.mrf.mxu0
      %v479 = vadd.f32 0.0, %v478
      %v480 = vpop.f32.mrf.mxu0
      %481 = vmatprep.mubr.bf16.mxu0 0
      %482 = vmatmul.mubr.bf16.gmra.mxu0 %v391
      %v483 = vpop.f32.mrf.mxu0
      %v484 = vadd.f32 0.0, %v483
      %v485 = vpop.f32.mrf.mxu0
      %v486 = vpop.f32.mrf.mxu0
      %v487 = vadd.f32 0.0, %v486
      %v488 = vpop.f32.mrf.mxu0
      %489 = vmatprep.mubr.bf16.mxu0 0
      %490 = vmatmul.mubr.bf16.gmra.mxu0 %v394
      %v491 = vpop.f32.mrf.mxu0
      %v492 = vadd.f32 0.0, %v491
      %v493 = vpop.f32.mrf.mxu0
      %v494 = vpop.f32.mrf.mxu0
      %v495 = vadd.f32 0.0, %v494
      %v496 = vpop.f32.mrf.mxu0
      %497 = vmatprep.mubr.bf16.mxu0 0
      %498 = vmatmul.mubr.bf16.gmra.mxu0 %v397
      %v499 = vpop.f32.mrf.mxu0
      %v500 = vadd.f32 0.0, %v499
      %v501 = vpop.f32.mrf.mxu0
      %v502 = vpop.f32.mrf.mxu0
      %v503 = vadd.f32 0.0, %v502
      %v504 = vpop.f32.mrf.mxu0
      %505 = vmatprep.mubr.bf16.mxu0 0
      %506 = vmatmul.mubr.bf16.gmra.mxu0 %v400
      %v507 = vpop.f32.mrf.mxu0
      %v508 = vadd.f32 0.0, %v507
      %v509 = vpop.f32.mrf.mxu0
      %v510 = vpop.f32.mrf.mxu0
      %v511 = vadd.f32 0.0, %v510
      %v512 = vpop.f32.mrf.mxu0
      %513 = vmatprep.mubr.bf16.mxu0 0
      %514 = vmatmul.mubr.bf16.gmra.mxu0 %v403
      %v515 = vpop.f32.mrf.mxu0
      %v516 = vadd.f32 0.0, %v515
      %v517 = vpop.f32.mrf.mxu0
      %v518 = vpop.f32.mrf.mxu0
      %v519 = vadd.f32 0.0, %v518
      %v520 = vpop.f32.mrf.mxu0
      %521 = vmatprep.mubr.bf16.mxu0 0
      %522 = vmatmul.mubr.bf16.gmra.mxu0 %v406
      %v523 = vpop.f32.mrf.mxu0
      %v524 = vadd.f32 0.0, %v523
      %v525 = vpop.f32.mrf.mxu0
      %v526 = vpop.f32.mrf.mxu0
      %v527 = vadd.f32 0.0, %v526
      %v528 = vpop.f32.mrf.mxu0
      %529 = vmatprep.mubr.bf16.mxu0 0
      %530 = vmatmul.mubr.bf16.gmra.mxu0 %v409
      %v531 = vpop.f32.mrf.mxu0
      %v532 = vadd.f32 0.0, %v531
      %v533 = vpop.f32.mrf.mxu0
      %v534 = vpop.f32.mrf.mxu0
      %v535 = vadd.f32 0.0, %v534
      %v536 = vpop.f32.mrf.mxu0
      %537 = vmatprep.mubr.bf16.mxu0 0
      %538 = vmatmul.mubr.bf16.gmra.mxu0 %v412
      %v539 = vpop.f32.mrf.mxu0
      %v540 = vadd.f32 0.0, %v539
      %v541 = vpop.f32.mrf.mxu0
      %v542 = vpop.f32.mrf.mxu0
      %v543 = vadd.f32 0.0, %v542
      %v544 = vpop.f32.mrf.mxu0
      %545 = vmatprep.mubr.bf16.mxu0 0
      %546 = vmatmul.mubr.bf16.gmra.mxu0 %v415
      %v547 = vpop.f32.mrf.mxu0
      %v548 = vadd.f32 0.0, %v547
      %v549 = vpop.f32.mrf.mxu0
      %v550 = vpop.f32.mrf.mxu0
      %v551 = vadd.f32 0.0, %v550
      %v552 = vpop.f32.mrf.mxu0
      %553 = vmatprep.mubr.bf16.mxu0 0
      %554 = vmatmul.mubr.bf16.gmra.mxu0 %v418
      %v555 = vpop.f32.mrf.mxu0
      %v556 = vadd.f32 0.0, %v555
      %v557 = vpop.f32.mrf.mxu0
      %v558 = vpop.f32.mrf.mxu0
      %v559 = vadd.f32 0.0, %v558
      %v560 = vpop.f32.mrf.mxu0
      %561 = vmatprep.mubr.bf16.mxu0 0
      %562 = vmatmul.mubr.bf16.gmra.mxu0 %v421
      %v563 = vpop.f32.mrf.mxu0
      %v564 = vadd.f32 0.0, %v563
      %v565 = vpop.f32.mrf.mxu0
      %v566 = vpop.f32.mrf.mxu0
      %v567 = vadd.f32 0.0, %v566
      %v568 = vpop.f32.mrf.mxu0
      %569 = vmatprep.mubr.bf16.mxu0 0
      %570 = vmatmul.mubr.bf16.gmra.mxu0 %v424
      %v571 = vpop.f32.mrf.mxu0
      %v572 = vadd.f32 0.0, %v571
      %v573 = vpop.f32.mrf.mxu0
      %v574 = vpop.f32.mrf.mxu0
      %v575 = vadd.f32 0.0, %v574
      %v576 = vpop.f32.mrf.mxu0
      %577 = vmatprep.mubr.bf16.mxu0 0
      %578 = vmatmul.mubr.bf16.gmra.mxu0 %v427
      %v579 = vpop.f32.mrf.mxu0
      %v580 = vadd.f32 0.0, %v579
      %v581 = vpop.f32.mrf.mxu0
      %v582 = vpop.f32.mrf.mxu0
      %v583 = vadd.f32 0.0, %v582
      %v584 = vpop.f32.mrf.mxu0
      %585 = vmatprep.mubr.bf16.mxu0 0
      %586 = vmatmul.mubr.bf16.gmra.mxu0 %v430
      %v587 = vpop.f32.mrf.mxu0
      %v588 = vadd.f32 0.0, %v587
      %v589 = vpop.f32.mrf.mxu0
      %v590 = vpop.f32.mrf.mxu0
      %v591 = vadd.f32 0.0, %v590
      %v592 = vpop.f32.mrf.mxu0
      %593 = vmatprep.mubr.bf16.mxu0 0
      %594 = vmatmul.mubr.bf16.gmra.mxu0 %v433
      %v595 = vpop.f32.mrf.mxu0
      %v596 = vadd.f32 0.0, %v595
      %v597 = vpop.f32.mrf.mxu0
      %v598 = vpop.f32.mrf.mxu0
      %v599 = vadd.f32 0.0, %v598
      %v600 = vpop.f32.mrf.mxu0
      %601 = vmatprep.mubr.bf16.mxu0 0
      %602 = vmatmul.mubr.bf16.gmra.mxu0 %v436
      %v603 = vpop.f32.mrf.mxu0
      %v604 = vadd.f32 0.0, %v603
      %v605 = vpop.f32.mrf.mxu0
      %v606 = vpop.f32.mrf.mxu0
      %v607 = vadd.f32 0.0, %v606
      %v608 = vpop.f32.mrf.mxu0
      %609 = vmatprep.mubr.bf16.mxu0 0
      %610 = vmatmul.mubr.bf16.gmra.mxu0 %v439
      %v611 = vpop.f32.mrf.mxu0
      %v612 = vadd.f32 0.0, %v611
      %v613 = vpop.f32.mrf.mxu0
      %v614 = vpop.f32.mrf.mxu0
      %v615 = vadd.f32 0.0, %v614
      %v616 = vpop.f32.mrf.mxu0
      %617 = vdwg.mxu0
      %v626 = vunpack.c.l.b16 %v291
      %v627 = vunpack.c.l.b16 %v292
      %v628 = vunpack.c.l.b16 %v293
      %v629 = vunpack.c.l.b16 %v294
      %v630 = vunpack.c.l.b16 %v295
      %v631 = vunpack.c.l.b16 %v296
      %v632 = vunpack.c.l.b16 %v297
      %v633 = vunpack.c.l.b16 %v298
      %v634 = vpack.c.b16 %v627, %v626
      %v635 = vpack.c.b16 %v629, %v628
      %v636 = vpack.c.b16 %v631, %v630
      %v637 = vpack.c.b16 %v633, %v632
      %v643 = vsel %vm386, %v273, 0
      %v646 = vsel %vm386, %v274, 0
      %v649 = vsel %vm386, %v275, 0
      %v652 = vsel %vm386, %v276, 0
      %v655 = vsel %vm386, %v277, 0
      %v658 = vsel %vm386, %v278, 0
      %v661 = vsel %vm386, %v279, 0
      %v664 = vsel %vm386, %v280, 0
      %v667 = vsel %vm386, %v281, 0
      %v670 = vsel %vm386, %v282, 0
      %v673 = vsel %vm386, %v283, 0
      %v676 = vsel %vm386, %v284, 0
      %v679 = vsel %vm386, %v285, 0
      %v682 = vsel %vm386, %v286, 0
      %v685 = vsel %vm386, %v287, 0
      %v688 = vsel %vm386, %v288, 0
      %v691 = vsel %vm386, %v289, 0
      %v694 = vsel %vm386, %v290, 0
      %696 = vmatprep.subr.bf16.mxu0 0
      %697 = vmatpush1.bf16.msra.mxu0 0
      %698 = vmatprep.subr.bf16.mxu0 0
      %699 = vmatpush1.bf16.msra.mxu0 0
      %700 = vmatprep.subr.bf16.mxu0 0
      %701 = vmatpush1.bf16.msra.mxu0 0
      %702 = vmatprep.subr.bf16.mxu0 0
      %703 = vmatpush1.bf16.msra.mxu0 0
      %704 = vmatprep.subr.bf16.mxu0 0
      %705 = vmatpush1.bf16.msra.mxu0 %v637
      %706 = vmatprep.subr.bf16.mxu0 0
      %707 = vmatpush1.bf16.msra.mxu0 %v636
      %708 = vmatprep.subr.bf16.mxu0 0
      %709 = vmatpush1.bf16.msra.mxu0 %v635
      %710 = vmatprep.subr.bf16.mxu0 0
      %711 = vmatpush1.bf16.msra.mxu0 %v634
      %712 = vmatprep.subr.bf16.mxu0 0
      %713 = vmatpush2.bf16.msra.mxu0 0
      %714 = vmatprep.subr.bf16.mxu0 0
      %715 = vmatpush2.bf16.msra.mxu0 0
      %716 = vmatprep.subr.bf16.mxu0 0
      %717 = vmatpush2.bf16.msra.mxu0 0
      %718 = vmatprep.subr.bf16.mxu0 0
      %719 = vmatpush2.bf16.msra.mxu0 0
      %720 = vmatprep.subr.bf16.mxu0 0
      %721 = vmatpush2.bf16.msra.mxu0 0
      %722 = vmatprep.subr.bf16.mxu0 0
      %723 = vmatpush2.bf16.msra.mxu0 0
      %724 = vmatprep.subr.bf16.mxu0 0
      %725 = vmatpush2.bf16.msra.mxu0 0
      %726 = vmatprep.subr.bf16.mxu0 0
      %727 = vmatpush2.bf16.msra.mxu0 0
      %728 = vmatprep.mubr.bf16.mxu0 0
      %729 = vmatmul.mubr.bf16.gmra.mxu0 %v643
      %v730 = vpop.f32.mrf.mxu0
      %v731 = vadd.f32 %v476, %v730
      %v732 = vpop.f32.mrf.mxu0
      %v733 = vpop.f32.mrf.mxu0
      %v734 = vadd.f32 %v479, %v733
      %v735 = vpop.f32.mrf.mxu0
      %736 = vmatprep.mubr.bf16.mxu0 0
      %737 = vmatmul.mubr.bf16.gmra.mxu0 %v646
      %v738 = vpop.f32.mrf.mxu0
      %v739 = vadd.f32 %v484, %v738
      %v740 = vpop.f32.mrf.mxu0
      %v741 = vpop.f32.mrf.mxu0
      %v742 = vadd.f32 %v487, %v741
      %v743 = vpop.f32.mrf.mxu0
      %744 = vmatprep.mubr.bf16.mxu0 0
      %745 = vmatmul.mubr.bf16.gmra.mxu0 %v649
      %v746 = vpop.f32.mrf.mxu0
      %v747 = vadd.f32 %v492, %v746
      %v748 = vpop.f32.mrf.mxu0
      %v749 = vpop.f32.mrf.mxu0
      %v750 = vadd.f32 %v495, %v749
      %v751 = vpop.f32.mrf.mxu0
      %752 = vmatprep.mubr.bf16.mxu0 0
      %753 = vmatmul.mubr.bf16.gmra.mxu0 %v652
      %v754 = vpop.f32.mrf.mxu0
      %v755 = vadd.f32 %v500, %v754
      %v756 = vpop.f32.mrf.mxu0
      %v757 = vpop.f32.mrf.mxu0
      %v758 = vadd.f32 %v503, %v757
      %v759 = vpop.f32.mrf.mxu0
      %760 = vmatprep.mubr.bf16.mxu0 0
      %761 = vmatmul.mubr.bf16.gmra.mxu0 %v655
      %v762 = vpop.f32.mrf.mxu0
      %v763 = vadd.f32 %v508, %v762
      %v764 = vpop.f32.mrf.mxu0
      %v765 = vpop.f32.mrf.mxu0
      %v766 = vadd.f32 %v511, %v765
      %v767 = vpop.f32.mrf.mxu0
      %768 = vmatprep.mubr.bf16.mxu0 0
      %769 = vmatmul.mubr.bf16.gmra.mxu0 %v658
      %v770 = vpop.f32.mrf.mxu0
      %v771 = vadd.f32 %v516, %v770
      %v772 = vpop.f32.mrf.mxu0
      %v773 = vpop.f32.mrf.mxu0
      %v774 = vadd.f32 %v519, %v773
      %v775 = vpop.f32.mrf.mxu0
      %776 = vmatprep.mubr.bf16.mxu0 0
      %777 = vmatmul.mubr.bf16.gmra.mxu0 %v661
      %v778 = vpop.f32.mrf.mxu0
      %v779 = vadd.f32 %v524, %v778
      %v780 = vpop.f32.mrf.mxu0
      %v781 = vpop.f32.mrf.mxu0
      %v782 = vadd.f32 %v527, %v781
      %v783 = vpop.f32.mrf.mxu0
      %784 = vmatprep.mubr.bf16.mxu0 0
      %785 = vmatmul.mubr.bf16.gmra.mxu0 %v664
      %v786 = vpop.f32.mrf.mxu0
      %v787 = vadd.f32 %v532, %v786
      %v788 = vpop.f32.mrf.mxu0
      %v789 = vpop.f32.mrf.mxu0
      %v790 = vadd.f32 %v535, %v789
      %v791 = vpop.f32.mrf.mxu0
      %792 = vmatprep.mubr.bf16.mxu0 0
      %793 = vmatmul.mubr.bf16.gmra.mxu0 %v667
      %v794 = vpop.f32.mrf.mxu0
      %v795 = vadd.f32 %v540, %v794
      %v796 = vpop.f32.mrf.mxu0
      %v797 = vpop.f32.mrf.mxu0
      %v798 = vadd.f32 %v543, %v797
      %v799 = vpop.f32.mrf.mxu0
      %800 = vmatprep.mubr.bf16.mxu0 0
      %801 = vmatmul.mubr.bf16.gmra.mxu0 %v670
      %v802 = vpop.f32.mrf.mxu0
      %v803 = vadd.f32 %v548, %v802
      %v804 = vpop.f32.mrf.mxu0
      %v805 = vpop.f32.mrf.mxu0
      %v806 = vadd.f32 %v551, %v805
      %v807 = vpop.f32.mrf.mxu0
      %808 = vmatprep.mubr.bf16.mxu0 0
      %809 = vmatmul.mubr.bf16.gmra.mxu0 %v673
      %v810 = vpop.f32.mrf.mxu0
      %v811 = vadd.f32 %v556, %v810
      %v812 = vpop.f32.mrf.mxu0
      %v813 = vpop.f32.mrf.mxu0
      %v814 = vadd.f32 %v559, %v813
      %v815 = vpop.f32.mrf.mxu0
      %816 = vmatprep.mubr.bf16.mxu0 0
      %817 = vmatmul.mubr.bf16.gmra.mxu0 %v676
      %v818 = vpop.f32.mrf.mxu0
      %v819 = vadd.f32 %v564, %v818
      %v820 = vpop.f32.mrf.mxu0
      %v821 = vpop.f32.mrf.mxu0
      %v822 = vadd.f32 %v567, %v821
      %v823 = vpop.f32.mrf.mxu0
      %824 = vmatprep.mubr.bf16.mxu0 0
      %825 = vmatmul.mubr.bf16.gmra.mxu0 %v679
      %v826 = vpop.f32.mrf.mxu0
      %v827 = vadd.f32 %v572, %v826
      %v828 = vpop.f32.mrf.mxu0
      %v829 = vpop.f32.mrf.mxu0
      %v830 = vadd.f32 %v575, %v829
      %v831 = vpop.f32.mrf.mxu0
      %832 = vmatprep.mubr.bf16.mxu0 0
      %833 = vmatmul.mubr.bf16.gmra.mxu0 %v682
      %v834 = vpop.f32.mrf.mxu0
      %v835 = vadd.f32 %v580, %v834
      %v836 = vpop.f32.mrf.mxu0
      %v837 = vpop.f32.mrf.mxu0
      %v838 = vadd.f32 %v583, %v837
      %v839 = vpop.f32.mrf.mxu0
      %840 = vmatprep.mubr.bf16.mxu0 0
      %841 = vmatmul.mubr.bf16.gmra.mxu0 %v685
      %v842 = vpop.f32.mrf.mxu0
      %v843 = vadd.f32 %v588, %v842
      %v844 = vpop.f32.mrf.mxu0
      %v845 = vpop.f32.mrf.mxu0
      %v846 = vadd.f32 %v591, %v845
      %v847 = vpop.f32.mrf.mxu0
      %848 = vmatprep.mubr.bf16.mxu0 0
      %849 = vmatmul.mubr.bf16.gmra.mxu0 %v688
      %v850 = vpop.f32.mrf.mxu0
      %v851 = vadd.f32 %v596, %v850
      %v852 = vpop.f32.mrf.mxu0
      %v853 = vpop.f32.mrf.mxu0
      %v854 = vadd.f32 %v599, %v853
      %v855 = vpop.f32.mrf.mxu0
      %856 = vmatprep.mubr.bf16.mxu0 0
      %857 = vmatmul.mubr.bf16.gmra.mxu0 %v691
      %v858 = vpop.f32.mrf.mxu0
      %v859 = vadd.f32 %v604, %v858
      %v860 = vpop.f32.mrf.mxu0
      %v861 = vpop.f32.mrf.mxu0
      %v862 = vadd.f32 %v607, %v861
      %v863 = vpop.f32.mrf.mxu0
      %864 = vmatprep.mubr.bf16.mxu0 0
      %865 = vmatmul.mubr.bf16.gmra.mxu0 %v694
      %v866 = vpop.f32.mrf.mxu0
      %v867 = vadd.f32 %v612, %v866
      %v868 = vpop.f32.mrf.mxu0
      %v869 = vpop.f32.mrf.mxu0
      %v870 = vadd.f32 %v615, %v869
      %v871 = vpop.f32.mrf.mxu0
      %872 = vdwg.mxu0
      %v873 = vld [vmem:[%s226 + $0x2] sm:$0xff]
      %v874 = vld [vmem:[%s226 + $0xa] sm:$0xff]
      %v875 = vld [vmem:[%s226 + $0x12] sm:$0xff]
      %v876 = vld [vmem:[%s226 + $0x1a] sm:$0xff]
      %v877 = vld [vmem:[%s226 + $0x22] sm:$0xff]
      %v878 = vld [vmem:[%s226 + $0x2a] sm:$0xff]
      %v879 = vld [vmem:[%s226 + $0x32] sm:$0xff]
      %v880 = vld [vmem:[%s226 + $0x3a] sm:$0xff]
      %v881 = vld [vmem:[%s226 + $0x42] sm:$0xff]
      %v882 = vld [vmem:[%s226 + $0x4a] sm:$0xff]
      %v883 = vld [vmem:[%s226 + $0x52] sm:$0xff]
      %v884 = vld [vmem:[%s226 + $0x5a] sm:$0xff]
      %v885 = vld [vmem:[%s226 + $0x62] sm:$0xff]
      %v886 = vld [vmem:[%s226 + $0x6a] sm:$0xff]
      %v887 = vld [vmem:[%s226 + $0x72] sm:$0xff]
      %v888 = vld [vmem:[%s226 + $0x7a] sm:$0xff]
      %v889 = vld [vmem:[%s226 + $0x82] sm:$0xff]
      %v890 = vld [vmem:[%s226 + $0x8a] sm:$0xff]
      %v891 = vld [vmem:[%s226 + $0x92] sm:$0xff]
      %v892 = vld [vmem:[%s226 + $0x9a] sm:$0xff]
      %v893 = vld [vmem:[%s226 + $0xa2] sm:$0xff]
      %v894 = vld [vmem:[%s226 + $0xaa] sm:$0xff]
      %v895 = vld [vmem:[%s226 + $0xb2] sm:$0xff]
      %v896 = vld [vmem:[%s226 + $0xba] sm:$0xff]
      %v897 = vld [vmem:[%s226 + $0xc2] sm:$0xff]
      %v898 = vld [vmem:[%s226 + $0xca] sm:$0xff]
      %v899 = vld [vmem:[%s226 + $0xd2] sm:$0xff]
      %v900 = vld [vmem:[%s226 + $0xda] sm:$0xff]
      %v901 = vld [vmem:[%s226 + $0xe2] sm:$0xff]
      %v902 = vld [vmem:[%s226 + $0xea] sm:$0xff]
      %v903 = vld [vmem:[%s226 + $0xf2] sm:$0xff]
      %v904 = vld [vmem:[%s226 + $0xfa] sm:$0xff]
      %v905 = vld [vmem:[%s226 + $0x102] sm:$0xff]
      %v906 = vld [vmem:[%s226 + $0x10a] sm:$0xff]
      %v907 = vld [vmem:[%s226 + $0x112] sm:$0xff]
      %v908 = vld [vmem:[%s226 + $0x11a] sm:$0xff]
      %v909 = vpack.c.bf16 %v874, %v873
      %v910 = vpack.c.bf16 %v876, %v875
      %v911 = vpack.c.bf16 %v878, %v877
      %v912 = vpack.c.bf16 %v880, %v879
      %v913 = vpack.c.bf16 %v882, %v881
      %v914 = vpack.c.bf16 %v884, %v883
      %v915 = vpack.c.bf16 %v886, %v885
      %v916 = vpack.c.bf16 %v888, %v887
      %v917 = vpack.c.bf16 %v890, %v889
      %v918 = vpack.c.bf16 %v892, %v891
      %v919 = vpack.c.bf16 %v894, %v893
      %v920 = vpack.c.bf16 %v896, %v895
      %v921 = vpack.c.bf16 %v898, %v897
      %v922 = vpack.c.bf16 %v900, %v899
      %v923 = vpack.c.bf16 %v902, %v901
      %v924 = vpack.c.bf16 %v904, %v903
      %v925 = vpack.c.bf16 %v906, %v905
      %v926 = vpack.c.bf16 %v908, %v907
      %s927 = scalar_lea.vmem %s1, 64
      %v928 = vld [vmem:[%s927] sm:$0xf]
      %v929 = vld [vmem:[%s927 + $0x4] sm:$0xf]
      %v930 = vld [vmem:[%s927 + $0x8] sm:$0xf]
      %v931 = vld [vmem:[%s927 + $0xc] sm:$0xf]
      %v932 = vld [vmem:[%s927 + $0x10] sm:$0xf]
      %v933 = vld [vmem:[%s927 + $0x14] sm:$0xf]
      %v934 = vld [vmem:[%s927 + $0x18] sm:$0xf]
      %v935 = vld [vmem:[%s927 + $0x1c] sm:$0xf]
      %v944 = vunpack.c.l.b16 %v928
      %v945 = vunpack.c.l.b16 %v929
      %v946 = vunpack.c.l.b16 %v930
      %v947 = vunpack.c.l.b16 %v931
      %v948 = vunpack.c.l.b16 %v932
      %v949 = vunpack.c.l.b16 %v933
      %v950 = vunpack.c.l.b16 %v934
      %v951 = vunpack.c.l.b16 %v935
      %v952 = vpack.c.b16 %v945, %v944
      %v953 = vpack.c.b16 %v947, %v946
      %v954 = vpack.c.b16 %v949, %v948
      %v955 = vpack.c.b16 %v951, %v950
      %v961 = vsel %vm386, %v909, 0
      %v964 = vsel %vm386, %v910, 0
      %v967 = vsel %vm386, %v911, 0
      %v970 = vsel %vm386, %v912, 0
      %v973 = vsel %vm386, %v913, 0
      %v976 = vsel %vm386, %v914, 0
      %v979 = vsel %vm386, %v915, 0
      %v982 = vsel %vm386, %v916, 0
      %v985 = vsel %vm386, %v917, 0
      %v988 = vsel %vm386, %v918, 0
      %v991 = vsel %vm386, %v919, 0
      %v994 = vsel %vm386, %v920, 0
      %v997 = vsel %vm386, %v921, 0
      %v1000 = vsel %vm386, %v922, 0
      %v1003 = vsel %vm386, %v923, 0
      %v1006 = vsel %vm386, %v924, 0
      %v1009 = vsel %vm386, %v925, 0
      %v1012 = vsel %vm386, %v926, 0
      %1014 = vmatprep.subr.bf16.mxu0 0
      %1015 = vmatpush1.bf16.msra.mxu0 0
      %1016 = vmatprep.subr.bf16.mxu0 0
      %1017 = vmatpush1.bf16.msra.mxu0 0
      %1018 = vmatprep.subr.bf16.mxu0 0
      %1019 = vmatpush1.bf16.msra.mxu0 0
      %1020 = vmatprep.subr.bf16.mxu0 0
      %1021 = vmatpush1.bf16.msra.mxu0 0
      %1022 = vmatprep.subr.bf16.mxu0 0
      %1023 = vmatpush1.bf16.msra.mxu0 %v955
      %1024 = vmatprep.subr.bf16.mxu0 0
      %1025 = vmatpush1.bf16.msra.mxu0 %v954
      %1026 = vmatprep.subr.bf16.mxu0 0
      %1027 = vmatpush1.bf16.msra.mxu0 %v953
      %1028 = vmatprep.subr.bf16.mxu0 0
      %1029 = vmatpush1.bf16.msra.mxu0 %v952
      %1030 = vmatprep.subr.bf16.mxu0 0
      %1031 = vmatpush2.bf16.msra.mxu0 0
      %1032 = vmatprep.subr.bf16.mxu0 0
      %1033 = vmatpush2.bf16.msra.mxu0 0
      %1034 = vmatprep.subr.bf16.mxu0 0
      %1035 = vmatpush2.bf16.msra.mxu0 0
      %1036 = vmatprep.subr.bf16.mxu0 0
      %1037 = vmatpush2.bf16.msra.mxu0 0
      %1038 = vmatprep.subr.bf16.mxu0 0
      %1039 = vmatpush2.bf16.msra.mxu0 0
      %1040 = vmatprep.subr.bf16.mxu0 0
      %1041 = vmatpush2.bf16.msra.mxu0 0
      %1042 = vmatprep.subr.bf16.mxu0 0
      %1043 = vmatpush2.bf16.msra.mxu0 0
      %1044 = vmatprep.subr.bf16.mxu0 0
      %1045 = vmatpush2.bf16.msra.mxu0 0
      %1046 = vmatprep.mubr.bf16.mxu0 0
      %1047 = vmatmul.mubr.bf16.gmra.mxu0 %v961
      %v1048 = vpop.f32.mrf.mxu0
      %v1049 = vadd.f32 0.0, %v1048
      %v1050 = vpop.f32.mrf.mxu0
      %v1051 = vpop.f32.mrf.mxu0
      %v1052 = vadd.f32 0.0, %v1051
      %v1053 = vpop.f32.mrf.mxu0
      %1054 = vmatprep.mubr.bf16.mxu0 0
      %1055 = vmatmul.mubr.bf16.gmra.mxu0 %v964
      %v1056 = vpop.f32.mrf.mxu0
      %v1057 = vadd.f32 0.0, %v1056
      %v1058 = vpop.f32.mrf.mxu0
      %v1059 = vpop.f32.mrf.mxu0
      %v1060 = vadd.f32 0.0, %v1059
      %v1061 = vpop.f32.mrf.mxu0
      %1062 = vmatprep.mubr.bf16.mxu0 0
      %1063 = vmatmul.mubr.bf16.gmra.mxu0 %v967
      %v1064 = vpop.f32.mrf.mxu0
      %v1065 = vadd.f32 0.0, %v1064
      %v1066 = vpop.f32.mrf.mxu0
      %v1067 = vpop.f32.mrf.mxu0
      %v1068 = vadd.f32 0.0, %v1067
      %v1069 = vpop.f32.mrf.mxu0
      %1070 = vmatprep.mubr.bf16.mxu0 0
      %1071 = vmatmul.mubr.bf16.gmra.mxu0 %v970
      %v1072 = vpop.f32.mrf.mxu0
      %v1073 = vadd.f32 0.0, %v1072
      %v1074 = vpop.f32.mrf.mxu0
      %v1075 = vpop.f32.mrf.mxu0
      %v1076 = vadd.f32 0.0, %v1075
      %v1077 = vpop.f32.mrf.mxu0
      %1078 = vmatprep.mubr.bf16.mxu0 0
      %1079 = vmatmul.mubr.bf16.gmra.mxu0 %v973
      %v1080 = vpop.f32.mrf.mxu0
      %v1081 = vadd.f32 0.0, %v1080
      %v1082 = vpop.f32.mrf.mxu0
      %v1083 = vpop.f32.mrf.mxu0
      %v1084 = vadd.f32 0.0, %v1083
      %v1085 = vpop.f32.mrf.mxu0
      %1086 = vmatprep.mubr.bf16.mxu0 0
      %1087 = vmatmul.mubr.bf16.gmra.mxu0 %v976
      %v1088 = vpop.f32.mrf.mxu0
      %v1089 = vadd.f32 0.0, %v1088
      %v1090 = vpop.f32.mrf.mxu0
      %v1091 = vpop.f32.mrf.mxu0
      %v1092 = vadd.f32 0.0, %v1091
      %v1093 = vpop.f32.mrf.mxu0
      %1094 = vmatprep.mubr.bf16.mxu0 0
      %1095 = vmatmul.mubr.bf16.gmra.mxu0 %v979
      %v1096 = vpop.f32.mrf.mxu0
      %v1097 = vadd.f32 0.0, %v1096
      %v1098 = vpop.f32.mrf.mxu0
      %v1099 = vpop.f32.mrf.mxu0
      %v1100 = vadd.f32 0.0, %v1099
      %v1101 = vpop.f32.mrf.mxu0
      %1102 = vmatprep.mubr.bf16.mxu0 0
      %1103 = vmatmul.mubr.bf16.gmra.mxu0 %v982
      %v1104 = vpop.f32.mrf.mxu0
      %v1105 = vadd.f32 0.0, %v1104
      %v1106 = vpop.f32.mrf.mxu0
      %v1107 = vpop.f32.mrf.mxu0
      %v1108 = vadd.f32 0.0, %v1107
      %v1109 = vpop.f32.mrf.mxu0
      %1110 = vmatprep.mubr.bf16.mxu0 0
      %1111 = vmatmul.mubr.bf16.gmra.mxu0 %v985
      %v1112 = vpop.f32.mrf.mxu0
      %v1113 = vadd.f32 0.0, %v1112
      %v1114 = vpop.f32.mrf.mxu0
      %v1115 = vpop.f32.mrf.mxu0
      %v1116 = vadd.f32 0.0, %v1115
      %v1117 = vpop.f32.mrf.mxu0
      %1118 = vmatprep.mubr.bf16.mxu0 0
      %1119 = vmatmul.mubr.bf16.gmra.mxu0 %v988
      %v1120 = vpop.f32.mrf.mxu0
      %v1121 = vadd.f32 0.0, %v1120
      %v1122 = vpop.f32.mrf.mxu0
      %v1123 = vpop.f32.mrf.mxu0
      %v1124 = vadd.f32 0.0, %v1123
      %v1125 = vpop.f32.mrf.mxu0
      %1126 = vmatprep.mubr.bf16.mxu0 0
      %1127 = vmatmul.mubr.bf16.gmra.mxu0 %v991
      %v1128 = vpop.f32.mrf.mxu0
      %v1129 = vadd.f32 0.0, %v1128
      %v1130 = vpop.f32.mrf.mxu0
      %v1131 = vpop.f32.mrf.mxu0
      %v1132 = vadd.f32 0.0, %v1131
      %v1133 = vpop.f32.mrf.mxu0
      %1134 = vmatprep.mubr.bf16.mxu0 0
      %1135 = vmatmul.mubr.bf16.gmra.mxu0 %v994
      %v1136 = vpop.f32.mrf.mxu0
      %v1137 = vadd.f32 0.0, %v1136
      %v1138 = vpop.f32.mrf.mxu0
      %v1139 = vpop.f32.mrf.mxu0
      %v1140 = vadd.f32 0.0, %v1139
      %v1141 = vpop.f32.mrf.mxu0
      %1142 = vmatprep.mubr.bf16.mxu0 0
      %1143 = vmatmul.mubr.bf16.gmra.mxu0 %v997
      %v1144 = vpop.f32.mrf.mxu0
      %v1145 = vadd.f32 0.0, %v1144
      %v1146 = vpop.f32.mrf.mxu0
      %v1147 = vpop.f32.mrf.mxu0
      %v1148 = vadd.f32 0.0, %v1147
      %v1149 = vpop.f32.mrf.mxu0
      %1150 = vmatprep.mubr.bf16.mxu0 0
      %1151 = vmatmul.mubr.bf16.gmra.mxu0 %v1000
      %v1152 = vpop.f32.mrf.mxu0
      %v1153 = vadd.f32 0.0, %v1152
      %v1154 = vpop.f32.mrf.mxu0
      %v1155 = vpop.f32.mrf.mxu0
      %v1156 = vadd.f32 0.0, %v1155
      %v1157 = vpop.f32.mrf.mxu0
      %1158 = vmatprep.mubr.bf16.mxu0 0
      %1159 = vmatmul.mubr.bf16.gmra.mxu0 %v1003
      %v1160 = vpop.f32.mrf.mxu0
      %v1161 = vadd.f32 0.0, %v1160
      %v1162 = vpop.f32.mrf.mxu0
      %v1163 = vpop.f32.mrf.mxu0
      %v1164 = vadd.f32 0.0, %v1163
      %v1165 = vpop.f32.mrf.mxu0
      %1166 = vmatprep.mubr.bf16.mxu0 0
      %1167 = vmatmul.mubr.bf16.gmra.mxu0 %v1006
      %v1168 = vpop.f32.mrf.mxu0
      %v1169 = vadd.f32 0.0, %v1168
      %v1170 = vpop.f32.mrf.mxu0
      %v1171 = vpop.f32.mrf.mxu0
      %v1172 = vadd.f32 0.0, %v1171
      %v1173 = vpop.f32.mrf.mxu0
      %1174 = vmatprep.mubr.bf16.mxu0 0
      %1175 = vmatmul.mubr.bf16.gmra.mxu0 %v1009
      %v1176 = vpop.f32.mrf.mxu0
      %v1177 = vadd.f32 0.0, %v1176
      %v1178 = vpop.f32.mrf.mxu0
      %v1179 = vpop.f32.mrf.mxu0
      %v1180 = vadd.f32 0.0, %v1179
      %v1181 = vpop.f32.mrf.mxu0
      %1182 = vmatprep.mubr.bf16.mxu0 0
      %1183 = vmatmul.mubr.bf16.gmra.mxu0 %v1012
      %v1184 = vpop.f32.mrf.mxu0
      %v1185 = vadd.f32 0.0, %v1184
      %v1186 = vpop.f32.mrf.mxu0
      %v1187 = vpop.f32.mrf.mxu0
      %v1188 = vadd.f32 0.0, %v1187
      %v1189 = vpop.f32.mrf.mxu0
      %1190 = vdwg.mxu0
      %v1191 = vadd.f32 %v731, %v1049
      %v1192 = vadd.f32 %v734, %v1052
      %v1193 = vadd.f32 %v739, %v1057
      %v1194 = vadd.f32 %v742, %v1060
      %v1195 = vadd.f32 %v747, %v1065
      %v1196 = vadd.f32 %v750, %v1068
      %v1197 = vadd.f32 %v755, %v1073
      %v1198 = vadd.f32 %v758, %v1076
      %v1199 = vadd.f32 %v763, %v1081
      %v1200 = vadd.f32 %v766, %v1084
      %v1201 = vadd.f32 %v771, %v1089
      %v1202 = vadd.f32 %v774, %v1092
      %v1203 = vadd.f32 %v779, %v1097
      %v1204 = vadd.f32 %v782, %v1100
      %v1205 = vadd.f32 %v787, %v1105
      %v1206 = vadd.f32 %v790, %v1108
      %v1207 = vadd.f32 %v795, %v1113
      %v1208 = vadd.f32 %v798, %v1116
      %v1209 = vadd.f32 %v803, %v1121
      %v1210 = vadd.f32 %v806, %v1124
      %v1211 = vadd.f32 %v811, %v1129
      %v1212 = vadd.f32 %v814, %v1132
      %v1213 = vadd.f32 %v819, %v1137
      %v1214 = vadd.f32 %v822, %v1140
      %v1215 = vadd.f32 %v827, %v1145
      %v1216 = vadd.f32 %v830, %v1148
      %v1217 = vadd.f32 %v835, %v1153
      %v1218 = vadd.f32 %v838, %v1156
      %v1219 = vadd.f32 %v843, %v1161
      %v1220 = vadd.f32 %v846, %v1164
      %v1221 = vadd.f32 %v851, %v1169
      %v1222 = vadd.f32 %v854, %v1172
      %v1223 = vadd.f32 %v859, %v1177
      %v1224 = vadd.f32 %v862, %v1180
      %v1225 = vadd.f32 %v867, %v1185
      %v1226 = vadd.f32 %v870, %v1188
      %v1227 = vld [vmem:[%s226 + $0x12] sm:$0xff]
      %v1228 = vld [vmem:[%s226 + $0x1a] sm:$0xff]
      %v1229 = vld [vmem:[%s226 + $0x22] sm:$0xff]
      %v1230 = vld [vmem:[%s226 + $0x2a] sm:$0xff]
      %v1231 = vld [vmem:[%s226 + $0x32] sm:$0xff]
      %v1232 = vld [vmem:[%s226 + $0x3a] sm:$0xff]
      %v1233 = vld [vmem:[%s226 + $0x42] sm:$0xff]
      %v1234 = vld [vmem:[%s226 + $0x4a] sm:$0xff]
      %v1235 = vld [vmem:[%s226 + $0x52] sm:$0xff]
      %v1236 = vld [vmem:[%s226 + $0x5a] sm:$0xff]
      %v1237 = vld [vmem:[%s226 + $0x62] sm:$0xff]
      %v1238 = vld [vmem:[%s226 + $0x6a] sm:$0xff]
      %v1239 = vld [vmem:[%s226 + $0x72] sm:$0xff]
      %v1240 = vld [vmem:[%s226 + $0x7a] sm:$0xff]
      %v1241 = vld [vmem:[%s226 + $0x82] sm:$0xff]
      %v1242 = vld [vmem:[%s226 + $0x8a] sm:$0xff]
      %v1243 = vld [vmem:[%s226 + $0x92] sm:$0xff]
      %v1244 = vld [vmem:[%s226 + $0x9a] sm:$0xff]
      %v1245 = vld [vmem:[%s226 + $0xa2] sm:$0xff]
      %v1246 = vld [vmem:[%s226 + $0xaa] sm:$0xff]
      %v1247 = vld [vmem:[%s226 + $0xb2] sm:$0xff]
      %v1248 = vld [vmem:[%s226 + $0xba] sm:$0xff]
      %v1249 = vld [vmem:[%s226 + $0xc2] sm:$0xff]
      %v1250 = vld [vmem:[%s226 + $0xca] sm:$0xff]
      %v1251 = vld [vmem:[%s226 + $0xd2] sm:$0xff]
      %v1252 = vld [vmem:[%s226 + $0xda] sm:$0xff]
      %v1253 = vld [vmem:[%s226 + $0xe2] sm:$0xff]
      %v1254 = vld [vmem:[%s226 + $0xea] sm:$0xff]
      %v1255 = vld [vmem:[%s226 + $0xf2] sm:$0xff]
      %v1256 = vld [vmem:[%s226 + $0xfa] sm:$0xff]
      %v1257 = vld [vmem:[%s226 + $0x102] sm:$0xff]
      %v1258 = vld [vmem:[%s226 + $0x10a] sm:$0xff]
      %v1259 = vld [vmem:[%s226 + $0x112] sm:$0xff]
      %v1260 = vld [vmem:[%s226 + $0x11a] sm:$0xff]
      %v1261 = vld [vmem:[%s226 + $0x122] sm:$0xff]
      %v1262 = vld [vmem:[%s226 + $0x12a] sm:$0xff]
      %v1263 = vpack.c.bf16 %v1228, %v1227
      %v1264 = vpack.c.bf16 %v1230, %v1229
      %v1265 = vpack.c.bf16 %v1232, %v1231
      %v1266 = vpack.c.bf16 %v1234, %v1233
      %v1267 = vpack.c.bf16 %v1236, %v1235
      %v1268 = vpack.c.bf16 %v1238, %v1237
      %v1269 = vpack.c.bf16 %v1240, %v1239
      %v1270 = vpack.c.bf16 %v1242, %v1241
      %v1271 = vpack.c.bf16 %v1244, %v1243
      %v1272 = vpack.c.bf16 %v1246, %v1245
      %v1273 = vpack.c.bf16 %v1248, %v1247
      %v1274 = vpack.c.bf16 %v1250, %v1249
      %v1275 = vpack.c.bf16 %v1252, %v1251
      %v1276 = vpack.c.bf16 %v1254, %v1253
      %v1277 = vpack.c.bf16 %v1256, %v1255
      %v1278 = vpack.c.bf16 %v1258, %v1257
      %v1279 = vpack.c.bf16 %v1260, %v1259
      %v1280 = vpack.c.bf16 %v1262, %v1261
      %s1281 = scalar_lea.vmem %s1, 96
      %v1282 = vld [vmem:[%s1281] sm:$0xf]
      %v1283 = vld [vmem:[%s1281 + $0x4] sm:$0xf]
      %v1284 = vld [vmem:[%s1281 + $0x8] sm:$0xf]
      %v1285 = vld [vmem:[%s1281 + $0xc] sm:$0xf]
      %v1286 = vld [vmem:[%s1281 + $0x10] sm:$0xf]
      %v1287 = vld [vmem:[%s1281 + $0x14] sm:$0xf]
      %v1288 = vld [vmem:[%s1281 + $0x18] sm:$0xf]
      %v1289 = vld [vmem:[%s1281 + $0x1c] sm:$0xf]
      %v1298 = vunpack.c.l.b16 %v1282
      %v1299 = vunpack.c.l.b16 %v1283
      %v1300 = vunpack.c.l.b16 %v1284
      %v1301 = vunpack.c.l.b16 %v1285
      %v1302 = vunpack.c.l.b16 %v1286
      %v1303 = vunpack.c.l.b16 %v1287
      %v1304 = vunpack.c.l.b16 %v1288
      %v1305 = vunpack.c.l.b16 %v1289
      %v1306 = vpack.c.b16 %v1299, %v1298
      %v1307 = vpack.c.b16 %v1301, %v1300
      %v1308 = vpack.c.b16 %v1303, %v1302
      %v1309 = vpack.c.b16 %v1305, %v1304
      %v1315 = vsel %vm386, %v1263, 0
      %v1318 = vsel %vm386, %v1264, 0
      %v1321 = vsel %vm386, %v1265, 0
      %v1324 = vsel %vm386, %v1266, 0
      %v1327 = vsel %vm386, %v1267, 0
      %v1330 = vsel %vm386, %v1268, 0
      %v1333 = vsel %vm386, %v1269, 0
      %v1336 = vsel %vm386, %v1270, 0
      %v1339 = vsel %vm386, %v1271, 0
      %v1342 = vsel %vm386, %v1272, 0
      %v1345 = vsel %vm386, %v1273, 0
      %v1348 = vsel %vm386, %v1274, 0
      %v1351 = vsel %vm386, %v1275, 0
      %v1354 = vsel %vm386, %v1276, 0
      %v1357 = vsel %vm386, %v1277, 0
      %v1360 = vsel %vm386, %v1278, 0
      %v1363 = vsel %vm386, %v1279, 0
      %v1366 = vsel %vm386, %v1280, 0
      %1368 = vmatprep.subr.bf16.mxu0 0
      %1369 = vmatpush1.bf16.msra.mxu0 0
      %1370 = vmatprep.subr.bf16.mxu0 0
      %1371 = vmatpush1.bf16.msra.mxu0 0
      %1372 = vmatprep.subr.bf16.mxu0 0
      %1373 = vmatpush1.bf16.msra.mxu0 0
      %1374 = vmatprep.subr.bf16.mxu0 0
      %1375 = vmatpush1.bf16.msra.mxu0 0
      %1376 = vmatprep.subr.bf16.mxu0 0
      %1377 = vmatpush1.bf16.msra.mxu0 %v1309
      %1378 = vmatprep.subr.bf16.mxu0 0
      %1379 = vmatpush1.bf16.msra.mxu0 %v1308
      %1380 = vmatprep.subr.bf16.mxu0 0
      %1381 = vmatpush1.bf16.msra.mxu0 %v1307
      %1382 = vmatprep.subr.bf16.mxu0 0
      %1383 = vmatpush1.bf16.msra.mxu0 %v1306
      %1384 = vmatprep.subr.bf16.mxu0 0
      %1385 = vmatpush2.bf16.msra.mxu0 0
      %1386 = vmatprep.subr.bf16.mxu0 0
      %1387 = vmatpush2.bf16.msra.mxu0 0
      %1388 = vmatprep.subr.bf16.mxu0 0
      %1389 = vmatpush2.bf16.msra.mxu0 0
      %1390 = vmatprep.subr.bf16.mxu0 0
      %1391 = vmatpush2.bf16.msra.mxu0 0
      %1392 = vmatprep.subr.bf16.mxu0 0
      %1393 = vmatpush2.bf16.msra.mxu0 0
      %1394 = vmatprep.subr.bf16.mxu0 0
      %1395 = vmatpush2.bf16.msra.mxu0 0
      %1396 = vmatprep.subr.bf16.mxu0 0
      %1397 = vmatpush2.bf16.msra.mxu0 0
      %1398 = vmatprep.subr.bf16.mxu0 0
      %1399 = vmatpush2.bf16.msra.mxu0 0
      %1400 = vmatprep.mubr.bf16.mxu0 0
      %1401 = vmatmul.mubr.bf16.gmra.mxu0 %v1315
      %v1402 = vpop.f32.mrf.mxu0
      %v1403 = vadd.f32 0.0, %v1402
      %v1404 = vpop.f32.mrf.mxu0
      %v1405 = vpop.f32.mrf.mxu0
      %v1406 = vadd.f32 0.0, %v1405
      %v1407 = vpop.f32.mrf.mxu0
      %1408 = vmatprep.mubr.bf16.mxu0 0
      %1409 = vmatmul.mubr.bf16.gmra.mxu0 %v1318
      %v1410 = vpop.f32.mrf.mxu0
      %v1411 = vadd.f32 0.0, %v1410
      %v1412 = vpop.f32.mrf.mxu0
      %v1413 = vpop.f32.mrf.mxu0
      %v1414 = vadd.f32 0.0, %v1413
      %v1415 = vpop.f32.mrf.mxu0
      %1416 = vmatprep.mubr.bf16.mxu0 0
      %1417 = vmatmul.mubr.bf16.gmra.mxu0 %v1321
      %v1418 = vpop.f32.mrf.mxu0
      %v1419 = vadd.f32 0.0, %v1418
      %v1420 = vpop.f32.mrf.mxu0
      %v1421 = vpop.f32.mrf.mxu0
      %v1422 = vadd.f32 0.0, %v1421
      %v1423 = vpop.f32.mrf.mxu0
      %1424 = vmatprep.mubr.bf16.mxu0 0
      %1425 = vmatmul.mubr.bf16.gmra.mxu0 %v1324
      %v1426 = vpop.f32.mrf.mxu0
      %v1427 = vadd.f32 0.0, %v1426
      %v1428 = vpop.f32.mrf.mxu0
      %v1429 = vpop.f32.mrf.mxu0
      %v1430 = vadd.f32 0.0, %v1429
      %v1431 = vpop.f32.mrf.mxu0
      %1432 = vmatprep.mubr.bf16.mxu0 0
      %1433 = vmatmul.mubr.bf16.gmra.mxu0 %v1327
      %v1434 = vpop.f32.mrf.mxu0
      %v1435 = vadd.f32 0.0, %v1434
      %v1436 = vpop.f32.mrf.mxu0
      %v1437 = vpop.f32.mrf.mxu0
      %v1438 = vadd.f32 0.0, %v1437
      %v1439 = vpop.f32.mrf.mxu0
      %1440 = vmatprep.mubr.bf16.mxu0 0
      %1441 = vmatmul.mubr.bf16.gmra.mxu0 %v1330
      %v1442 = vpop.f32.mrf.mxu0
      %v1443 = vadd.f32 0.0, %v1442
      %v1444 = vpop.f32.mrf.mxu0
      %v1445 = vpop.f32.mrf.mxu0
      %v1446 = vadd.f32 0.0, %v1445
      %v1447 = vpop.f32.mrf.mxu0
      %1448 = vmatprep.mubr.bf16.mxu0 0
      %1449 = vmatmul.mubr.bf16.gmra.mxu0 %v1333
      %v1450 = vpop.f32.mrf.mxu0
      %v1451 = vadd.f32 0.0, %v1450
      %v1452 = vpop.f32.mrf.mxu0
      %v1453 = vpop.f32.mrf.mxu0
      %v1454 = vadd.f32 0.0, %v1453
      %v1455 = vpop.f32.mrf.mxu0
      %1456 = vmatprep.mubr.bf16.mxu0 0
      %1457 = vmatmul.mubr.bf16.gmra.mxu0 %v1336
      %v1458 = vpop.f32.mrf.mxu0
      %v1459 = vadd.f32 0.0, %v1458
      %v1460 = vpop.f32.mrf.mxu0
      %v1461 = vpop.f32.mrf.mxu0
      %v1462 = vadd.f32 0.0, %v1461
      %v1463 = vpop.f32.mrf.mxu0
      %1464 = vmatprep.mubr.bf16.mxu0 0
      %1465 = vmatmul.mubr.bf16.gmra.mxu0 %v1339
      %v1466 = vpop.f32.mrf.mxu0
      %v1467 = vadd.f32 0.0, %v1466
      %v1468 = vpop.f32.mrf.mxu0
      %v1469 = vpop.f32.mrf.mxu0
      %v1470 = vadd.f32 0.0, %v1469
      %v1471 = vpop.f32.mrf.mxu0
      %1472 = vmatprep.mubr.bf16.mxu0 0
      %1473 = vmatmul.mubr.bf16.gmra.mxu0 %v1342
      %v1474 = vpop.f32.mrf.mxu0
      %v1475 = vadd.f32 0.0, %v1474
      %v1476 = vpop.f32.mrf.mxu0
      %v1477 = vpop.f32.mrf.mxu0
      %v1478 = vadd.f32 0.0, %v1477
      %v1479 = vpop.f32.mrf.mxu0
      %1480 = vmatprep.mubr.bf16.mxu0 0
      %1481 = vmatmul.mubr.bf16.gmra.mxu0 %v1345
      %v1482 = vpop.f32.mrf.mxu0
      %v1483 = vadd.f32 0.0, %v1482
      %v1484 = vpop.f32.mrf.mxu0
      %v1485 = vpop.f32.mrf.mxu0
      %v1486 = vadd.f32 0.0, %v1485
      %v1487 = vpop.f32.mrf.mxu0
      %1488 = vmatprep.mubr.bf16.mxu0 0
      %1489 = vmatmul.mubr.bf16.gmra.mxu0 %v1348
      %v1490 = vpop.f32.mrf.mxu0
      %v1491 = vadd.f32 0.0, %v1490
      %v1492 = vpop.f32.mrf.mxu0
      %v1493 = vpop.f32.mrf.mxu0
      %v1494 = vadd.f32 0.0, %v1493
      %v1495 = vpop.f32.mrf.mxu0
      %1496 = vmatprep.mubr.bf16.mxu0 0
      %1497 = vmatmul.mubr.bf16.gmra.mxu0 %v1351
      %v1498 = vpop.f32.mrf.mxu0
      %v1499 = vadd.f32 0.0, %v1498
      %v1500 = vpop.f32.mrf.mxu0
      %v1501 = vpop.f32.mrf.mxu0
      %v1502 = vadd.f32 0.0, %v1501
      %v1503 = vpop.f32.mrf.mxu0
      %1504 = vmatprep.mubr.bf16.mxu0 0
      %1505 = vmatmul.mubr.bf16.gmra.mxu0 %v1354
      %v1506 = vpop.f32.mrf.mxu0
      %v1507 = vadd.f32 0.0, %v1506
      %v1508 = vpop.f32.mrf.mxu0
      %v1509 = vpop.f32.mrf.mxu0
      %v1510 = vadd.f32 0.0, %v1509
      %v1511 = vpop.f32.mrf.mxu0
      %1512 = vmatprep.mubr.bf16.mxu0 0
      %1513 = vmatmul.mubr.bf16.gmra.mxu0 %v1357
      %v1514 = vpop.f32.mrf.mxu0
      %v1515 = vadd.f32 0.0, %v1514
      %v1516 = vpop.f32.mrf.mxu0
      %v1517 = vpop.f32.mrf.mxu0
      %v1518 = vadd.f32 0.0, %v1517
      %v1519 = vpop.f32.mrf.mxu0
      %1520 = vmatprep.mubr.bf16.mxu0 0
      %1521 = vmatmul.mubr.bf16.gmra.mxu0 %v1360
      %v1522 = vpop.f32.mrf.mxu0
      %v1523 = vadd.f32 0.0, %v1522
      %v1524 = vpop.f32.mrf.mxu0
      %v1525 = vpop.f32.mrf.mxu0
      %v1526 = vadd.f32 0.0, %v1525
      %v1527 = vpop.f32.mrf.mxu0
      %1528 = vmatprep.mubr.bf16.mxu0 0
      %1529 = vmatmul.mubr.bf16.gmra.mxu0 %v1363
      %v1530 = vpop.f32.mrf.mxu0
      %v1531 = vadd.f32 0.0, %v1530
      %v1532 = vpop.f32.mrf.mxu0
      %v1533 = vpop.f32.mrf.mxu0
      %v1534 = vadd.f32 0.0, %v1533
      %v1535 = vpop.f32.mrf.mxu0
      %1536 = vmatprep.mubr.bf16.mxu0 0
      %1537 = vmatmul.mubr.bf16.gmra.mxu0 %v1366
      %v1538 = vpop.f32.mrf.mxu0
      %v1539 = vadd.f32 0.0, %v1538
      %v1540 = vpop.f32.mrf.mxu0
      %v1541 = vpop.f32.mrf.mxu0
      %v1542 = vadd.f32 0.0, %v1541
      %v1543 = vpop.f32.mrf.mxu0
      %1544 = vdwg.mxu0
      %v1545 = vadd.f32 %v1191, %v1403
      %v1546 = vadd.f32 %v1192, %v1406
      %v1547 = vadd.f32 %v1193, %v1411
      %v1548 = vadd.f32 %v1194, %v1414
      %v1549 = vadd.f32 %v1195, %v1419
      %v1550 = vadd.f32 %v1196, %v1422
      %v1551 = vadd.f32 %v1197, %v1427
      %v1552 = vadd.f32 %v1198, %v1430
      %v1553 = vadd.f32 %v1199, %v1435
      %v1554 = vadd.f32 %v1200, %v1438
      %v1555 = vadd.f32 %v1201, %v1443
      %v1556 = vadd.f32 %v1202, %v1446
      %v1557 = vadd.f32 %v1203, %v1451
      %v1558 = vadd.f32 %v1204, %v1454
      %v1559 = vadd.f32 %v1205, %v1459
      %v1560 = vadd.f32 %v1206, %v1462
      %v1561 = vadd.f32 %v1207, %v1467
      %v1562 = vadd.f32 %v1208, %v1470
      %v1563 = vadd.f32 %v1209, %v1475
      %v1564 = vadd.f32 %v1210, %v1478
      %v1565 = vadd.f32 %v1211, %v1483
      %v1566 = vadd.f32 %v1212, %v1486
      %v1567 = vadd.f32 %v1213, %v1491
      %v1568 = vadd.f32 %v1214, %v1494
      %v1569 = vadd.f32 %v1215, %v1499
      %v1570 = vadd.f32 %v1216, %v1502
      %v1571 = vadd.f32 %v1217, %v1507
      %v1572 = vadd.f32 %v1218, %v1510
      %v1573 = vadd.f32 %v1219, %v1515
      %v1574 = vadd.f32 %v1220, %v1518
      %v1575 = vadd.f32 %v1221, %v1523
      %v1576 = vadd.f32 %v1222, %v1526
      %v1577 = vadd.f32 %v1223, %v1531
      %v1578 = vadd.f32 %v1224, %v1534
      %v1579 = vadd.f32 %v1225, %v1539
      %v1580 = vadd.f32 %v1226, %v1542
      %v1581 = vld [vmem:[%s226 + $0x13] sm:$0xff]
      %v1582 = vld [vmem:[%s226 + $0x1b] sm:$0xff]
      %v1583 = vld [vmem:[%s226 + $0x23] sm:$0xff]
      %v1584 = vld [vmem:[%s226 + $0x2b] sm:$0xff]
      %v1585 = vld [vmem:[%s226 + $0x33] sm:$0xff]
      %v1586 = vld [vmem:[%s226 + $0x3b] sm:$0xff]
      %v1587 = vld [vmem:[%s226 + $0x43] sm:$0xff]
      %v1588 = vld [vmem:[%s226 + $0x4b] sm:$0xff]
      %v1589 = vld [vmem:[%s226 + $0x53] sm:$0xff]
      %v1590 = vld [vmem:[%s226 + $0x5b] sm:$0xff]
      %v1591 = vld [vmem:[%s226 + $0x63] sm:$0xff]
      %v1592 = vld [vmem:[%s226 + $0x6b] sm:$0xff]
      %v1593 = vld [vmem:[%s226 + $0x73] sm:$0xff]
      %v1594 = vld [vmem:[%s226 + $0x7b] sm:$0xff]
      %v1595 = vld [vmem:[%s226 + $0x83] sm:$0xff]
      %v1596 = vld [vmem:[%s226 + $0x8b] sm:$0xff]
      %v1597 = vld [vmem:[%s226 + $0x93] sm:$0xff]
      %v1598 = vld [vmem:[%s226 + $0x9b] sm:$0xff]
      %v1599 = vld [vmem:[%s226 + $0xa3] sm:$0xff]
      %v1600 = vld [vmem:[%s226 + $0xab] sm:$0xff]
      %v1601 = vld [vmem:[%s226 + $0xb3] sm:$0xff]
      %v1602 = vld [vmem:[%s226 + $0xbb] sm:$0xff]
      %v1603 = vld [vmem:[%s226 + $0xc3] sm:$0xff]
      %v1604 = vld [vmem:[%s226 + $0xcb] sm:$0xff]
      %v1605 = vld [vmem:[%s226 + $0xd3] sm:$0xff]
      %v1606 = vld [vmem:[%s226 + $0xdb] sm:$0xff]
      %v1607 = vld [vmem:[%s226 + $0xe3] sm:$0xff]
      %v1608 = vld [vmem:[%s226 + $0xeb] sm:$0xff]
      %v1609 = vld [vmem:[%s226 + $0xf3] sm:$0xff]
      %v1610 = vld [vmem:[%s226 + $0xfb] sm:$0xff]
      %v1611 = vld [vmem:[%s226 + $0x103] sm:$0xff]
      %v1612 = vld [vmem:[%s226 + $0x10b] sm:$0xff]
      %v1613 = vld [vmem:[%s226 + $0x113] sm:$0xff]
      %v1614 = vld [vmem:[%s226 + $0x11b] sm:$0xff]
      %v1615 = vld [vmem:[%s226 + $0x123] sm:$0xff]
      %v1616 = vld [vmem:[%s226 + $0x12b] sm:$0xff]
      %v1617 = vpack.c.bf16 %v1582, %v1581
      %v1618 = vpack.c.bf16 %v1584, %v1583
      %v1619 = vpack.c.bf16 %v1586, %v1585
      %v1620 = vpack.c.bf16 %v1588, %v1587
      %v1621 = vpack.c.bf16 %v1590, %v1589
      %v1622 = vpack.c.bf16 %v1592, %v1591
      %v1623 = vpack.c.bf16 %v1594, %v1593
      %v1624 = vpack.c.bf16 %v1596, %v1595
      %v1625 = vpack.c.bf16 %v1598, %v1597
      %v1626 = vpack.c.bf16 %v1600, %v1599
      %v1627 = vpack.c.bf16 %v1602, %v1601
      %v1628 = vpack.c.bf16 %v1604, %v1603
      %v1629 = vpack.c.bf16 %v1606, %v1605
      %v1630 = vpack.c.bf16 %v1608, %v1607
      %v1631 = vpack.c.bf16 %v1610, %v1609
      %v1632 = vpack.c.bf16 %v1612, %v1611
      %v1633 = vpack.c.bf16 %v1614, %v1613
      %v1634 = vpack.c.bf16 %v1616, %v1615
      %s1635 = scalar_lea.vmem %s1, 128
      %v1636 = vld [vmem:[%s1635] sm:$0xf]
      %v1637 = vld [vmem:[%s1635 + $0x4] sm:$0xf]
      %v1638 = vld [vmem:[%s1635 + $0x8] sm:$0xf]
      %v1639 = vld [vmem:[%s1635 + $0xc] sm:$0xf]
      %v1640 = vld [vmem:[%s1635 + $0x10] sm:$0xf]
      %v1641 = vld [vmem:[%s1635 + $0x14] sm:$0xf]
      %v1642 = vld [vmem:[%s1635 + $0x18] sm:$0xf]
      %v1643 = vld [vmem:[%s1635 + $0x1c] sm:$0xf]
      %v1652 = vunpack.c.l.b16 %v1636
      %v1653 = vunpack.c.l.b16 %v1637
      %v1654 = vunpack.c.l.b16 %v1638
      %v1655 = vunpack.c.l.b16 %v1639
      %v1656 = vunpack.c.l.b16 %v1640
      %v1657 = vunpack.c.l.b16 %v1641
      %v1658 = vunpack.c.l.b16 %v1642
      %v1659 = vunpack.c.l.b16 %v1643
      %v1660 = vpack.c.b16 %v1653, %v1652
      %v1661 = vpack.c.b16 %v1655, %v1654
      %v1662 = vpack.c.b16 %v1657, %v1656
      %v1663 = vpack.c.b16 %v1659, %v1658
      %v1669 = vsel %vm386, %v1617, 0
      %v1672 = vsel %vm386, %v1618, 0
      %v1675 = vsel %vm386, %v1619, 0
      %v1678 = vsel %vm386, %v1620, 0
      %v1681 = vsel %vm386, %v1621, 0
      %v1684 = vsel %vm386, %v1622, 0
      %v1687 = vsel %vm386, %v1623, 0
      %v1690 = vsel %vm386, %v1624, 0
      %v1693 = vsel %vm386, %v1625, 0
      %v1696 = vsel %vm386, %v1626, 0
      %v1699 = vsel %vm386, %v1627, 0
      %v1702 = vsel %vm386, %v1628, 0
      %v1705 = vsel %vm386, %v1629, 0
      %v1708 = vsel %vm386, %v1630, 0
      %v1711 = vsel %vm386, %v1631, 0
      %v1714 = vsel %vm386, %v1632, 0
      %v1717 = vsel %vm386, %v1633, 0
      %v1720 = vsel %vm386, %v1634, 0
      %1722 = vmatprep.subr.bf16.mxu0 0
      %1723 = vmatpush1.bf16.msra.mxu0 0
      %1724 = vmatprep.subr.bf16.mxu0 0
      %1725 = vmatpush1.bf16.msra.mxu0 0
      %1726 = vmatprep.subr.bf16.mxu0 0
      %1727 = vmatpush1.bf16.msra.mxu0 0
      %1728 = vmatprep.subr.bf16.mxu0 0
      %1729 = vmatpush1.bf16.msra.mxu0 0
      %1730 = vmatprep.subr.bf16.mxu0 0
      %1731 = vmatpush1.bf16.msra.mxu0 %v1663
      %1732 = vmatprep.subr.bf16.mxu0 0
      %1733 = vmatpush1.bf16.msra.mxu0 %v1662
      %1734 = vmatprep.subr.bf16.mxu0 0
      %1735 = vmatpush1.bf16.msra.mxu0 %v1661
      %1736 = vmatprep.subr.bf16.mxu0 0
      %1737 = vmatpush1.bf16.msra.mxu0 %v1660
      %1738 = vmatprep.subr.bf16.mxu0 0
      %1739 = vmatpush2.bf16.msra.mxu0 0
      %1740 = vmatprep.subr.bf16.mxu0 0
      %1741 = vmatpush2.bf16.msra.mxu0 0
      %1742 = vmatprep.subr.bf16.mxu0 0
      %1743 = vmatpush2.bf16.msra.mxu0 0
      %1744 = vmatprep.subr.bf16.mxu0 0
      %1745 = vmatpush2.bf16.msra.mxu0 0
      %1746 = vmatprep.subr.bf16.mxu0 0
      %1747 = vmatpush2.bf16.msra.mxu0 0
      %1748 = vmatprep.subr.bf16.mxu0 0
      %1749 = vmatpush2.bf16.msra.mxu0 0
      %1750 = vmatprep.subr.bf16.mxu0 0
      %1751 = vmatpush2.bf16.msra.mxu0 0
      %1752 = vmatprep.subr.bf16.mxu0 0
      %1753 = vmatpush2.bf16.msra.mxu0 0
      %1754 = vmatprep.mubr.bf16.mxu0 0
      %1755 = vmatmul.mubr.bf16.gmra.mxu0 %v1669
      %v1756 = vpop.f32.mrf.mxu0
      %v1757 = vadd.f32 0.0, %v1756
      %v1758 = vpop.f32.mrf.mxu0
      %v1759 = vpop.f32.mrf.mxu0
      %v1760 = vadd.f32 0.0, %v1759
      %v1761 = vpop.f32.mrf.mxu0
      %1762 = vmatprep.mubr.bf16.mxu0 0
      %1763 = vmatmul.mubr.bf16.gmra.mxu0 %v1672
      %v1764 = vpop.f32.mrf.mxu0
      %v1765 = vadd.f32 0.0, %v1764
      %v1766 = vpop.f32.mrf.mxu0
      %v1767 = vpop.f32.mrf.mxu0
      %v1768 = vadd.f32 0.0, %v1767
      %v1769 = vpop.f32.mrf.mxu0
      %1770 = vmatprep.mubr.bf16.mxu0 0
      %1771 = vmatmul.mubr.bf16.gmra.mxu0 %v1675
      %v1772 = vpop.f32.mrf.mxu0
      %v1773 = vadd.f32 0.0, %v1772
      %v1774 = vpop.f32.mrf.mxu0
      %v1775 = vpop.f32.mrf.mxu0
      %v1776 = vadd.f32 0.0, %v1775
      %v1777 = vpop.f32.mrf.mxu0
      %1778 = vmatprep.mubr.bf16.mxu0 0
      %1779 = vmatmul.mubr.bf16.gmra.mxu0 %v1678
      %v1780 = vpop.f32.mrf.mxu0
      %v1781 = vadd.f32 0.0, %v1780
      %v1782 = vpop.f32.mrf.mxu0
      %v1783 = vpop.f32.mrf.mxu0
      %v1784 = vadd.f32 0.0, %v1783
      %v1785 = vpop.f32.mrf.mxu0
      %1786 = vmatprep.mubr.bf16.mxu0 0
      %1787 = vmatmul.mubr.bf16.gmra.mxu0 %v1681
      %v1788 = vpop.f32.mrf.mxu0
      %v1789 = vadd.f32 0.0, %v1788
      %v1790 = vpop.f32.mrf.mxu0
      %v1791 = vpop.f32.mrf.mxu0
      %v1792 = vadd.f32 0.0, %v1791
      %v1793 = vpop.f32.mrf.mxu0
      %1794 = vmatprep.mubr.bf16.mxu0 0
      %1795 = vmatmul.mubr.bf16.gmra.mxu0 %v1684
      %v1796 = vpop.f32.mrf.mxu0
      %v1797 = vadd.f32 0.0, %v1796
      %v1798 = vpop.f32.mrf.mxu0
      %v1799 = vpop.f32.mrf.mxu0
      %v1800 = vadd.f32 0.0, %v1799
      %v1801 = vpop.f32.mrf.mxu0
      %1802 = vmatprep.mubr.bf16.mxu0 0
      %1803 = vmatmul.mubr.bf16.gmra.mxu0 %v1687
      %v1804 = vpop.f32.mrf.mxu0
      %v1805 = vadd.f32 0.0, %v1804
      %v1806 = vpop.f32.mrf.mxu0
      %v1807 = vpop.f32.mrf.mxu0
      %v1808 = vadd.f32 0.0, %v1807
      %v1809 = vpop.f32.mrf.mxu0
      %1810 = vmatprep.mubr.bf16.mxu0 0
      %1811 = vmatmul.mubr.bf16.gmra.mxu0 %v1690
      %v1812 = vpop.f32.mrf.mxu0
      %v1813 = vadd.f32 0.0, %v1812
      %v1814 = vpop.f32.mrf.mxu0
      %v1815 = vpop.f32.mrf.mxu0
      %v1816 = vadd.f32 0.0, %v1815
      %v1817 = vpop.f32.mrf.mxu0
      %1818 = vmatprep.mubr.bf16.mxu0 0
      %1819 = vmatmul.mubr.bf16.gmra.mxu0 %v1693
      %v1820 = vpop.f32.mrf.mxu0
      %v1821 = vadd.f32 0.0, %v1820
      %v1822 = vpop.f32.mrf.mxu0
      %v1823 = vpop.f32.mrf.mxu0
      %v1824 = vadd.f32 0.0, %v1823
      %v1825 = vpop.f32.mrf.mxu0
      %1826 = vmatprep.mubr.bf16.mxu0 0
      %1827 = vmatmul.mubr.bf16.gmra.mxu0 %v1696
      %v1828 = vpop.f32.mrf.mxu0
      %v1829 = vadd.f32 0.0, %v1828
      %v1830 = vpop.f32.mrf.mxu0
      %v1831 = vpop.f32.mrf.mxu0
      %v1832 = vadd.f32 0.0, %v1831
      %v1833 = vpop.f32.mrf.mxu0
      %1834 = vmatprep.mubr.bf16.mxu0 0
      %1835 = vmatmul.mubr.bf16.gmra.mxu0 %v1699
      %v1836 = vpop.f32.mrf.mxu0
      %v1837 = vadd.f32 0.0, %v1836
      %v1838 = vpop.f32.mrf.mxu0
      %v1839 = vpop.f32.mrf.mxu0
      %v1840 = vadd.f32 0.0, %v1839
      %v1841 = vpop.f32.mrf.mxu0
      %1842 = vmatprep.mubr.bf16.mxu0 0
      %1843 = vmatmul.mubr.bf16.gmra.mxu0 %v1702
      %v1844 = vpop.f32.mrf.mxu0
      %v1845 = vadd.f32 0.0, %v1844
      %v1846 = vpop.f32.mrf.mxu0
      %v1847 = vpop.f32.mrf.mxu0
      %v1848 = vadd.f32 0.0, %v1847
      %v1849 = vpop.f32.mrf.mxu0
      %1850 = vmatprep.mubr.bf16.mxu0 0
      %1851 = vmatmul.mubr.bf16.gmra.mxu0 %v1705
      %v1852 = vpop.f32.mrf.mxu0
      %v1853 = vadd.f32 0.0, %v1852
      %v1854 = vpop.f32.mrf.mxu0
      %v1855 = vpop.f32.mrf.mxu0
      %v1856 = vadd.f32 0.0, %v1855
      %v1857 = vpop.f32.mrf.mxu0
      %1858 = vmatprep.mubr.bf16.mxu0 0
      %1859 = vmatmul.mubr.bf16.gmra.mxu0 %v1708
      %v1860 = vpop.f32.mrf.mxu0
      %v1861 = vadd.f32 0.0, %v1860
      %v1862 = vpop.f32.mrf.mxu0
      %v1863 = vpop.f32.mrf.mxu0
      %v1864 = vadd.f32 0.0, %v1863
      %v1865 = vpop.f32.mrf.mxu0
      %1866 = vmatprep.mubr.bf16.mxu0 0
      %1867 = vmatmul.mubr.bf16.gmra.mxu0 %v1711
      %v1868 = vpop.f32.mrf.mxu0
      %v1869 = vadd.f32 0.0, %v1868
      %v1870 = vpop.f32.mrf.mxu0
      %v1871 = vpop.f32.mrf.mxu0
      %v1872 = vadd.f32 0.0, %v1871
      %v1873 = vpop.f32.mrf.mxu0
      %1874 = vmatprep.mubr.bf16.mxu0 0
      %1875 = vmatmul.mubr.bf16.gmra.mxu0 %v1714
      %v1876 = vpop.f32.mrf.mxu0
      %v1877 = vadd.f32 0.0, %v1876
      %v1878 = vpop.f32.mrf.mxu0
      %v1879 = vpop.f32.mrf.mxu0
      %v1880 = vadd.f32 0.0, %v1879
      %v1881 = vpop.f32.mrf.mxu0
      %1882 = vmatprep.mubr.bf16.mxu0 0
      %1883 = vmatmul.mubr.bf16.gmra.mxu0 %v1717
      %v1884 = vpop.f32.mrf.mxu0
      %v1885 = vadd.f32 0.0, %v1884
      %v1886 = vpop.f32.mrf.mxu0
      %v1887 = vpop.f32.mrf.mxu0
      %v1888 = vadd.f32 0.0, %v1887
      %v1889 = vpop.f32.mrf.mxu0
      %1890 = vmatprep.mubr.bf16.mxu0 0
      %1891 = vmatmul.mubr.bf16.gmra.mxu0 %v1720
      %v1892 = vpop.f32.mrf.mxu0
      %v1893 = vadd.f32 0.0, %v1892
      %v1894 = vpop.f32.mrf.mxu0
      %v1895 = vpop.f32.mrf.mxu0
      %v1896 = vadd.f32 0.0, %v1895
      %v1897 = vpop.f32.mrf.mxu0
      %1898 = vdwg.mxu0
      %v1899 = vadd.f32 %v1545, %v1757
      %v1900 = vadd.f32 %v1546, %v1760
      %v1901 = vadd.f32 %v1547, %v1765
      %v1902 = vadd.f32 %v1548, %v1768
      %v1903 = vadd.f32 %v1549, %v1773
      %v1904 = vadd.f32 %v1550, %v1776
      %v1905 = vadd.f32 %v1551, %v1781
      %v1906 = vadd.f32 %v1552, %v1784
      %v1907 = vadd.f32 %v1553, %v1789
      %v1908 = vadd.f32 %v1554, %v1792
      %v1909 = vadd.f32 %v1555, %v1797
      %v1910 = vadd.f32 %v1556, %v1800
      %v1911 = vadd.f32 %v1557, %v1805
      %v1912 = vadd.f32 %v1558, %v1808
      %v1913 = vadd.f32 %v1559, %v1813
      %v1914 = vadd.f32 %v1560, %v1816
      %v1915 = vadd.f32 %v1561, %v1821
      %v1916 = vadd.f32 %v1562, %v1824
      %v1917 = vadd.f32 %v1563, %v1829
      %v1918 = vadd.f32 %v1564, %v1832
      %v1919 = vadd.f32 %v1565, %v1837
      %v1920 = vadd.f32 %v1566, %v1840
      %v1921 = vadd.f32 %v1567, %v1845
      %v1922 = vadd.f32 %v1568, %v1848
      %v1923 = vadd.f32 %v1569, %v1853
      %v1924 = vadd.f32 %v1570, %v1856
      %v1925 = vadd.f32 %v1571, %v1861
      %v1926 = vadd.f32 %v1572, %v1864
      %v1927 = vadd.f32 %v1573, %v1869
      %v1928 = vadd.f32 %v1574, %v1872
      %v1929 = vadd.f32 %v1575, %v1877
      %v1930 = vadd.f32 %v1576, %v1880
      %v1931 = vadd.f32 %v1577, %v1885
      %v1932 = vadd.f32 %v1578, %v1888
      %v1933 = vadd.f32 %v1579, %v1893
      %v1934 = vadd.f32 %v1580, %v1896
      %v1935 = vld [vmem:[%s226 + $0x14] sm:$0xff]
      %v1936 = vld [vmem:[%s226 + $0x1c] sm:$0xff]
      %v1937 = vld [vmem:[%s226 + $0x24] sm:$0xff]
      %v1938 = vld [vmem:[%s226 + $0x2c] sm:$0xff]
      %v1939 = vld [vmem:[%s226 + $0x34] sm:$0xff]
      %v1940 = vld [vmem:[%s226 + $0x3c] sm:$0xff]
      %v1941 = vld [vmem:[%s226 + $0x44] sm:$0xff]
      %v1942 = vld [vmem:[%s226 + $0x4c] sm:$0xff]
      %v1943 = vld [vmem:[%s226 + $0x54] sm:$0xff]
      %v1944 = vld [vmem:[%s226 + $0x5c] sm:$0xff]
      %v1945 = vld [vmem:[%s226 + $0x64] sm:$0xff]
      %v1946 = vld [vmem:[%s226 + $0x6c] sm:$0xff]
      %v1947 = vld [vmem:[%s226 + $0x74] sm:$0xff]
      %v1948 = vld [vmem:[%s226 + $0x7c] sm:$0xff]
      %v1949 = vld [vmem:[%s226 + $0x84] sm:$0xff]
      %v1950 = vld [vmem:[%s226 + $0x8c] sm:$0xff]
      %v1951 = vld [vmem:[%s226 + $0x94] sm:$0xff]
      %v1952 = vld [vmem:[%s226 + $0x9c] sm:$0xff]
      %v1953 = vld [vmem:[%s226 + $0xa4] sm:$0xff]
      %v1954 = vld [vmem:[%s226 + $0xac] sm:$0xff]
      %v1955 = vld [vmem:[%s226 + $0xb4] sm:$0xff]
      %v1956 = vld [vmem:[%s226 + $0xbc] sm:$0xff]
      %v1957 = vld [vmem:[%s226 + $0xc4] sm:$0xff]
      %v1958 = vld [vmem:[%s226 + $0xcc] sm:$0xff]
      %v1959 = vld [vmem:[%s226 + $0xd4] sm:$0xff]
      %v1960 = vld [vmem:[%s226 + $0xdc] sm:$0xff]
      %v1961 = vld [vmem:[%s226 + $0xe4] sm:$0xff]
      %v1962 = vld [vmem:[%s226 + $0xec] sm:$0xff]
      %v1963 = vld [vmem:[%s226 + $0xf4] sm:$0xff]
      %v1964 = vld [vmem:[%s226 + $0xfc] sm:$0xff]
      %v1965 = vld [vmem:[%s226 + $0x104] sm:$0xff]
      %v1966 = vld [vmem:[%s226 + $0x10c] sm:$0xff]
      %v1967 = vld [vmem:[%s226 + $0x114] sm:$0xff]
      %v1968 = vld [vmem:[%s226 + $0x11c] sm:$0xff]
      %v1969 = vld [vmem:[%s226 + $0x124] sm:$0xff]
      %v1970 = vld [vmem:[%s226 + $0x12c] sm:$0xff]
      %v1971 = vpack.c.bf16 %v1936, %v1935
      %v1972 = vpack.c.bf16 %v1938, %v1937
      %v1973 = vpack.c.bf16 %v1940, %v1939
      %v1974 = vpack.c.bf16 %v1942, %v1941
      %v1975 = vpack.c.bf16 %v1944, %v1943
      %v1976 = vpack.c.bf16 %v1946, %v1945
      %v1977 = vpack.c.bf16 %v1948, %v1947
      %v1978 = vpack.c.bf16 %v1950, %v1949
      %v1979 = vpack.c.bf16 %v1952, %v1951
      %v1980 = vpack.c.bf16 %v1954, %v1953
      %v1981 = vpack.c.bf16 %v1956, %v1955
      %v1982 = vpack.c.bf16 %v1958, %v1957
      %v1983 = vpack.c.bf16 %v1960, %v1959
      %v1984 = vpack.c.bf16 %v1962, %v1961
      %v1985 = vpack.c.bf16 %v1964, %v1963
      %v1986 = vpack.c.bf16 %v1966, %v1965
      %v1987 = vpack.c.bf16 %v1968, %v1967
      %v1988 = vpack.c.bf16 %v1970, %v1969
      %s1989 = scalar_lea.vmem %s1, 160
      %v1990 = vld [vmem:[%s1989] sm:$0xf]
      %v1991 = vld [vmem:[%s1989 + $0x4] sm:$0xf]
      %v1992 = vld [vmem:[%s1989 + $0x8] sm:$0xf]
      %v1993 = vld [vmem:[%s1989 + $0xc] sm:$0xf]
      %v1994 = vld [vmem:[%s1989 + $0x10] sm:$0xf]
      %v1995 = vld [vmem:[%s1989 + $0x14] sm:$0xf]
      %v1996 = vld [vmem:[%s1989 + $0x18] sm:$0xf]
      %v1997 = vld [vmem:[%s1989 + $0x1c] sm:$0xf]
      %v2006 = vunpack.c.l.b16 %v1990
      %v2007 = vunpack.c.l.b16 %v1991
      %v2008 = vunpack.c.l.b16 %v1992
      %v2009 = vunpack.c.l.b16 %v1993
      %v2010 = vunpack.c.l.b16 %v1994
      %v2011 = vunpack.c.l.b16 %v1995
      %v2012 = vunpack.c.l.b16 %v1996
      %v2013 = vunpack.c.l.b16 %v1997
      %v2014 = vpack.c.b16 %v2007, %v2006
      %v2015 = vpack.c.b16 %v2009, %v2008
      %v2016 = vpack.c.b16 %v2011, %v2010
      %v2017 = vpack.c.b16 %v2013, %v2012
      %v2023 = vsel %vm386, %v1971, 0
      %v2026 = vsel %vm386, %v1972, 0
      %v2029 = vsel %vm386, %v1973, 0
      %v2032 = vsel %vm386, %v1974, 0
      %v2035 = vsel %vm386, %v1975, 0
      %v2038 = vsel %vm386, %v1976, 0
      %v2041 = vsel %vm386, %v1977, 0
      %v2044 = vsel %vm386, %v1978, 0
      %v2047 = vsel %vm386, %v1979, 0
      %v2050 = vsel %vm386, %v1980, 0
      %v2053 = vsel %vm386, %v1981, 0
      %v2056 = vsel %vm386, %v1982, 0
      %v2059 = vsel %vm386, %v1983, 0
      %v2062 = vsel %vm386, %v1984, 0
      %v2065 = vsel %vm386, %v1985, 0
      %v2068 = vsel %vm386, %v1986, 0
      %v2071 = vsel %vm386, %v1987, 0
      %v2074 = vsel %vm386, %v1988, 0
      %2076 = vmatprep.subr.bf16.mxu0 0
      %2077 = vmatpush1.bf16.msra.mxu0 0
      %2078 = vmatprep.subr.bf16.mxu0 0
      %2079 = vmatpush1.bf16.msra.mxu0 0
      %2080 = vmatprep.subr.bf16.mxu0 0
      %2081 = vmatpush1.bf16.msra.mxu0 0
      %2082 = vmatprep.subr.bf16.mxu0 0
      %2083 = vmatpush1.bf16.msra.mxu0 0
      %2084 = vmatprep.subr.bf16.mxu0 0
      %2085 = vmatpush1.bf16.msra.mxu0 %v2017
      %2086 = vmatprep.subr.bf16.mxu0 0
      %2087 = vmatpush1.bf16.msra.mxu0 %v2016
      %2088 = vmatprep.subr.bf16.mxu0 0
      %2089 = vmatpush1.bf16.msra.mxu0 %v2015
      %2090 = vmatprep.subr.bf16.mxu0 0
      %2091 = vmatpush1.bf16.msra.mxu0 %v2014
      %2092 = vmatprep.subr.bf16.mxu0 0
      %2093 = vmatpush2.bf16.msra.mxu0 0
      %2094 = vmatprep.subr.bf16.mxu0 0
      %2095 = vmatpush2.bf16.msra.mxu0 0
      %2096 = vmatprep.subr.bf16.mxu0 0
      %2097 = vmatpush2.bf16.msra.mxu0 0
      %2098 = vmatprep.subr.bf16.mxu0 0
      %2099 = vmatpush2.bf16.msra.mxu0 0
      %2100 = vmatprep.subr.bf16.mxu0 0
      %2101 = vmatpush2.bf16.msra.mxu0 0
      %2102 = vmatprep.subr.bf16.mxu0 0
      %2103 = vmatpush2.bf16.msra.mxu0 0
      %2104 = vmatprep.subr.bf16.mxu0 0
      %2105 = vmatpush2.bf16.msra.mxu0 0
      %2106 = vmatprep.subr.bf16.mxu0 0
      %2107 = vmatpush2.bf16.msra.mxu0 0
      %2108 = vmatprep.mubr.bf16.mxu0 0
      %2109 = vmatmul.mubr.bf16.gmra.mxu0 %v2023
      %v2110 = vpop.f32.mrf.mxu0
      %v2111 = vadd.f32 0.0, %v2110
      %v2112 = vpop.f32.mrf.mxu0
      %v2113 = vpop.f32.mrf.mxu0
      %v2114 = vadd.f32 0.0, %v2113
      %v2115 = vpop.f32.mrf.mxu0
      %2116 = vmatprep.mubr.bf16.mxu0 0
      %2117 = vmatmul.mubr.bf16.gmra.mxu0 %v2026
      %v2118 = vpop.f32.mrf.mxu0
      %v2119 = vadd.f32 0.0, %v2118
      %v2120 = vpop.f32.mrf.mxu0
      %v2121 = vpop.f32.mrf.mxu0
      %v2122 = vadd.f32 0.0, %v2121
      %v2123 = vpop.f32.mrf.mxu0
      %2124 = vmatprep.mubr.bf16.mxu0 0
      %2125 = vmatmul.mubr.bf16.gmra.mxu0 %v2029
      %v2126 = vpop.f32.mrf.mxu0
      %v2127 = vadd.f32 0.0, %v2126
      %v2128 = vpop.f32.mrf.mxu0
      %v2129 = vpop.f32.mrf.mxu0
      %v2130 = vadd.f32 0.0, %v2129
      %v2131 = vpop.f32.mrf.mxu0
      %2132 = vmatprep.mubr.bf16.mxu0 0
      %2133 = vmatmul.mubr.bf16.gmra.mxu0 %v2032
      %v2134 = vpop.f32.mrf.mxu0
      %v2135 = vadd.f32 0.0, %v2134
      %v2136 = vpop.f32.mrf.mxu0
      %v2137 = vpop.f32.mrf.mxu0
      %v2138 = vadd.f32 0.0, %v2137
      %v2139 = vpop.f32.mrf.mxu0
      %2140 = vmatprep.mubr.bf16.mxu0 0
      %2141 = vmatmul.mubr.bf16.gmra.mxu0 %v2035
      %v2142 = vpop.f32.mrf.mxu0
      %v2143 = vadd.f32 0.0, %v2142
      %v2144 = vpop.f32.mrf.mxu0
      %v2145 = vpop.f32.mrf.mxu0
      %v2146 = vadd.f32 0.0, %v2145
      %v2147 = vpop.f32.mrf.mxu0
      %2148 = vmatprep.mubr.bf16.mxu0 0
      %2149 = vmatmul.mubr.bf16.gmra.mxu0 %v2038
      %v2150 = vpop.f32.mrf.mxu0
      %v2151 = vadd.f32 0.0, %v2150
      %v2152 = vpop.f32.mrf.mxu0
      %v2153 = vpop.f32.mrf.mxu0
      %v2154 = vadd.f32 0.0, %v2153
      %v2155 = vpop.f32.mrf.mxu0
      %2156 = vmatprep.mubr.bf16.mxu0 0
      %2157 = vmatmul.mubr.bf16.gmra.mxu0 %v2041
      %v2158 = vpop.f32.mrf.mxu0
      %v2159 = vadd.f32 0.0, %v2158
      %v2160 = vpop.f32.mrf.mxu0
      %v2161 = vpop.f32.mrf.mxu0
      %v2162 = vadd.f32 0.0, %v2161
      %v2163 = vpop.f32.mrf.mxu0
      %2164 = vmatprep.mubr.bf16.mxu0 0
      %2165 = vmatmul.mubr.bf16.gmra.mxu0 %v2044
      %v2166 = vpop.f32.mrf.mxu0
      %v2167 = vadd.f32 0.0, %v2166
      %v2168 = vpop.f32.mrf.mxu0
      %v2169 = vpop.f32.mrf.mxu0
      %v2170 = vadd.f32 0.0, %v2169
      %v2171 = vpop.f32.mrf.mxu0
      %2172 = vmatprep.mubr.bf16.mxu0 0
      %2173 = vmatmul.mubr.bf16.gmra.mxu0 %v2047
      %v2174 = vpop.f32.mrf.mxu0
      %v2175 = vadd.f32 0.0, %v2174
      %v2176 = vpop.f32.mrf.mxu0
      %v2177 = vpop.f32.mrf.mxu0
      %v2178 = vadd.f32 0.0, %v2177
      %v2179 = vpop.f32.mrf.mxu0
      %2180 = vmatprep.mubr.bf16.mxu0 0
      %2181 = vmatmul.mubr.bf16.gmra.mxu0 %v2050
      %v2182 = vpop.f32.mrf.mxu0
      %v2183 = vadd.f32 0.0, %v2182
      %v2184 = vpop.f32.mrf.mxu0
      %v2185 = vpop.f32.mrf.mxu0
      %v2186 = vadd.f32 0.0, %v2185
      %v2187 = vpop.f32.mrf.mxu0
      %2188 = vmatprep.mubr.bf16.mxu0 0
      %2189 = vmatmul.mubr.bf16.gmra.mxu0 %v2053
      %v2190 = vpop.f32.mrf.mxu0
      %v2191 = vadd.f32 0.0, %v2190
      %v2192 = vpop.f32.mrf.mxu0
      %v2193 = vpop.f32.mrf.mxu0
      %v2194 = vadd.f32 0.0, %v2193
      %v2195 = vpop.f32.mrf.mxu0
      %2196 = vmatprep.mubr.bf16.mxu0 0
      %2197 = vmatmul.mubr.bf16.gmra.mxu0 %v2056
      %v2198 = vpop.f32.mrf.mxu0
      %v2199 = vadd.f32 0.0, %v2198
      %v2200 = vpop.f32.mrf.mxu0
      %v2201 = vpop.f32.mrf.mxu0
      %v2202 = vadd.f32 0.0, %v2201
      %v2203 = vpop.f32.mrf.mxu0
      %2204 = vmatprep.mubr.bf16.mxu0 0
      %2205 = vmatmul.mubr.bf16.gmra.mxu0 %v2059
      %v2206 = vpop.f32.mrf.mxu0
      %v2207 = vadd.f32 0.0, %v2206
      %v2208 = vpop.f32.mrf.mxu0
      %v2209 = vpop.f32.mrf.mxu0
      %v2210 = vadd.f32 0.0, %v2209
      %v2211 = vpop.f32.mrf.mxu0
      %2212 = vmatprep.mubr.bf16.mxu0 0
      %2213 = vmatmul.mubr.bf16.gmra.mxu0 %v2062
      %v2214 = vpop.f32.mrf.mxu0
      %v2215 = vadd.f32 0.0, %v2214
      %v2216 = vpop.f32.mrf.mxu0
      %v2217 = vpop.f32.mrf.mxu0
      %v2218 = vadd.f32 0.0, %v2217
      %v2219 = vpop.f32.mrf.mxu0
      %2220 = vmatprep.mubr.bf16.mxu0 0
      %2221 = vmatmul.mubr.bf16.gmra.mxu0 %v2065
      %v2222 = vpop.f32.mrf.mxu0
      %v2223 = vadd.f32 0.0, %v2222
      %v2224 = vpop.f32.mrf.mxu0
      %v2225 = vpop.f32.mrf.mxu0
      %v2226 = vadd.f32 0.0, %v2225
      %v2227 = vpop.f32.mrf.mxu0
      %2228 = vmatprep.mubr.bf16.mxu0 0
      %2229 = vmatmul.mubr.bf16.gmra.mxu0 %v2068
      %v2230 = vpop.f32.mrf.mxu0
      %v2231 = vadd.f32 0.0, %v2230
      %v2232 = vpop.f32.mrf.mxu0
      %v2233 = vpop.f32.mrf.mxu0
      %v2234 = vadd.f32 0.0, %v2233
      %v2235 = vpop.f32.mrf.mxu0
      %2236 = vmatprep.mubr.bf16.mxu0 0
      %2237 = vmatmul.mubr.bf16.gmra.mxu0 %v2071
      %v2238 = vpop.f32.mrf.mxu0
      %v2239 = vadd.f32 0.0, %v2238
      %v2240 = vpop.f32.mrf.mxu0
      %v2241 = vpop.f32.mrf.mxu0
      %v2242 = vadd.f32 0.0, %v2241
      %v2243 = vpop.f32.mrf.mxu0
      %2244 = vmatprep.mubr.bf16.mxu0 0
      %2245 = vmatmul.mubr.bf16.gmra.mxu0 %v2074
      %v2246 = vpop.f32.mrf.mxu0
      %v2247 = vadd.f32 0.0, %v2246
      %v2248 = vpop.f32.mrf.mxu0
      %v2249 = vpop.f32.mrf.mxu0
      %v2250 = vadd.f32 0.0, %v2249
      %v2251 = vpop.f32.mrf.mxu0
      %2252 = vdwg.mxu0
      %v2253 = vadd.f32 %v1899, %v2111
      %v2254 = vadd.f32 %v1900, %v2114
      %v2255 = vadd.f32 %v1901, %v2119
      %v2256 = vadd.f32 %v1902, %v2122
      %v2257 = vadd.f32 %v1903, %v2127
      %v2258 = vadd.f32 %v1904, %v2130
      %v2259 = vadd.f32 %v1905, %v2135
      %v2260 = vadd.f32 %v1906, %v2138
      %v2261 = vadd.f32 %v1907, %v2143
      %v2262 = vadd.f32 %v1908, %v2146
      %v2263 = vadd.f32 %v1909, %v2151
      %v2264 = vadd.f32 %v1910, %v2154
      %v2265 = vadd.f32 %v1911, %v2159
      %v2266 = vadd.f32 %v1912, %v2162
      %v2267 = vadd.f32 %v1913, %v2167
      %v2268 = vadd.f32 %v1914, %v2170
      %v2269 = vadd.f32 %v1915, %v2175
      %v2270 = vadd.f32 %v1916, %v2178
      %v2271 = vadd.f32 %v1917, %v2183
      %v2272 = vadd.f32 %v1918, %v2186
      %v2273 = vadd.f32 %v1919, %v2191
      %v2274 = vadd.f32 %v1920, %v2194
      %v2275 = vadd.f32 %v1921, %v2199
      %v2276 = vadd.f32 %v1922, %v2202
      %v2277 = vadd.f32 %v1923, %v2207
      %v2278 = vadd.f32 %v1924, %v2210
      %v2279 = vadd.f32 %v1925, %v2215
      %v2280 = vadd.f32 %v1926, %v2218
      %v2281 = vadd.f32 %v1927, %v2223
      %v2282 = vadd.f32 %v1928, %v2226
      %v2283 = vadd.f32 %v1929, %v2231
      %v2284 = vadd.f32 %v1930, %v2234
      %v2285 = vadd.f32 %v1931, %v2239
      %v2286 = vadd.f32 %v1932, %v2242
      %v2287 = vadd.f32 %v1933, %v2247
      %v2288 = vadd.f32 %v1934, %v2250
      %v2289 = vld [vmem:[%s226 + $0x24] sm:$0xff]
      %v2290 = vld [vmem:[%s226 + $0x2c] sm:$0xff]
      %v2291 = vld [vmem:[%s226 + $0x34] sm:$0xff]
      %v2292 = vld [vmem:[%s226 + $0x3c] sm:$0xff]
      %v2293 = vld [vmem:[%s226 + $0x44] sm:$0xff]
      %v2294 = vld [vmem:[%s226 + $0x4c] sm:$0xff]
      %v2295 = vld [vmem:[%s226 + $0x54] sm:$0xff]
      %v2296 = vld [vmem:[%s226 + $0x5c] sm:$0xff]
      %v2297 = vld [vmem:[%s226 + $0x64] sm:$0xff]
      %v2298 = vld [vmem:[%s226 + $0x6c] sm:$0xff]
      %v2299 = vld [vmem:[%s226 + $0x74] sm:$0xff]
      %v2300 = vld [vmem:[%s226 + $0x7c] sm:$0xff]
      %v2301 = vld [vmem:[%s226 + $0x84] sm:$0xff]
      %v2302 = vld [vmem:[%s226 + $0x8c] sm:$0xff]
      %v2303 = vld [vmem:[%s226 + $0x94] sm:$0xff]
      %v2304 = vld [vmem:[%s226 + $0x9c] sm:$0xff]
      %v2305 = vld [vmem:[%s226 + $0xa4] sm:$0xff]
      %v2306 = vld [vmem:[%s226 + $0xac] sm:$0xff]
      %v2307 = vld [vmem:[%s226 + $0xb4] sm:$0xff]
      %v2308 = vld [vmem:[%s226 + $0xbc] sm:$0xff]
      %v2309 = vld [vmem:[%s226 + $0xc4] sm:$0xff]
      %v2310 = vld [vmem:[%s226 + $0xcc] sm:$0xff]
      %v2311 = vld [vmem:[%s226 + $0xd4] sm:$0xff]
      %v2312 = vld [vmem:[%s226 + $0xdc] sm:$0xff]
      %v2313 = vld [vmem:[%s226 + $0xe4] sm:$0xff]
      %v2314 = vld [vmem:[%s226 + $0xec] sm:$0xff]
      %v2315 = vld [vmem:[%s226 + $0xf4] sm:$0xff]
      %v2316 = vld [vmem:[%s226 + $0xfc] sm:$0xff]
      %v2317 = vld [vmem:[%s226 + $0x104] sm:$0xff]
      %v2318 = vld [vmem:[%s226 + $0x10c] sm:$0xff]
      %v2319 = vld [vmem:[%s226 + $0x114] sm:$0xff]
      %v2320 = vld [vmem:[%s226 + $0x11c] sm:$0xff]
      %v2321 = vld [vmem:[%s226 + $0x124] sm:$0xff]
      %v2322 = vld [vmem:[%s226 + $0x12c] sm:$0xff]
      %v2323 = vld [vmem:[%s226 + $0x134] sm:$0xff]
      %v2324 = vld [vmem:[%s226 + $0x13c] sm:$0xff]
      %v2325 = vpack.c.bf16 %v2290, %v2289
      %v2326 = vpack.c.bf16 %v2292, %v2291
      %v2327 = vpack.c.bf16 %v2294, %v2293
      %v2328 = vpack.c.bf16 %v2296, %v2295
      %v2329 = vpack.c.bf16 %v2298, %v2297
      %v2330 = vpack.c.bf16 %v2300, %v2299
      %v2331 = vpack.c.bf16 %v2302, %v2301
      %v2332 = vpack.c.bf16 %v2304, %v2303
      %v2333 = vpack.c.bf16 %v2306, %v2305
      %v2334 = vpack.c.bf16 %v2308, %v2307
      %v2335 = vpack.c.bf16 %v2310, %v2309
      %v2336 = vpack.c.bf16 %v2312, %v2311
      %v2337 = vpack.c.bf16 %v2314, %v2313
      %v2338 = vpack.c.bf16 %v2316, %v2315
      %v2339 = vpack.c.bf16 %v2318, %v2317
      %v2340 = vpack.c.bf16 %v2320, %v2319
      %v2341 = vpack.c.bf16 %v2322, %v2321
      %v2342 = vpack.c.bf16 %v2324, %v2323
      %s2343 = scalar_lea.vmem %s1, 192
      %v2344 = vld [vmem:[%s2343] sm:$0xf]
      %v2345 = vld [vmem:[%s2343 + $0x4] sm:$0xf]
      %v2346 = vld [vmem:[%s2343 + $0x8] sm:$0xf]
      %v2347 = vld [vmem:[%s2343 + $0xc] sm:$0xf]
      %v2348 = vld [vmem:[%s2343 + $0x10] sm:$0xf]
      %v2349 = vld [vmem:[%s2343 + $0x14] sm:$0xf]
      %v2350 = vld [vmem:[%s2343 + $0x18] sm:$0xf]
      %v2351 = vld [vmem:[%s2343 + $0x1c] sm:$0xf]
      %v2360 = vunpack.c.l.b16 %v2344
      %v2361 = vunpack.c.l.b16 %v2345
      %v2362 = vunpack.c.l.b16 %v2346
      %v2363 = vunpack.c.l.b16 %v2347
      %v2364 = vunpack.c.l.b16 %v2348
      %v2365 = vunpack.c.l.b16 %v2349
      %v2366 = vunpack.c.l.b16 %v2350
      %v2367 = vunpack.c.l.b16 %v2351
      %v2368 = vpack.c.b16 %v2361, %v2360
      %v2369 = vpack.c.b16 %v2363, %v2362
      %v2370 = vpack.c.b16 %v2365, %v2364
      %v2371 = vpack.c.b16 %v2367, %v2366
      %v2377 = vsel %vm386, %v2325, 0
      %v2380 = vsel %vm386, %v2326, 0
      %v2383 = vsel %vm386, %v2327, 0
      %v2386 = vsel %vm386, %v2328, 0
      %v2389 = vsel %vm386, %v2329, 0
      %v2392 = vsel %vm386, %v2330, 0
      %v2395 = vsel %vm386, %v2331, 0
      %v2398 = vsel %vm386, %v2332, 0
      %v2401 = vsel %vm386, %v2333, 0
      %v2404 = vsel %vm386, %v2334, 0
      %v2407 = vsel %vm386, %v2335, 0
      %v2410 = vsel %vm386, %v2336, 0
      %v2413 = vsel %vm386, %v2337, 0
      %v2416 = vsel %vm386, %v2338, 0
      %v2419 = vsel %vm386, %v2339, 0
      %v2422 = vsel %vm386, %v2340, 0
      %v2425 = vsel %vm386, %v2341, 0
      %v2428 = vsel %vm386, %v2342, 0
      %2430 = vmatprep.subr.bf16.mxu0 0
      %2431 = vmatpush1.bf16.msra.mxu0 0
      %2432 = vmatprep.subr.bf16.mxu0 0
      %2433 = vmatpush1.bf16.msra.mxu0 0
      %2434 = vmatprep.subr.bf16.mxu0 0
      %2435 = vmatpush1.bf16.msra.mxu0 0
      %2436 = vmatprep.subr.bf16.mxu0 0
      %2437 = vmatpush1.bf16.msra.mxu0 0
      %2438 = vmatprep.subr.bf16.mxu0 0
      %2439 = vmatpush1.bf16.msra.mxu0 %v2371
      %2440 = vmatprep.subr.bf16.mxu0 0
      %2441 = vmatpush1.bf16.msra.mxu0 %v2370
      %2442 = vmatprep.subr.bf16.mxu0 0
      %2443 = vmatpush1.bf16.msra.mxu0 %v2369
      %2444 = vmatprep.subr.bf16.mxu0 0
      %2445 = vmatpush1.bf16.msra.mxu0 %v2368
      %2446 = vmatprep.subr.bf16.mxu0 0
      %2447 = vmatpush2.bf16.msra.mxu0 0
      %2448 = vmatprep.subr.bf16.mxu0 0
      %2449 = vmatpush2.bf16.msra.mxu0 0
      %2450 = vmatprep.subr.bf16.mxu0 0
      %2451 = vmatpush2.bf16.msra.mxu0 0
      %2452 = vmatprep.subr.bf16.mxu0 0
      %2453 = vmatpush2.bf16.msra.mxu0 0
      %2454 = vmatprep.subr.bf16.mxu0 0
      %2455 = vmatpush2.bf16.msra.mxu0 0
      %2456 = vmatprep.subr.bf16.mxu0 0
      %2457 = vmatpush2.bf16.msra.mxu0 0
      %2458 = vmatprep.subr.bf16.mxu0 0
      %2459 = vmatpush2.bf16.msra.mxu0 0
      %2460 = vmatprep.subr.bf16.mxu0 0
      %2461 = vmatpush2.bf16.msra.mxu0 0
      %2462 = vmatprep.mubr.bf16.mxu0 0
      %2463 = vmatmul.mubr.bf16.gmra.mxu0 %v2377
      %v2464 = vpop.f32.mrf.mxu0
      %v2465 = vadd.f32 0.0, %v2464
      %v2466 = vpop.f32.mrf.mxu0
      %v2467 = vpop.f32.mrf.mxu0
      %v2468 = vadd.f32 0.0, %v2467
      %v2469 = vpop.f32.mrf.mxu0
      %2470 = vmatprep.mubr.bf16.mxu0 0
      %2471 = vmatmul.mubr.bf16.gmra.mxu0 %v2380
      %v2472 = vpop.f32.mrf.mxu0
      %v2473 = vadd.f32 0.0, %v2472
      %v2474 = vpop.f32.mrf.mxu0
      %v2475 = vpop.f32.mrf.mxu0
      %v2476 = vadd.f32 0.0, %v2475
      %v2477 = vpop.f32.mrf.mxu0
      %2478 = vmatprep.mubr.bf16.mxu0 0
      %2479 = vmatmul.mubr.bf16.gmra.mxu0 %v2383
      %v2480 = vpop.f32.mrf.mxu0
      %v2481 = vadd.f32 0.0, %v2480
      %v2482 = vpop.f32.mrf.mxu0
      %v2483 = vpop.f32.mrf.mxu0
      %v2484 = vadd.f32 0.0, %v2483
      %v2485 = vpop.f32.mrf.mxu0
      %2486 = vmatprep.mubr.bf16.mxu0 0
      %2487 = vmatmul.mubr.bf16.gmra.mxu0 %v2386
      %v2488 = vpop.f32.mrf.mxu0
      %v2489 = vadd.f32 0.0, %v2488
      %v2490 = vpop.f32.mrf.mxu0
      %v2491 = vpop.f32.mrf.mxu0
      %v2492 = vadd.f32 0.0, %v2491
      %v2493 = vpop.f32.mrf.mxu0
      %2494 = vmatprep.mubr.bf16.mxu0 0
      %2495 = vmatmul.mubr.bf16.gmra.mxu0 %v2389
      %v2496 = vpop.f32.mrf.mxu0
      %v2497 = vadd.f32 0.0, %v2496
      %v2498 = vpop.f32.mrf.mxu0
      %v2499 = vpop.f32.mrf.mxu0
      %v2500 = vadd.f32 0.0, %v2499
      %v2501 = vpop.f32.mrf.mxu0
      %2502 = vmatprep.mubr.bf16.mxu0 0
      %2503 = vmatmul.mubr.bf16.gmra.mxu0 %v2392
      %v2504 = vpop.f32.mrf.mxu0
      %v2505 = vadd.f32 0.0, %v2504
      %v2506 = vpop.f32.mrf.mxu0
      %v2507 = vpop.f32.mrf.mxu0
      %v2508 = vadd.f32 0.0, %v2507
      %v2509 = vpop.f32.mrf.mxu0
      %2510 = vmatprep.mubr.bf16.mxu0 0
      %2511 = vmatmul.mubr.bf16.gmra.mxu0 %v2395
      %v2512 = vpop.f32.mrf.mxu0
      %v2513 = vadd.f32 0.0, %v2512
      %v2514 = vpop.f32.mrf.mxu0
      %v2515 = vpop.f32.mrf.mxu0
      %v2516 = vadd.f32 0.0, %v2515
      %v2517 = vpop.f32.mrf.mxu0
      %2518 = vmatprep.mubr.bf16.mxu0 0
      %2519 = vmatmul.mubr.bf16.gmra.mxu0 %v2398
      %v2520 = vpop.f32.mrf.mxu0
      %v2521 = vadd.f32 0.0, %v2520
      %v2522 = vpop.f32.mrf.mxu0
      %v2523 = vpop.f32.mrf.mxu0
      %v2524 = vadd.f32 0.0, %v2523
      %v2525 = vpop.f32.mrf.mxu0
      %2526 = vmatprep.mubr.bf16.mxu0 0
      %2527 = vmatmul.mubr.bf16.gmra.mxu0 %v2401
      %v2528 = vpop.f32.mrf.mxu0
      %v2529 = vadd.f32 0.0, %v2528
      %v2530 = vpop.f32.mrf.mxu0
      %v2531 = vpop.f32.mrf.mxu0
      %v2532 = vadd.f32 0.0, %v2531
      %v2533 = vpop.f32.mrf.mxu0
      %2534 = vmatprep.mubr.bf16.mxu0 0
      %2535 = vmatmul.mubr.bf16.gmra.mxu0 %v2404
      %v2536 = vpop.f32.mrf.mxu0
      %v2537 = vadd.f32 0.0, %v2536
      %v2538 = vpop.f32.mrf.mxu0
      %v2539 = vpop.f32.mrf.mxu0
      %v2540 = vadd.f32 0.0, %v2539
      %v2541 = vpop.f32.mrf.mxu0
      %2542 = vmatprep.mubr.bf16.mxu0 0
      %2543 = vmatmul.mubr.bf16.gmra.mxu0 %v2407
      %v2544 = vpop.f32.mrf.mxu0
      %v2545 = vadd.f32 0.0, %v2544
      %v2546 = vpop.f32.mrf.mxu0
      %v2547 = vpop.f32.mrf.mxu0
      %v2548 = vadd.f32 0.0, %v2547
      %v2549 = vpop.f32.mrf.mxu0
      %2550 = vmatprep.mubr.bf16.mxu0 0
      %2551 = vmatmul.mubr.bf16.gmra.mxu0 %v2410
      %v2552 = vpop.f32.mrf.mxu0
      %v2553 = vadd.f32 0.0, %v2552
      %v2554 = vpop.f32.mrf.mxu0
      %v2555 = vpop.f32.mrf.mxu0
      %v2556 = vadd.f32 0.0, %v2555
      %v2557 = vpop.f32.mrf.mxu0
      %2558 = vmatprep.mubr.bf16.mxu0 0
      %2559 = vmatmul.mubr.bf16.gmra.mxu0 %v2413
      %v2560 = vpop.f32.mrf.mxu0
      %v2561 = vadd.f32 0.0, %v2560
      %v2562 = vpop.f32.mrf.mxu0
      %v2563 = vpop.f32.mrf.mxu0
      %v2564 = vadd.f32 0.0, %v2563
      %v2565 = vpop.f32.mrf.mxu0
      %2566 = vmatprep.mubr.bf16.mxu0 0
      %2567 = vmatmul.mubr.bf16.gmra.mxu0 %v2416
      %v2568 = vpop.f32.mrf.mxu0
      %v2569 = vadd.f32 0.0, %v2568
      %v2570 = vpop.f32.mrf.mxu0
      %v2571 = vpop.f32.mrf.mxu0
      %v2572 = vadd.f32 0.0, %v2571
      %v2573 = vpop.f32.mrf.mxu0
      %2574 = vmatprep.mubr.bf16.mxu0 0
      %2575 = vmatmul.mubr.bf16.gmra.mxu0 %v2419
      %v2576 = vpop.f32.mrf.mxu0
      %v2577 = vadd.f32 0.0, %v2576
      %v2578 = vpop.f32.mrf.mxu0
      %v2579 = vpop.f32.mrf.mxu0
      %v2580 = vadd.f32 0.0, %v2579
      %v2581 = vpop.f32.mrf.mxu0
      %2582 = vmatprep.mubr.bf16.mxu0 0
      %2583 = vmatmul.mubr.bf16.gmra.mxu0 %v2422
      %v2584 = vpop.f32.mrf.mxu0
      %v2585 = vadd.f32 0.0, %v2584
      %v2586 = vpop.f32.mrf.mxu0
      %v2587 = vpop.f32.mrf.mxu0
      %v2588 = vadd.f32 0.0, %v2587
      %v2589 = vpop.f32.mrf.mxu0
      %2590 = vmatprep.mubr.bf16.mxu0 0
      %2591 = vmatmul.mubr.bf16.gmra.mxu0 %v2425
      %v2592 = vpop.f32.mrf.mxu0
      %v2593 = vadd.f32 0.0, %v2592
      %v2594 = vpop.f32.mrf.mxu0
      %v2595 = vpop.f32.mrf.mxu0
      %v2596 = vadd.f32 0.0, %v2595
      %v2597 = vpop.f32.mrf.mxu0
      %2598 = vmatprep.mubr.bf16.mxu0 0
      %2599 = vmatmul.mubr.bf16.gmra.mxu0 %v2428
      %v2600 = vpop.f32.mrf.mxu0
      %v2601 = vadd.f32 0.0, %v2600
      %v2602 = vpop.f32.mrf.mxu0
      %v2603 = vpop.f32.mrf.mxu0
      %v2604 = vadd.f32 0.0, %v2603
      %v2605 = vpop.f32.mrf.mxu0
      %2606 = vdwg.mxu0
      %v2607 = vadd.f32 %v2253, %v2465
      %v2608 = vadd.f32 %v2254, %v2468
      %v2609 = vadd.f32 %v2255, %v2473
      %v2610 = vadd.f32 %v2256, %v2476
      %v2611 = vadd.f32 %v2257, %v2481
      %v2612 = vadd.f32 %v2258, %v2484
      %v2613 = vadd.f32 %v2259, %v2489
      %v2614 = vadd.f32 %v2260, %v2492
      %v2615 = vadd.f32 %v2261, %v2497
      %v2616 = vadd.f32 %v2262, %v2500
      %v2617 = vadd.f32 %v2263, %v2505
      %v2618 = vadd.f32 %v2264, %v2508
      %v2619 = vadd.f32 %v2265, %v2513
      %v2620 = vadd.f32 %v2266, %v2516
      %v2621 = vadd.f32 %v2267, %v2521
      %v2622 = vadd.f32 %v2268, %v2524
      %v2623 = vadd.f32 %v2269, %v2529
      %v2624 = vadd.f32 %v2270, %v2532
      %v2625 = vadd.f32 %v2271, %v2537
      %v2626 = vadd.f32 %v2272, %v2540
      %v2627 = vadd.f32 %v2273, %v2545
      %v2628 = vadd.f32 %v2274, %v2548
      %v2629 = vadd.f32 %v2275, %v2553
      %v2630 = vadd.f32 %v2276, %v2556
      %v2631 = vadd.f32 %v2277, %v2561
      %v2632 = vadd.f32 %v2278, %v2564
      %v2633 = vadd.f32 %v2279, %v2569
      %v2634 = vadd.f32 %v2280, %v2572
      %v2635 = vadd.f32 %v2281, %v2577
      %v2636 = vadd.f32 %v2282, %v2580
      %v2637 = vadd.f32 %v2283, %v2585
      %v2638 = vadd.f32 %v2284, %v2588
      %v2639 = vadd.f32 %v2285, %v2593
      %v2640 = vadd.f32 %v2286, %v2596
      %v2641 = vadd.f32 %v2287, %v2601
      %v2642 = vadd.f32 %v2288, %v2604
      %v2643 = vld [vmem:[%s226 + $0x25] sm:$0xff]
      %v2644 = vld [vmem:[%s226 + $0x2d] sm:$0xff]
      %v2645 = vld [vmem:[%s226 + $0x35] sm:$0xff]
      %v2646 = vld [vmem:[%s226 + $0x3d] sm:$0xff]
      %v2647 = vld [vmem:[%s226 + $0x45] sm:$0xff]
      %v2648 = vld [vmem:[%s226 + $0x4d] sm:$0xff]
      %v2649 = vld [vmem:[%s226 + $0x55] sm:$0xff]
      %v2650 = vld [vmem:[%s226 + $0x5d] sm:$0xff]
      %v2651 = vld [vmem:[%s226 + $0x65] sm:$0xff]
      %v2652 = vld [vmem:[%s226 + $0x6d] sm:$0xff]
      %v2653 = vld [vmem:[%s226 + $0x75] sm:$0xff]
      %v2654 = vld [vmem:[%s226 + $0x7d] sm:$0xff]
      %v2655 = vld [vmem:[%s226 + $0x85] sm:$0xff]
      %v2656 = vld [vmem:[%s226 + $0x8d] sm:$0xff]
      %v2657 = vld [vmem:[%s226 + $0x95] sm:$0xff]
      %v2658 = vld [vmem:[%s226 + $0x9d] sm:$0xff]
      %v2659 = vld [vmem:[%s226 + $0xa5] sm:$0xff]
      %v2660 = vld [vmem:[%s226 + $0xad] sm:$0xff]
      %v2661 = vld [vmem:[%s226 + $0xb5] sm:$0xff]
      %v2662 = vld [vmem:[%s226 + $0xbd] sm:$0xff]
      %v2663 = vld [vmem:[%s226 + $0xc5] sm:$0xff]
      %v2664 = vld [vmem:[%s226 + $0xcd] sm:$0xff]
      %v2665 = vld [vmem:[%s226 + $0xd5] sm:$0xff]
      %v2666 = vld [vmem:[%s226 + $0xdd] sm:$0xff]
      %v2667 = vld [vmem:[%s226 + $0xe5] sm:$0xff]
      %v2668 = vld [vmem:[%s226 + $0xed] sm:$0xff]
      %v2669 = vld [vmem:[%s226 + $0xf5] sm:$0xff]
      %v2670 = vld [vmem:[%s226 + $0xfd] sm:$0xff]
      %v2671 = vld [vmem:[%s226 + $0x105] sm:$0xff]
      %v2672 = vld [vmem:[%s226 + $0x10d] sm:$0xff]
      %v2673 = vld [vmem:[%s226 + $0x115] sm:$0xff]
      %v2674 = vld [vmem:[%s226 + $0x11d] sm:$0xff]
      %v2675 = vld [vmem:[%s226 + $0x125] sm:$0xff]
      %v2676 = vld [vmem:[%s226 + $0x12d] sm:$0xff]
      %v2677 = vld [vmem:[%s226 + $0x135] sm:$0xff]
      %v2678 = vld [vmem:[%s226 + $0x13d] sm:$0xff]
      %v2679 = vpack.c.bf16 %v2644, %v2643
      %v2680 = vpack.c.bf16 %v2646, %v2645
      %v2681 = vpack.c.bf16 %v2648, %v2647
      %v2682 = vpack.c.bf16 %v2650, %v2649
      %v2683 = vpack.c.bf16 %v2652, %v2651
      %v2684 = vpack.c.bf16 %v2654, %v2653
      %v2685 = vpack.c.bf16 %v2656, %v2655
      %v2686 = vpack.c.bf16 %v2658, %v2657
      %v2687 = vpack.c.bf16 %v2660, %v2659
      %v2688 = vpack.c.bf16 %v2662, %v2661
      %v2689 = vpack.c.bf16 %v2664, %v2663
      %v2690 = vpack.c.bf16 %v2666, %v2665
      %v2691 = vpack.c.bf16 %v2668, %v2667
      %v2692 = vpack.c.bf16 %v2670, %v2669
      %v2693 = vpack.c.bf16 %v2672, %v2671
      %v2694 = vpack.c.bf16 %v2674, %v2673
      %v2695 = vpack.c.bf16 %v2676, %v2675
      %v2696 = vpack.c.bf16 %v2678, %v2677
      %s2697 = scalar_lea.vmem %s1, 224
      %v2698 = vld [vmem:[%s2697] sm:$0xf]
      %v2699 = vld [vmem:[%s2697 + $0x4] sm:$0xf]
      %v2700 = vld [vmem:[%s2697 + $0x8] sm:$0xf]
      %v2701 = vld [vmem:[%s2697 + $0xc] sm:$0xf]
      %v2702 = vld [vmem:[%s2697 + $0x10] sm:$0xf]
      %v2703 = vld [vmem:[%s2697 + $0x14] sm:$0xf]
      %v2704 = vld [vmem:[%s2697 + $0x18] sm:$0xf]
      %v2705 = vld [vmem:[%s2697 + $0x1c] sm:$0xf]
      %v2714 = vunpack.c.l.b16 %v2698
      %v2715 = vunpack.c.l.b16 %v2699
      %v2716 = vunpack.c.l.b16 %v2700
      %v2717 = vunpack.c.l.b16 %v2701
      %v2718 = vunpack.c.l.b16 %v2702
      %v2719 = vunpack.c.l.b16 %v2703
      %v2720 = vunpack.c.l.b16 %v2704
      %v2721 = vunpack.c.l.b16 %v2705
      %v2722 = vpack.c.b16 %v2715, %v2714
      %v2723 = vpack.c.b16 %v2717, %v2716
      %v2724 = vpack.c.b16 %v2719, %v2718
      %v2725 = vpack.c.b16 %v2721, %v2720
      %v2731 = vsel %vm386, %v2679, 0
      %v2734 = vsel %vm386, %v2680, 0
      %v2737 = vsel %vm386, %v2681, 0
      %v2740 = vsel %vm386, %v2682, 0
      %v2743 = vsel %vm386, %v2683, 0
      %v2746 = vsel %vm386, %v2684, 0
      %v2749 = vsel %vm386, %v2685, 0
      %v2752 = vsel %vm386, %v2686, 0
      %v2755 = vsel %vm386, %v2687, 0
      %v2758 = vsel %vm386, %v2688, 0
      %v2761 = vsel %vm386, %v2689, 0
      %v2764 = vsel %vm386, %v2690, 0
      %v2767 = vsel %vm386, %v2691, 0
      %v2770 = vsel %vm386, %v2692, 0
      %v2773 = vsel %vm386, %v2693, 0
      %v2776 = vsel %vm386, %v2694, 0
      %v2779 = vsel %vm386, %v2695, 0
      %v2782 = vsel %vm386, %v2696, 0
      %2784 = vmatprep.subr.bf16.mxu0 0
      %2785 = vmatpush1.bf16.msra.mxu0 0
      %2786 = vmatprep.subr.bf16.mxu0 0
      %2787 = vmatpush1.bf16.msra.mxu0 0
      %2788 = vmatprep.subr.bf16.mxu0 0
      %2789 = vmatpush1.bf16.msra.mxu0 0
      %2790 = vmatprep.subr.bf16.mxu0 0
      %2791 = vmatpush1.bf16.msra.mxu0 0
      %2792 = vmatprep.subr.bf16.mxu0 0
      %2793 = vmatpush1.bf16.msra.mxu0 %v2725
      %2794 = vmatprep.subr.bf16.mxu0 0
      %2795 = vmatpush1.bf16.msra.mxu0 %v2724
      %2796 = vmatprep.subr.bf16.mxu0 0
      %2797 = vmatpush1.bf16.msra.mxu0 %v2723
      %2798 = vmatprep.subr.bf16.mxu0 0
      %2799 = vmatpush1.bf16.msra.mxu0 %v2722
      %2800 = vmatprep.subr.bf16.mxu0 0
      %2801 = vmatpush2.bf16.msra.mxu0 0
      %2802 = vmatprep.subr.bf16.mxu0 0
      %2803 = vmatpush2.bf16.msra.mxu0 0
      %2804 = vmatprep.subr.bf16.mxu0 0
      %2805 = vmatpush2.bf16.msra.mxu0 0
      %2806 = vmatprep.subr.bf16.mxu0 0
      %2807 = vmatpush2.bf16.msra.mxu0 0
      %2808 = vmatprep.subr.bf16.mxu0 0
      %2809 = vmatpush2.bf16.msra.mxu0 0
      %2810 = vmatprep.subr.bf16.mxu0 0
      %2811 = vmatpush2.bf16.msra.mxu0 0
      %2812 = vmatprep.subr.bf16.mxu0 0
      %2813 = vmatpush2.bf16.msra.mxu0 0
      %2814 = vmatprep.subr.bf16.mxu0 0
      %2815 = vmatpush2.bf16.msra.mxu0 0
      %2816 = vmatprep.mubr.bf16.mxu0 0
      %2817 = vmatmul.mubr.bf16.gmra.mxu0 %v2731
      %v2818 = vpop.f32.mrf.mxu0
      %v2819 = vadd.f32 0.0, %v2818
      %v2820 = vpop.f32.mrf.mxu0
      %v2821 = vpop.f32.mrf.mxu0
      %v2822 = vadd.f32 0.0, %v2821
      %v2823 = vpop.f32.mrf.mxu0
      %2824 = vmatprep.mubr.bf16.mxu0 0
      %2825 = vmatmul.mubr.bf16.gmra.mxu0 %v2734
      %v2826 = vpop.f32.mrf.mxu0
      %v2827 = vadd.f32 0.0, %v2826
      %v2828 = vpop.f32.mrf.mxu0
      %v2829 = vpop.f32.mrf.mxu0
      %v2830 = vadd.f32 0.0, %v2829
      %v2831 = vpop.f32.mrf.mxu0
      %2832 = vmatprep.mubr.bf16.mxu0 0
      %2833 = vmatmul.mubr.bf16.gmra.mxu0 %v2737
      %v2834 = vpop.f32.mrf.mxu0
      %v2835 = vadd.f32 0.0, %v2834
      %v2836 = vpop.f32.mrf.mxu0
      %v2837 = vpop.f32.mrf.mxu0
      %v2838 = vadd.f32 0.0, %v2837
      %v2839 = vpop.f32.mrf.mxu0
      %2840 = vmatprep.mubr.bf16.mxu0 0
      %2841 = vmatmul.mubr.bf16.gmra.mxu0 %v2740
      %v2842 = vpop.f32.mrf.mxu0
      %v2843 = vadd.f32 0.0, %v2842
      %v2844 = vpop.f32.mrf.mxu0
      %v2845 = vpop.f32.mrf.mxu0
      %v2846 = vadd.f32 0.0, %v2845
      %v2847 = vpop.f32.mrf.mxu0
      %2848 = vmatprep.mubr.bf16.mxu0 0
      %2849 = vmatmul.mubr.bf16.gmra.mxu0 %v2743
      %v2850 = vpop.f32.mrf.mxu0
      %v2851 = vadd.f32 0.0, %v2850
      %v2852 = vpop.f32.mrf.mxu0
      %v2853 = vpop.f32.mrf.mxu0
      %v2854 = vadd.f32 0.0, %v2853
      %v2855 = vpop.f32.mrf.mxu0
      %2856 = vmatprep.mubr.bf16.mxu0 0
      %2857 = vmatmul.mubr.bf16.gmra.mxu0 %v2746
      %v2858 = vpop.f32.mrf.mxu0
      %v2859 = vadd.f32 0.0, %v2858
      %v2860 = vpop.f32.mrf.mxu0
      %v2861 = vpop.f32.mrf.mxu0
      %v2862 = vadd.f32 0.0, %v2861
      %v2863 = vpop.f32.mrf.mxu0
      %2864 = vmatprep.mubr.bf16.mxu0 0
      %2865 = vmatmul.mubr.bf16.gmra.mxu0 %v2749
      %v2866 = vpop.f32.mrf.mxu0
      %v2867 = vadd.f32 0.0, %v2866
      %v2868 = vpop.f32.mrf.mxu0
      %v2869 = vpop.f32.mrf.mxu0
      %v2870 = vadd.f32 0.0, %v2869
      %v2871 = vpop.f32.mrf.mxu0
      %2872 = vmatprep.mubr.bf16.mxu0 0
      %2873 = vmatmul.mubr.bf16.gmra.mxu0 %v2752
      %v2874 = vpop.f32.mrf.mxu0
      %v2875 = vadd.f32 0.0, %v2874
      %v2876 = vpop.f32.mrf.mxu0
      %v2877 = vpop.f32.mrf.mxu0
      %v2878 = vadd.f32 0.0, %v2877
      %v2879 = vpop.f32.mrf.mxu0
      %2880 = vmatprep.mubr.bf16.mxu0 0
      %2881 = vmatmul.mubr.bf16.gmra.mxu0 %v2755
      %v2882 = vpop.f32.mrf.mxu0
      %v2883 = vadd.f32 0.0, %v2882
      %v2884 = vpop.f32.mrf.mxu0
      %v2885 = vpop.f32.mrf.mxu0
      %v2886 = vadd.f32 0.0, %v2885
      %v2887 = vpop.f32.mrf.mxu0
      %2888 = vmatprep.mubr.bf16.mxu0 0
      %2889 = vmatmul.mubr.bf16.gmra.mxu0 %v2758
      %v2890 = vpop.f32.mrf.mxu0
      %v2891 = vadd.f32 0.0, %v2890
      %v2892 = vpop.f32.mrf.mxu0
      %v2893 = vpop.f32.mrf.mxu0
      %v2894 = vadd.f32 0.0, %v2893
      %v2895 = vpop.f32.mrf.mxu0
      %2896 = vmatprep.mubr.bf16.mxu0 0
      %2897 = vmatmul.mubr.bf16.gmra.mxu0 %v2761
      %v2898 = vpop.f32.mrf.mxu0
      %v2899 = vadd.f32 0.0, %v2898
      %v2900 = vpop.f32.mrf.mxu0
      %v2901 = vpop.f32.mrf.mxu0
      %v2902 = vadd.f32 0.0, %v2901
      %v2903 = vpop.f32.mrf.mxu0
      %2904 = vmatprep.mubr.bf16.mxu0 0
      %2905 = vmatmul.mubr.bf16.gmra.mxu0 %v2764
      %v2906 = vpop.f32.mrf.mxu0
      %v2907 = vadd.f32 0.0, %v2906
      %v2908 = vpop.f32.mrf.mxu0
      %v2909 = vpop.f32.mrf.mxu0
      %v2910 = vadd.f32 0.0, %v2909
      %v2911 = vpop.f32.mrf.mxu0
      %2912 = vmatprep.mubr.bf16.mxu0 0
      %2913 = vmatmul.mubr.bf16.gmra.mxu0 %v2767
      %v2914 = vpop.f32.mrf.mxu0
      %v2915 = vadd.f32 0.0, %v2914
      %v2916 = vpop.f32.mrf.mxu0
      %v2917 = vpop.f32.mrf.mxu0
      %v2918 = vadd.f32 0.0, %v2917
      %v2919 = vpop.f32.mrf.mxu0
      %2920 = vmatprep.mubr.bf16.mxu0 0
      %2921 = vmatmul.mubr.bf16.gmra.mxu0 %v2770
      %v2922 = vpop.f32.mrf.mxu0
      %v2923 = vadd.f32 0.0, %v2922
      %v2924 = vpop.f32.mrf.mxu0
      %v2925 = vpop.f32.mrf.mxu0
      %v2926 = vadd.f32 0.0, %v2925
      %v2927 = vpop.f32.mrf.mxu0
      %2928 = vmatprep.mubr.bf16.mxu0 0
      %2929 = vmatmul.mubr.bf16.gmra.mxu0 %v2773
      %v2930 = vpop.f32.mrf.mxu0
      %v2931 = vadd.f32 0.0, %v2930
      %v2932 = vpop.f32.mrf.mxu0
      %v2933 = vpop.f32.mrf.mxu0
      %v2934 = vadd.f32 0.0, %v2933
      %v2935 = vpop.f32.mrf.mxu0
      %2936 = vmatprep.mubr.bf16.mxu0 0
      %2937 = vmatmul.mubr.bf16.gmra.mxu0 %v2776
      %v2938 = vpop.f32.mrf.mxu0
      %v2939 = vadd.f32 0.0, %v2938
      %v2940 = vpop.f32.mrf.mxu0
      %v2941 = vpop.f32.mrf.mxu0
      %v2942 = vadd.f32 0.0, %v2941
      %v2943 = vpop.f32.mrf.mxu0
      %2944 = vmatprep.mubr.bf16.mxu0 0
      %2945 = vmatmul.mubr.bf16.gmra.mxu0 %v2779
      %v2946 = vpop.f32.mrf.mxu0
      %v2947 = vadd.f32 0.0, %v2946
      %v2948 = vpop.f32.mrf.mxu0
      %v2949 = vpop.f32.mrf.mxu0
      %v2950 = vadd.f32 0.0, %v2949
      %v2951 = vpop.f32.mrf.mxu0
      %2952 = vmatprep.mubr.bf16.mxu0 0
      %2953 = vmatmul.mubr.bf16.gmra.mxu0 %v2782
      %v2954 = vpop.f32.mrf.mxu0
      %v2955 = vadd.f32 0.0, %v2954
      %v2956 = vpop.f32.mrf.mxu0
      %v2957 = vpop.f32.mrf.mxu0
      %v2958 = vadd.f32 0.0, %v2957
      %v2959 = vpop.f32.mrf.mxu0
      %2960 = vdwg.mxu0
      %v2961 = vadd.f32 %v2607, %v2819
      %v2962 = vadd.f32 %v2608, %v2822
      %v2963 = vadd.f32 %v2609, %v2827
      %v2964 = vadd.f32 %v2610, %v2830
      %v2965 = vadd.f32 %v2611, %v2835
      %v2966 = vadd.f32 %v2612, %v2838
      %v2967 = vadd.f32 %v2613, %v2843
      %v2968 = vadd.f32 %v2614, %v2846
      %v2969 = vadd.f32 %v2615, %v2851
      %v2970 = vadd.f32 %v2616, %v2854
      %v2971 = vadd.f32 %v2617, %v2859
      %v2972 = vadd.f32 %v2618, %v2862
      %v2973 = vadd.f32 %v2619, %v2867
      %v2974 = vadd.f32 %v2620, %v2870
      %v2975 = vadd.f32 %v2621, %v2875
      %v2976 = vadd.f32 %v2622, %v2878
      %v2977 = vadd.f32 %v2623, %v2883
      %v2978 = vadd.f32 %v2624, %v2886
      %v2979 = vadd.f32 %v2625, %v2891
      %v2980 = vadd.f32 %v2626, %v2894
      %v2981 = vadd.f32 %v2627, %v2899
      %v2982 = vadd.f32 %v2628, %v2902
      %v2983 = vadd.f32 %v2629, %v2907
      %v2984 = vadd.f32 %v2630, %v2910
      %v2985 = vadd.f32 %v2631, %v2915
      %v2986 = vadd.f32 %v2632, %v2918
      %v2987 = vadd.f32 %v2633, %v2923
      %v2988 = vadd.f32 %v2634, %v2926
      %v2989 = vadd.f32 %v2635, %v2931
      %v2990 = vadd.f32 %v2636, %v2934
      %v2991 = vadd.f32 %v2637, %v2939
      %v2992 = vadd.f32 %v2638, %v2942
      %v2993 = vadd.f32 %v2639, %v2947
      %v2994 = vadd.f32 %v2640, %v2950
      %v2995 = vadd.f32 %v2641, %v2955
      %v2996 = vadd.f32 %v2642, %v2958
      %v2997 = vld [vmem:[%s226 + $0x26] sm:$0xff]
      %v2998 = vld [vmem:[%s226 + $0x2e] sm:$0xff]
      %v2999 = vld [vmem:[%s226 + $0x36] sm:$0xff]
      %v3000 = vld [vmem:[%s226 + $0x3e] sm:$0xff]
      %v3001 = vld [vmem:[%s226 + $0x46] sm:$0xff]
      %v3002 = vld [vmem:[%s226 + $0x4e] sm:$0xff]
      %v3003 = vld [vmem:[%s226 + $0x56] sm:$0xff]
      %v3004 = vld [vmem:[%s226 + $0x5e] sm:$0xff]
      %v3005 = vld [vmem:[%s226 + $0x66] sm:$0xff]
      %v3006 = vld [vmem:[%s226 + $0x6e] sm:$0xff]
      %v3007 = vld [vmem:[%s226 + $0x76] sm:$0xff]
      %v3008 = vld [vmem:[%s226 + $0x7e] sm:$0xff]
      %v3009 = vld [vmem:[%s226 + $0x86] sm:$0xff]
      %v3010 = vld [vmem:[%s226 + $0x8e] sm:$0xff]
      %v3011 = vld [vmem:[%s226 + $0x96] sm:$0xff]
      %v3012 = vld [vmem:[%s226 + $0x9e] sm:$0xff]
      %v3013 = vld [vmem:[%s226 + $0xa6] sm:$0xff]
      %v3014 = vld [vmem:[%s226 + $0xae] sm:$0xff]
      %v3015 = vld [vmem:[%s226 + $0xb6] sm:$0xff]
      %v3016 = vld [vmem:[%s226 + $0xbe] sm:$0xff]
      %v3017 = vld [vmem:[%s226 + $0xc6] sm:$0xff]
      %v3018 = vld [vmem:[%s226 + $0xce] sm:$0xff]
      %v3019 = vld [vmem:[%s226 + $0xd6] sm:$0xff]
      %v3020 = vld [vmem:[%s226 + $0xde] sm:$0xff]
      %v3021 = vld [vmem:[%s226 + $0xe6] sm:$0xff]
      %v3022 = vld [vmem:[%s226 + $0xee] sm:$0xff]
      %v3023 = vld [vmem:[%s226 + $0xf6] sm:$0xff]
      %v3024 = vld [vmem:[%s226 + $0xfe] sm:$0xff]
      %v3025 = vld [vmem:[%s226 + $0x106] sm:$0xff]
      %v3026 = vld [vmem:[%s226 + $0x10e] sm:$0xff]
      %v3027 = vld [vmem:[%s226 + $0x116] sm:$0xff]
      %v3028 = vld [vmem:[%s226 + $0x11e] sm:$0xff]
      %v3029 = vld [vmem:[%s226 + $0x126] sm:$0xff]
      %v3030 = vld [vmem:[%s226 + $0x12e] sm:$0xff]
      %v3031 = vld [vmem:[%s226 + $0x136] sm:$0xff]
      %v3032 = vld [vmem:[%s226 + $0x13e] sm:$0xff]
      %v3033 = vpack.c.bf16 %v2998, %v2997
      %v3034 = vpack.c.bf16 %v3000, %v2999
      %v3035 = vpack.c.bf16 %v3002, %v3001
      %v3036 = vpack.c.bf16 %v3004, %v3003
      %v3037 = vpack.c.bf16 %v3006, %v3005
      %v3038 = vpack.c.bf16 %v3008, %v3007
      %v3039 = vpack.c.bf16 %v3010, %v3009
      %v3040 = vpack.c.bf16 %v3012, %v3011
      %v3041 = vpack.c.bf16 %v3014, %v3013
      %v3042 = vpack.c.bf16 %v3016, %v3015
      %v3043 = vpack.c.bf16 %v3018, %v3017
      %v3044 = vpack.c.bf16 %v3020, %v3019
      %v3045 = vpack.c.bf16 %v3022, %v3021
      %v3046 = vpack.c.bf16 %v3024, %v3023
      %v3047 = vpack.c.bf16 %v3026, %v3025
      %v3048 = vpack.c.bf16 %v3028, %v3027
      %v3049 = vpack.c.bf16 %v3030, %v3029
      %v3050 = vpack.c.bf16 %v3032, %v3031
      %s3051 = scalar_lea.vmem %s1, 256
      %v3052 = vld [vmem:[%s3051] sm:$0xf]
      %v3053 = vld [vmem:[%s3051 + $0x4] sm:$0xf]
      %v3054 = vld [vmem:[%s3051 + $0x8] sm:$0xf]
      %v3055 = vld [vmem:[%s3051 + $0xc] sm:$0xf]
      %v3056 = vld [vmem:[%s3051 + $0x10] sm:$0xf]
      %v3057 = vld [vmem:[%s3051 + $0x14] sm:$0xf]
      %v3058 = vld [vmem:[%s3051 + $0x18] sm:$0xf]
      %v3059 = vld [vmem:[%s3051 + $0x1c] sm:$0xf]
      %v3068 = vunpack.c.l.b16 %v3052
      %v3069 = vunpack.c.l.b16 %v3053
      %v3070 = vunpack.c.l.b16 %v3054
      %v3071 = vunpack.c.l.b16 %v3055
      %v3072 = vunpack.c.l.b16 %v3056
      %v3073 = vunpack.c.l.b16 %v3057
      %v3074 = vunpack.c.l.b16 %v3058
      %v3075 = vunpack.c.l.b16 %v3059
      %v3076 = vpack.c.b16 %v3069, %v3068
      %v3077 = vpack.c.b16 %v3071, %v3070
      %v3078 = vpack.c.b16 %v3073, %v3072
      %v3079 = vpack.c.b16 %v3075, %v3074
      %v3085 = vsel %vm386, %v3033, 0
      %v3088 = vsel %vm386, %v3034, 0
      %v3091 = vsel %vm386, %v3035, 0
      %v3094 = vsel %vm386, %v3036, 0
      %v3097 = vsel %vm386, %v3037, 0
      %v3100 = vsel %vm386, %v3038, 0
      %v3103 = vsel %vm386, %v3039, 0
      %v3106 = vsel %vm386, %v3040, 0
      %v3109 = vsel %vm386, %v3041, 0
      %v3112 = vsel %vm386, %v3042, 0
      %v3115 = vsel %vm386, %v3043, 0
      %v3118 = vsel %vm386, %v3044, 0
      %v3121 = vsel %vm386, %v3045, 0
      %v3124 = vsel %vm386, %v3046, 0
      %v3127 = vsel %vm386, %v3047, 0
      %v3130 = vsel %vm386, %v3048, 0
      %v3133 = vsel %vm386, %v3049, 0
      %v3136 = vsel %vm386, %v3050, 0
      %3138 = vmatprep.subr.bf16.mxu0 0
      %3139 = vmatpush1.bf16.msra.mxu0 0
      %3140 = vmatprep.subr.bf16.mxu0 0
      %3141 = vmatpush1.bf16.msra.mxu0 0
      %3142 = vmatprep.subr.bf16.mxu0 0
      %3143 = vmatpush1.bf16.msra.mxu0 0
      %3144 = vmatprep.subr.bf16.mxu0 0
      %3145 = vmatpush1.bf16.msra.mxu0 0
      %3146 = vmatprep.subr.bf16.mxu0 0
      %3147 = vmatpush1.bf16.msra.mxu0 %v3079
      %3148 = vmatprep.subr.bf16.mxu0 0
      %3149 = vmatpush1.bf16.msra.mxu0 %v3078
      %3150 = vmatprep.subr.bf16.mxu0 0
      %3151 = vmatpush1.bf16.msra.mxu0 %v3077
      %3152 = vmatprep.subr.bf16.mxu0 0
      %3153 = vmatpush1.bf16.msra.mxu0 %v3076
      %3154 = vmatprep.subr.bf16.mxu0 0
      %3155 = vmatpush2.bf16.msra.mxu0 0
      %3156 = vmatprep.subr.bf16.mxu0 0
      %3157 = vmatpush2.bf16.msra.mxu0 0
      %3158 = vmatprep.subr.bf16.mxu0 0
      %3159 = vmatpush2.bf16.msra.mxu0 0
      %3160 = vmatprep.subr.bf16.mxu0 0
      %3161 = vmatpush2.bf16.msra.mxu0 0
      %3162 = vmatprep.subr.bf16.mxu0 0
      %3163 = vmatpush2.bf16.msra.mxu0 0
      %3164 = vmatprep.subr.bf16.mxu0 0
      %3165 = vmatpush2.bf16.msra.mxu0 0
      %3166 = vmatprep.subr.bf16.mxu0 0
      %3167 = vmatpush2.bf16.msra.mxu0 0
      %3168 = vmatprep.subr.bf16.mxu0 0
      %3169 = vmatpush2.bf16.msra.mxu0 0
      %3170 = vmatprep.mubr.bf16.mxu0 0
      %3171 = vmatmul.mubr.bf16.gmra.mxu0 %v3085
      %v3172 = vpop.f32.mrf.mxu0
      %v3173 = vadd.f32 0.0, %v3172
      %v3174 = vpop.f32.mrf.mxu0
      %v3175 = vpop.f32.mrf.mxu0
      %v3176 = vadd.f32 0.0, %v3175
      %v3177 = vpop.f32.mrf.mxu0
      %3178 = vmatprep.mubr.bf16.mxu0 0
      %3179 = vmatmul.mubr.bf16.gmra.mxu0 %v3088
      %v3180 = vpop.f32.mrf.mxu0
      %v3181 = vadd.f32 0.0, %v3180
      %v3182 = vpop.f32.mrf.mxu0
      %v3183 = vpop.f32.mrf.mxu0
      %v3184 = vadd.f32 0.0, %v3183
      %v3185 = vpop.f32.mrf.mxu0
      %3186 = vmatprep.mubr.bf16.mxu0 0
      %3187 = vmatmul.mubr.bf16.gmra.mxu0 %v3091
      %v3188 = vpop.f32.mrf.mxu0
      %v3189 = vadd.f32 0.0, %v3188
      %v3190 = vpop.f32.mrf.mxu0
      %v3191 = vpop.f32.mrf.mxu0
      %v3192 = vadd.f32 0.0, %v3191
      %v3193 = vpop.f32.mrf.mxu0
      %3194 = vmatprep.mubr.bf16.mxu0 0
      %3195 = vmatmul.mubr.bf16.gmra.mxu0 %v3094
      %v3196 = vpop.f32.mrf.mxu0
      %v3197 = vadd.f32 0.0, %v3196
      %v3198 = vpop.f32.mrf.mxu0
      %v3199 = vpop.f32.mrf.mxu0
      %v3200 = vadd.f32 0.0, %v3199
      %v3201 = vpop.f32.mrf.mxu0
      %3202 = vmatprep.mubr.bf16.mxu0 0
      %3203 = vmatmul.mubr.bf16.gmra.mxu0 %v3097
      %v3204 = vpop.f32.mrf.mxu0
      %v3205 = vadd.f32 0.0, %v3204
      %v3206 = vpop.f32.mrf.mxu0
      %v3207 = vpop.f32.mrf.mxu0
      %v3208 = vadd.f32 0.0, %v3207
      %v3209 = vpop.f32.mrf.mxu0
      %3210 = vmatprep.mubr.bf16.mxu0 0
      %3211 = vmatmul.mubr.bf16.gmra.mxu0 %v3100
      %v3212 = vpop.f32.mrf.mxu0
      %v3213 = vadd.f32 0.0, %v3212
      %v3214 = vpop.f32.mrf.mxu0
      %v3215 = vpop.f32.mrf.mxu0
      %v3216 = vadd.f32 0.0, %v3215
      %v3217 = vpop.f32.mrf.mxu0
      %3218 = vmatprep.mubr.bf16.mxu0 0
      %3219 = vmatmul.mubr.bf16.gmra.mxu0 %v3103
      %v3220 = vpop.f32.mrf.mxu0
      %v3221 = vadd.f32 0.0, %v3220
      %v3222 = vpop.f32.mrf.mxu0
      %v3223 = vpop.f32.mrf.mxu0
      %v3224 = vadd.f32 0.0, %v3223
      %v3225 = vpop.f32.mrf.mxu0
      %3226 = vmatprep.mubr.bf16.mxu0 0
      %3227 = vmatmul.mubr.bf16.gmra.mxu0 %v3106
      %v3228 = vpop.f32.mrf.mxu0
      %v3229 = vadd.f32 0.0, %v3228
      %v3230 = vpop.f32.mrf.mxu0
      %v3231 = vpop.f32.mrf.mxu0
      %v3232 = vadd.f32 0.0, %v3231
      %v3233 = vpop.f32.mrf.mxu0
      %3234 = vmatprep.mubr.bf16.mxu0 0
      %3235 = vmatmul.mubr.bf16.gmra.mxu0 %v3109
      %v3236 = vpop.f32.mrf.mxu0
      %v3237 = vadd.f32 0.0, %v3236
      %v3238 = vpop.f32.mrf.mxu0
      %v3239 = vpop.f32.mrf.mxu0
      %v3240 = vadd.f32 0.0, %v3239
      %v3241 = vpop.f32.mrf.mxu0
      %3242 = vmatprep.mubr.bf16.mxu0 0
      %3243 = vmatmul.mubr.bf16.gmra.mxu0 %v3112
      %v3244 = vpop.f32.mrf.mxu0
      %v3245 = vadd.f32 0.0, %v3244
      %v3246 = vpop.f32.mrf.mxu0
      %v3247 = vpop.f32.mrf.mxu0
      %v3248 = vadd.f32 0.0, %v3247
      %v3249 = vpop.f32.mrf.mxu0
      %3250 = vmatprep.mubr.bf16.mxu0 0
      %3251 = vmatmul.mubr.bf16.gmra.mxu0 %v3115
      %v3252 = vpop.f32.mrf.mxu0
      %v3253 = vadd.f32 0.0, %v3252
      %v3254 = vpop.f32.mrf.mxu0
      %v3255 = vpop.f32.mrf.mxu0
      %v3256 = vadd.f32 0.0, %v3255
      %v3257 = vpop.f32.mrf.mxu0
      %3258 = vmatprep.mubr.bf16.mxu0 0
      %3259 = vmatmul.mubr.bf16.gmra.mxu0 %v3118
      %v3260 = vpop.f32.mrf.mxu0
      %v3261 = vadd.f32 0.0, %v3260
      %v3262 = vpop.f32.mrf.mxu0
      %v3263 = vpop.f32.mrf.mxu0
      %v3264 = vadd.f32 0.0, %v3263
      %v3265 = vpop.f32.mrf.mxu0
      %3266 = vmatprep.mubr.bf16.mxu0 0
      %3267 = vmatmul.mubr.bf16.gmra.mxu0 %v3121
      %v3268 = vpop.f32.mrf.mxu0
      %v3269 = vadd.f32 0.0, %v3268
      %v3270 = vpop.f32.mrf.mxu0
      %v3271 = vpop.f32.mrf.mxu0
      %v3272 = vadd.f32 0.0, %v3271
      %v3273 = vpop.f32.mrf.mxu0
      %3274 = vmatprep.mubr.bf16.mxu0 0
      %3275 = vmatmul.mubr.bf16.gmra.mxu0 %v3124
      %v3276 = vpop.f32.mrf.mxu0
      %v3277 = vadd.f32 0.0, %v3276
      %v3278 = vpop.f32.mrf.mxu0
      %v3279 = vpop.f32.mrf.mxu0
      %v3280 = vadd.f32 0.0, %v3279
      %v3281 = vpop.f32.mrf.mxu0
      %3282 = vmatprep.mubr.bf16.mxu0 0
      %3283 = vmatmul.mubr.bf16.gmra.mxu0 %v3127
      %v3284 = vpop.f32.mrf.mxu0
      %v3285 = vadd.f32 0.0, %v3284
      %v3286 = vpop.f32.mrf.mxu0
      %v3287 = vpop.f32.mrf.mxu0
      %v3288 = vadd.f32 0.0, %v3287
      %v3289 = vpop.f32.mrf.mxu0
      %3290 = vmatprep.mubr.bf16.mxu0 0
      %3291 = vmatmul.mubr.bf16.gmra.mxu0 %v3130
      %v3292 = vpop.f32.mrf.mxu0
      %v3293 = vadd.f32 0.0, %v3292
      %v3294 = vpop.f32.mrf.mxu0
      %v3295 = vpop.f32.mrf.mxu0
      %v3296 = vadd.f32 0.0, %v3295
      %v3297 = vpop.f32.mrf.mxu0
      %3298 = vmatprep.mubr.bf16.mxu0 0
      %3299 = vmatmul.mubr.bf16.gmra.mxu0 %v3133
      %v3300 = vpop.f32.mrf.mxu0
      %v3301 = vadd.f32 0.0, %v3300
      %v3302 = vpop.f32.mrf.mxu0
      %v3303 = vpop.f32.mrf.mxu0
      %v3304 = vadd.f32 0.0, %v3303
      %v3305 = vpop.f32.mrf.mxu0
      %3306 = vmatprep.mubr.bf16.mxu0 0
      %3307 = vmatmul.mubr.bf16.gmra.mxu0 %v3136
      %v3308 = vpop.f32.mrf.mxu0
      %v3309 = vadd.f32 0.0, %v3308
      %v3310 = vpop.f32.mrf.mxu0
      %v3311 = vpop.f32.mrf.mxu0
      %v3312 = vadd.f32 0.0, %v3311
      %v3313 = vpop.f32.mrf.mxu0
      %3314 = vdwg.mxu0
      %v3315 = vadd.f32 %v2961, %v3173
      %v3316 = vadd.f32 %v2962, %v3176
      %v3317 = vadd.f32 %v2963, %v3181
      %v3318 = vadd.f32 %v2964, %v3184
      %v3319 = vadd.f32 %v2965, %v3189
      %v3320 = vadd.f32 %v2966, %v3192
      %v3321 = vadd.f32 %v2967, %v3197
      %v3322 = vadd.f32 %v2968, %v3200
      %v3323 = vadd.f32 %v2969, %v3205
      %v3324 = vadd.f32 %v2970, %v3208
      %v3325 = vadd.f32 %v2971, %v3213
      %v3326 = vadd.f32 %v2972, %v3216
      %v3327 = vadd.f32 %v2973, %v3221
      %v3328 = vadd.f32 %v2974, %v3224
      %v3329 = vadd.f32 %v2975, %v3229
      %v3330 = vadd.f32 %v2976, %v3232
      %v3331 = vadd.f32 %v2977, %v3237
      %v3332 = vadd.f32 %v2978, %v3240
      %v3333 = vadd.f32 %v2979, %v3245
      %v3334 = vadd.f32 %v2980, %v3248
      %v3335 = vadd.f32 %v2981, %v3253
      %v3336 = vadd.f32 %v2982, %v3256
      %v3337 = vadd.f32 %v2983, %v3261
      %v3338 = vadd.f32 %v2984, %v3264
      %v3339 = vadd.f32 %v2985, %v3269
      %v3340 = vadd.f32 %v2986, %v3272
      %v3341 = vadd.f32 %v2987, %v3277
      %v3342 = vadd.f32 %v2988, %v3280
      %v3343 = vadd.f32 %v2989, %v3285
      %v3344 = vadd.f32 %v2990, %v3288
      %v3345 = vadd.f32 %v2991, %v3293
      %v3346 = vadd.f32 %v2992, %v3296
      %v3347 = vadd.f32 %v2993, %v3301
      %v3348 = vadd.f32 %v2994, %v3304
      %v3349 = vadd.f32 %v2995, %v3309
      %v3350 = vadd.f32 %v2996, %v3312
      %v3351 = vld [vmem:[%s2] sm:$0x1]
      %v3353 = vlaneseq
      %v3354 = vshrl.u32 %v3353, 7
      %v3355 = vsub.s32 0, %v3354
      %v3356 = vrot.slane %v3351, %v3355
      %v3358 = vadd.f32 %v3315, %v3356
      %v3359 = vadd.f32 %v3316, %v3356
      %v3360 = vadd.f32 %v3317, %v3356
      %v3361 = vadd.f32 %v3318, %v3356
      %v3362 = vadd.f32 %v3319, %v3356
      %v3363 = vadd.f32 %v3320, %v3356
      %v3364 = vadd.f32 %v3321, %v3356
      %v3365 = vadd.f32 %v3322, %v3356
      %v3366 = vadd.f32 %v3323, %v3356
      %v3367 = vadd.f32 %v3324, %v3356
      %v3368 = vadd.f32 %v3325, %v3356
      %v3369 = vadd.f32 %v3326, %v3356
      %v3370 = vadd.f32 %v3327, %v3356
      %v3371 = vadd.f32 %v3328, %v3356
      %v3372 = vadd.f32 %v3329, %v3356
      %v3373 = vadd.f32 %v3330, %v3356
      %v3374 = vadd.f32 %v3331, %v3356
      %v3375 = vadd.f32 %v3332, %v3356
      %v3376 = vadd.f32 %v3333, %v3356
      %v3377 = vadd.f32 %v3334, %v3356
      %v3378 = vadd.f32 %v3335, %v3356
      %v3379 = vadd.f32 %v3336, %v3356
      %v3380 = vadd.f32 %v3337, %v3356
      %v3381 = vadd.f32 %v3338, %v3356
      %v3382 = vadd.f32 %v3339, %v3356
      %v3383 = vadd.f32 %v3340, %v3356
      %v3384 = vadd.f32 %v3341, %v3356
      %v3385 = vadd.f32 %v3342, %v3356
      %v3386 = vadd.f32 %v3343, %v3356
      %v3387 = vadd.f32 %v3344, %v3356
      %v3388 = vadd.f32 %v3345, %v3356
      %v3389 = vadd.f32 %v3346, %v3356
      %v3390 = vadd.f32 %v3347, %v3356
      %v3391 = vadd.f32 %v3348, %v3356
      %v3392 = vadd.f32 %v3349, %v3356
      %v3393 = vadd.f32 %v3350, %v3356
      %3394 = vst.msk [vmem:[%s231] sm:$0xff] %vm386, %v3358
      %3395 = vst.msk [vmem:[%s231 + $0x8] sm:$0xff] %vm386, %v3359
      %3396 = vst.msk [vmem:[%s231 + $0x10] sm:$0xff] %vm386, %v3360
      %3397 = vst.msk [vmem:[%s231 + $0x18] sm:$0xff] %vm386, %v3361
      %3398 = vst.msk [vmem:[%s231 + $0x20] sm:$0xff] %vm386, %v3362
      %3399 = vst.msk [vmem:[%s231 + $0x28] sm:$0xff] %vm386, %v3363
      %3400 = vst.msk [vmem:[%s231 + $0x30] sm:$0xff] %vm386, %v3364
      %3401 = vst.msk [vmem:[%s231 + $0x38] sm:$0xff] %vm386, %v3365
      %3402 = vst.msk [vmem:[%s231 + $0x40] sm:$0xff] %vm386, %v3366
      %3403 = vst.msk [vmem:[%s231 + $0x48] sm:$0xff] %vm386, %v3367
      %3404 = vst.msk [vmem:[%s231 + $0x50] sm:$0xff] %vm386, %v3368
      %3405 = vst.msk [vmem:[%s231 + $0x58] sm:$0xff] %vm386, %v3369
      %3406 = vst.msk [vmem:[%s231 + $0x60] sm:$0xff] %vm386, %v3370
      %3407 = vst.msk [vmem:[%s231 + $0x68] sm:$0xff] %vm386, %v3371
      %3408 = vst.msk [vmem:[%s231 + $0x70] sm:$0xff] %vm386, %v3372
      %3409 = vst.msk [vmem:[%s231 + $0x78] sm:$0xff] %vm386, %v3373
      %3410 = vst.msk [vmem:[%s231 + $0x80] sm:$0xff] %vm386, %v3374
      %3411 = vst.msk [vmem:[%s231 + $0x88] sm:$0xff] %vm386, %v3375
      %3412 = vst.msk [vmem:[%s231 + $0x90] sm:$0xff] %vm386, %v3376
      %3413 = vst.msk [vmem:[%s231 + $0x98] sm:$0xff] %vm386, %v3377
      %3414 = vst.msk [vmem:[%s231 + $0xa0] sm:$0xff] %vm386, %v3378
      %3415 = vst.msk [vmem:[%s231 + $0xa8] sm:$0xff] %vm386, %v3379
      %3416 = vst.msk [vmem:[%s231 + $0xb0] sm:$0xff] %vm386, %v3380
      %3417 = vst.msk [vmem:[%s231 + $0xb8] sm:$0xff] %vm386, %v3381
      %3418 = vst.msk [vmem:[%s231 + $0xc0] sm:$0xff] %vm386, %v3382
      %3419 = vst.msk [vmem:[%s231 + $0xc8] sm:$0xff] %vm386, %v3383
      %3420 = vst.msk [vmem:[%s231 + $0xd0] sm:$0xff] %vm386, %v3384
      %3421 = vst.msk [vmem:[%s231 + $0xd8] sm:$0xff] %vm386, %v3385
      %3422 = vst.msk [vmem:[%s231 + $0xe0] sm:$0xff] %vm386, %v3386
      %3423 = vst.msk [vmem:[%s231 + $0xe8] sm:$0xff] %vm386, %v3387
      %3424 = vst.msk [vmem:[%s231 + $0xf0] sm:$0xff] %vm386, %v3388
      %3425 = vst.msk [vmem:[%s231 + $0xf8] sm:$0xff] %vm386, %v3389
      %3426 = vst.msk [vmem:[%s231 + $0x100] sm:$0xff] %vm386, %v3390
      %3427 = vst.msk [vmem:[%s231 + $0x108] sm:$0xff] %vm386, %v3391
      %3428 = vst.msk [vmem:[%s231 + $0x110] sm:$0xff] %vm386, %v3392
      %3429 = vst.msk [vmem:[%s231 + $0x118] sm:$0xff] %vm386, %v3393
      %v3430 = vld [vmem:[%s3] sm:$0x7]
      %v3432 = vlaneseq
      %v3433 = vshrl.u32 %v3432, 7
      %v3434 = vsub.s32 0, %v3433
      %v3435 = vrot.slane %v3430, %v3434
      %v3436 = vlaneseq
      %v3437 = vshrl.u32 %v3436, 7
      %v3438 = vsub.s32 1, %v3437
      %v3439 = vrot.slane %v3430, %v3438
      %v3440 = vlaneseq
      %v3441 = vshrl.u32 %v3440, 7
      %v3442 = vsub.s32 2, %v3441
      %v3443 = vrot.slane %v3430, %v3442
      %vm3446 = vcmask 261120
      %v3447 = vsel %vm3446, %v3443, 0
      %3449 = vmatprep.subr.mxu0 0.0
      %3450 = vmatpush1.msra.mxu0 %v3373
      %3451 = vmatprep.subr.mxu0 0.0
      %3452 = vmatpush1.msra.mxu0 %v3372
      %3453 = vmatprep.subr.mxu0 0.0
      %3454 = vmatpush1.msra.mxu0 %v3371
      %3455 = vmatprep.subr.mxu0 0.0
      %3456 = vmatpush1.msra.mxu0 %v3370
      %3457 = vmatprep.subr.mxu0 0.0
      %3458 = vmatpush1.msra.mxu0 %v3369
      %3459 = vmatprep.subr.mxu0 0.0
      %3460 = vmatpush1.msra.mxu0 %v3368
      %3461 = vmatprep.subr.mxu0 0.0
      %3462 = vmatpush1.msra.mxu0 %v3367
      %3463 = vmatprep.subr.mxu0 0.0
      %3464 = vmatpush1.msra.mxu0 %v3366
      %3465 = vmatprep.subr.mxu0 0.0
      %3466 = vmatpush1.msra.mxu0 %v3365
      %3467 = vmatprep.subr.mxu0 0.0
      %3468 = vmatpush1.msra.mxu0 %v3364
      %3469 = vmatprep.subr.mxu0 0.0
      %3470 = vmatpush1.msra.mxu0 %v3363
      %3471 = vmatprep.subr.mxu0 0.0
      %3472 = vmatpush1.msra.mxu0 %v3362
      %3473 = vmatprep.subr.mxu0 0.0
      %3474 = vmatpush1.msra.mxu0 %v3361
      %3475 = vmatprep.subr.mxu0 0.0
      %3476 = vmatpush1.msra.mxu0 %v3360
      %3477 = vmatprep.subr.mxu0 0.0
      %3478 = vmatpush1.msra.mxu0 %v3359
      %3479 = vmatprep.subr.mxu0 0.0
      %3480 = vmatpush1.msra.mxu0 %v3358
      %3481 = vmatprep.subr.mxu0 0.0
      %3482 = vmatpush2.msra.mxu0 %v3389
      %3483 = vmatprep.subr.mxu0 0.0
      %3484 = vmatpush2.msra.mxu0 %v3388
      %3485 = vmatprep.subr.mxu0 0.0
      %3486 = vmatpush2.msra.mxu0 %v3387
      %3487 = vmatprep.subr.mxu0 0.0
      %3488 = vmatpush2.msra.mxu0 %v3386
      %3489 = vmatprep.subr.mxu0 0.0
      %3490 = vmatpush2.msra.mxu0 %v3385
      %3491 = vmatprep.subr.mxu0 0.0
      %3492 = vmatpush2.msra.mxu0 %v3384
      %3493 = vmatprep.subr.mxu0 0.0
      %3494 = vmatpush2.msra.mxu0 %v3383
      %3495 = vmatprep.subr.mxu0 0.0
      %3496 = vmatpush2.msra.mxu0 %v3382
      %3497 = vmatprep.subr.mxu0 0.0
      %3498 = vmatpush2.msra.mxu0 %v3381
      %3499 = vmatprep.subr.mxu0 0.0
      %3500 = vmatpush2.msra.mxu0 %v3380
      %3501 = vmatprep.subr.mxu0 0.0
      %3502 = vmatpush2.msra.mxu0 %v3379
      %3503 = vmatprep.subr.mxu0 0.0
      %3504 = vmatpush2.msra.mxu0 %v3378
      %3505 = vmatprep.subr.mxu0 0.0
      %3506 = vmatpush2.msra.mxu0 %v3377
      %3507 = vmatprep.subr.mxu0 0.0
      %3508 = vmatpush2.msra.mxu0 %v3376
      %3509 = vmatprep.subr.mxu0 0.0
      %3510 = vmatpush2.msra.mxu0 %v3375
      %3511 = vmatprep.subr.mxu0 0.0
      %3512 = vmatpush2.msra.mxu0 %v3374
      %3513 = vmatprep.mubr.f32.mxu0 %v3439
      %3514 = vmatmul.mubr.f32.gmra.mxu0 %v3435
      %v3515 = vpop.f32.mrf.mxu0
      %v3516 = vadd.f32 0.0, %v3515
      %v3517 = vpop.f32.mrf.mxu0
      %3518 = vdwg.mxu0
      %3519 = vmatprep.subr.mxu0 0.0
      %3520 = vmatpush1.msra.mxu0 0.0
      %3521 = vmatprep.subr.mxu0 0.0
      %3522 = vmatpush1.msra.mxu0 0.0
      %3523 = vmatprep.subr.mxu0 0.0
      %3524 = vmatpush1.msra.mxu0 0.0
      %3525 = vmatprep.subr.mxu0 0.0
      %3526 = vmatpush1.msra.mxu0 0.0
      %3527 = vmatprep.subr.mxu0 0.0
      %3528 = vmatpush1.msra.mxu0 0.0
      %3529 = vmatprep.subr.mxu0 0.0
      %3530 = vmatpush1.msra.mxu0 0.0
      %3531 = vmatprep.subr.mxu0 0.0
      %3532 = vmatpush1.msra.mxu0 0.0
      %3533 = vmatprep.subr.mxu0 0.0
      %3534 = vmatpush1.msra.mxu0 0.0
      %3535 = vmatprep.subr.mxu0 0.0
      %3536 = vmatpush1.msra.mxu0 0.0
      %3537 = vmatprep.subr.mxu0 0.0
      %3538 = vmatpush1.msra.mxu0 0.0
      %3539 = vmatprep.subr.mxu0 0.0
      %3540 = vmatpush1.msra.mxu0 0.0
      %3541 = vmatprep.subr.mxu0 0.0
      %3542 = vmatpush1.msra.mxu0 0.0
      %3543 = vmatprep.subr.mxu0 0.0
      %3544 = vmatpush1.msra.mxu0 %v3393
      %3545 = vmatprep.subr.mxu0 0.0
      %3546 = vmatpush1.msra.mxu0 %v3392
      %3547 = vmatprep.subr.mxu0 0.0
      %3548 = vmatpush1.msra.mxu0 %v3391
      %3549 = vmatprep.subr.mxu0 0.0
      %3550 = vmatpush1.msra.mxu0 %v3390
      %3551 = vmatprep.subr.mxu0 0.0
      %3552 = vmatpush2.msra.mxu0 0.0
      %3553 = vmatprep.subr.mxu0 0.0
      %3554 = vmatpush2.msra.mxu0 0.0
      %3555 = vmatprep.subr.mxu0 0.0
      %3556 = vmatpush2.msra.mxu0 0.0
      %3557 = vmatprep.subr.mxu0 0.0
      %3558 = vmatpush2.msra.mxu0 0.0
      %3559 = vmatprep.subr.mxu0 0.0
      %3560 = vmatpush2.msra.mxu0 0.0
      %3561 = vmatprep.subr.mxu0 0.0
      %3562 = vmatpush2.msra.mxu0 0.0
      %3563 = vmatprep.subr.mxu0 0.0
      %3564 = vmatpush2.msra.mxu0 0.0
      %3565 = vmatprep.subr.mxu0 0.0
      %3566 = vmatpush2.msra.mxu0 0.0
      %3567 = vmatprep.subr.mxu0 0.0
      %3568 = vmatpush2.msra.mxu0 0.0
      %3569 = vmatprep.subr.mxu0 0.0
      %3570 = vmatpush2.msra.mxu0 0.0
      %3571 = vmatprep.subr.mxu0 0.0
      %3572 = vmatpush2.msra.mxu0 0.0
      %3573 = vmatprep.subr.mxu0 0.0
      %3574 = vmatpush2.msra.mxu0 0.0
      %3575 = vmatprep.subr.mxu0 0.0
      %3576 = vmatpush2.msra.mxu0 0.0
      %3577 = vmatprep.subr.mxu0 0.0
      %3578 = vmatpush2.msra.mxu0 0.0
      %3579 = vmatprep.subr.mxu0 0.0
      %3580 = vmatpush2.msra.mxu0 0.0
      %3581 = vmatprep.subr.mxu0 0.0
      %3582 = vmatpush2.msra.mxu0 0.0
      %3583 = vmatprep.mubr.f32.mxu0 0.0
      %3584 = vmatmul.mubr.f32.gmra.mxu0 %v3447
      %v3585 = vpop.f32.mrf.mxu0
      %v3586 = vadd.f32 %v3516, %v3585
      %v3587 = vpop.f32.mrf.mxu0
      %3588 = vdwg.mxu0
      %vm3589 = vcmask 516096
      %3590 = vst.msk [vmem:[%s235] sm:$0x1] %vm3589, %v3586
      %v3591 = vmul.f32 %v3358, %v3358
      %v3592 = vmul.f32 %v3359, %v3359
      %v3593 = vmul.f32 %v3360, %v3360
      %v3594 = vmul.f32 %v3361, %v3361
      %v3595 = vmul.f32 %v3362, %v3362
      %v3596 = vmul.f32 %v3363, %v3363
      %v3597 = vmul.f32 %v3364, %v3364
      %v3598 = vmul.f32 %v3365, %v3365
      %v3599 = vmul.f32 %v3366, %v3366
      %v3600 = vmul.f32 %v3367, %v3367
      %v3601 = vmul.f32 %v3368, %v3368
      %v3602 = vmul.f32 %v3369, %v3369
      %v3603 = vmul.f32 %v3370, %v3370
      %v3604 = vmul.f32 %v3371, %v3371
      %v3605 = vmul.f32 %v3372, %v3372
      %v3606 = vmul.f32 %v3373, %v3373
      %v3607 = vmul.f32 %v3374, %v3374
      %v3608 = vmul.f32 %v3375, %v3375
      %v3609 = vmul.f32 %v3376, %v3376
      %v3610 = vmul.f32 %v3377, %v3377
      %v3611 = vmul.f32 %v3378, %v3378
      %v3612 = vmul.f32 %v3379, %v3379
      %v3613 = vmul.f32 %v3380, %v3380
      %v3614 = vmul.f32 %v3381, %v3381
      %v3615 = vmul.f32 %v3382, %v3382
      %v3616 = vmul.f32 %v3383, %v3383
      %v3617 = vmul.f32 %v3384, %v3384
      %v3618 = vmul.f32 %v3385, %v3385
      %v3619 = vmul.f32 %v3386, %v3386
      %v3620 = vmul.f32 %v3387, %v3387
      %v3621 = vmul.f32 %v3388, %v3388
      %v3622 = vmul.f32 %v3389, %v3389
      %v3623 = vmul.f32 %v3390, %v3390
      %v3624 = vmul.f32 %v3391, %v3391
      %v3625 = vmul.f32 %v3392, %v3392
      %v3626 = vmul.f32 %v3393, %v3393
      %3627 = vmatprep.subr.mxu0 0.0
      %3628 = vmatpush1.msra.mxu0 %v3606
      %3629 = vmatprep.subr.mxu0 0.0
      %3630 = vmatpush1.msra.mxu0 %v3605
      %3631 = vmatprep.subr.mxu0 0.0
      %3632 = vmatpush1.msra.mxu0 %v3604
      %3633 = vmatprep.subr.mxu0 0.0
      %3634 = vmatpush1.msra.mxu0 %v3603
      %3635 = vmatprep.subr.mxu0 0.0
      %3636 = vmatpush1.msra.mxu0 %v3602
      %3637 = vmatprep.subr.mxu0 0.0
      %3638 = vmatpush1.msra.mxu0 %v3601
      %3639 = vmatprep.subr.mxu0 0.0
      %3640 = vmatpush1.msra.mxu0 %v3600
      %3641 = vmatprep.subr.mxu0 0.0
      %3642 = vmatpush1.msra.mxu0 %v3599
      %3643 = vmatprep.subr.mxu0 0.0
      %3644 = vmatpush1.msra.mxu0 %v3598
      %3645 = vmatprep.subr.mxu0 0.0
      %3646 = vmatpush1.msra.mxu0 %v3597
      %3647 = vmatprep.subr.mxu0 0.0
      %3648 = vmatpush1.msra.mxu0 %v3596
      %3649 = vmatprep.subr.mxu0 0.0
      %3650 = vmatpush1.msra.mxu0 %v3595
      %3651 = vmatprep.subr.mxu0 0.0
      %3652 = vmatpush1.msra.mxu0 %v3594
      %3653 = vmatprep.subr.mxu0 0.0
      %3654 = vmatpush1.msra.mxu0 %v3593
      %3655 = vmatprep.subr.mxu0 0.0
      %3656 = vmatpush1.msra.mxu0 %v3592
      %3657 = vmatprep.subr.mxu0 0.0
      %3658 = vmatpush1.msra.mxu0 %v3591
      %3659 = vmatprep.subr.mxu0 0.0
      %3660 = vmatpush2.msra.mxu0 %v3622
      %3661 = vmatprep.subr.mxu0 0.0
      %3662 = vmatpush2.msra.mxu0 %v3621
      %3663 = vmatprep.subr.mxu0 0.0
      %3664 = vmatpush2.msra.mxu0 %v3620
      %3665 = vmatprep.subr.mxu0 0.0
      %3666 = vmatpush2.msra.mxu0 %v3619
      %3667 = vmatprep.subr.mxu0 0.0
      %3668 = vmatpush2.msra.mxu0 %v3618
      %3669 = vmatprep.subr.mxu0 0.0
      %3670 = vmatpush2.msra.mxu0 %v3617
      %3671 = vmatprep.subr.mxu0 0.0
      %3672 = vmatpush2.msra.mxu0 %v3616
      %3673 = vmatprep.subr.mxu0 0.0
      %3674 = vmatpush2.msra.mxu0 %v3615
      %3675 = vmatprep.subr.mxu0 0.0
      %3676 = vmatpush2.msra.mxu0 %v3614
      %3677 = vmatprep.subr.mxu0 0.0
      %3678 = vmatpush2.msra.mxu0 %v3613
      %3679 = vmatprep.subr.mxu0 0.0
      %3680 = vmatpush2.msra.mxu0 %v3612
      %3681 = vmatprep.subr.mxu0 0.0
      %3682 = vmatpush2.msra.mxu0 %v3611
      %3683 = vmatprep.subr.mxu0 0.0
      %3684 = vmatpush2.msra.mxu0 %v3610
      %3685 = vmatprep.subr.mxu0 0.0
      %3686 = vmatpush2.msra.mxu0 %v3609
      %3687 = vmatprep.subr.mxu0 0.0
      %3688 = vmatpush2.msra.mxu0 %v3608
      %3689 = vmatprep.subr.mxu0 0.0
      %3690 = vmatpush2.msra.mxu0 %v3607
      %3691 = vmatprep.mubr.f32.mxu0 %v3439
      %3692 = vmatmul.mubr.f32.gmra.mxu0 %v3435
      %v3693 = vpop.f32.mrf.mxu0
      %v3694 = vadd.f32 0.0, %v3693
      %v3695 = vpop.f32.mrf.mxu0
      %3696 = vdwg.mxu0
      %3697 = vmatprep.subr.mxu0 0.0
      %3698 = vmatpush1.msra.mxu0 0.0
      %3699 = vmatprep.subr.mxu0 0.0
      %3700 = vmatpush1.msra.mxu0 0.0
      %3701 = vmatprep.subr.mxu0 0.0
      %3702 = vmatpush1.msra.mxu0 0.0
      %3703 = vmatprep.subr.mxu0 0.0
      %3704 = vmatpush1.msra.mxu0 0.0
      %3705 = vmatprep.subr.mxu0 0.0
      %3706 = vmatpush1.msra.mxu0 0.0
      %3707 = vmatprep.subr.mxu0 0.0
      %3708 = vmatpush1.msra.mxu0 0.0
      %3709 = vmatprep.subr.mxu0 0.0
      %3710 = vmatpush1.msra.mxu0 0.0
      %3711 = vmatprep.subr.mxu0 0.0
      %3712 = vmatpush1.msra.mxu0 0.0
      %3713 = vmatprep.subr.mxu0 0.0
      %3714 = vmatpush1.msra.mxu0 0.0
      %3715 = vmatprep.subr.mxu0 0.0
      %3716 = vmatpush1.msra.mxu0 0.0
      %3717 = vmatprep.subr.mxu0 0.0
      %3718 = vmatpush1.msra.mxu0 0.0
      %3719 = vmatprep.subr.mxu0 0.0
      %3720 = vmatpush1.msra.mxu0 0.0
      %3721 = vmatprep.subr.mxu0 0.0
      %3722 = vmatpush1.msra.mxu0 %v3626
      %3723 = vmatprep.subr.mxu0 0.0
      %3724 = vmatpush1.msra.mxu0 %v3625
      %3725 = vmatprep.subr.mxu0 0.0
      %3726 = vmatpush1.msra.mxu0 %v3624
      %3727 = vmatprep.subr.mxu0 0.0
      %3728 = vmatpush1.msra.mxu0 %v3623
      %3729 = vmatprep.subr.mxu0 0.0
      %3730 = vmatpush2.msra.mxu0 0.0
      %3731 = vmatprep.subr.mxu0 0.0
      %3732 = vmatpush2.msra.mxu0 0.0
      %3733 = vmatprep.subr.mxu0 0.0
      %3734 = vmatpush2.msra.mxu0 0.0
      %3735 = vmatprep.subr.mxu0 0.0
      %3736 = vmatpush2.msra.mxu0 0.0
      %3737 = vmatprep.subr.mxu0 0.0
      %3738 = vmatpush2.msra.mxu0 0.0
      %3739 = vmatprep.subr.mxu0 0.0
      %3740 = vmatpush2.msra.mxu0 0.0
      %3741 = vmatprep.subr.mxu0 0.0
      %3742 = vmatpush2.msra.mxu0 0.0
      %3743 = vmatprep.subr.mxu0 0.0
      %3744 = vmatpush2.msra.mxu0 0.0
      %3745 = vmatprep.subr.mxu0 0.0
      %3746 = vmatpush2.msra.mxu0 0.0
      %3747 = vmatprep.subr.mxu0 0.0
      %3748 = vmatpush2.msra.mxu0 0.0
      %3749 = vmatprep.subr.mxu0 0.0
      %3750 = vmatpush2.msra.mxu0 0.0
      %3751 = vmatprep.subr.mxu0 0.0
      %3752 = vmatpush2.msra.mxu0 0.0
      %3753 = vmatprep.subr.mxu0 0.0
      %3754 = vmatpush2.msra.mxu0 0.0
      %3755 = vmatprep.subr.mxu0 0.0
      %3756 = vmatpush2.msra.mxu0 0.0
      %3757 = vmatprep.subr.mxu0 0.0
      %3758 = vmatpush2.msra.mxu0 0.0
      %3759 = vmatprep.subr.mxu0 0.0
      %3760 = vmatpush2.msra.mxu0 0.0
      %3761 = vmatprep.mubr.f32.mxu0 0.0
      %3762 = vmatmul.mubr.f32.gmra.mxu0 %v3447
      %v3763 = vpop.f32.mrf.mxu0
      %v3764 = vadd.f32 %v3694, %v3763
      %v3765 = vpop.f32.mrf.mxu0
      %3766 = vdwg.mxu0
      %3767 = vst.msk [vmem:[%s235 + $0x1] sm:$0x1] %vm3589, %v3764
      %p3768 = scmp.lt.s32.totalorder %s17, 1
      %s3769 = scalar_select %p3768, %s17, 1
      %s3770 = smul.addr %s3769, 36
      %s3771 = smul.addr %s3770, 8
      %s3772 = scalar_lea.vmem %s4, %s3771
      %p3773 = scmp.lt.s32.totalorder %s17, 1
      %s3774 = scalar_select %p3773, %s17, 1
      %s3775 = smul.addr %s3774, 2
      %s3776 = scalar_lea.vmem %s5, %s3775
      // Predicated region
      $region37: #{residual_block_forward.4} parent=35 // pred_check
        %p3777 = pneg %p124
      $region38: #{residual_block_forward.4} parent=35 // pred_check_branch
        %3779 = sbr.rel (%p3777) target = $region40
      $region39: #{residual_block_forward.4} parent=35 // pred_region
        _
      $region40: #{residual_block_forward.4} parent=35 // pred_fallthru
        _
      // Predicated region
      $region41: #{residual_block_forward.4} parent=35 // pred_check
        %p3780 = pneg %p150
      $region42: #{residual_block_forward.4} parent=35 // pred_check_branch
        %3782 = sbr.rel (%p3780) target = $region44
      $region43: #{residual_block_forward.4} parent=35 // pred_region
        _
      $region44: #{residual_block_forward.4} parent=35 // pred_fallthru
        _
    $region36: #{residual_block_forward.4} parent=5 // pred_fallthru
      _
    %p3783 = scmp.le.s32.totalorder 2, %s12
    // Predicated region
    $region45: #{residual_block_forward.4} parent=5 // pred_check
      %p3784 = pneg %p3783
    $region46: #{residual_block_forward.4} parent=5 // pred_check_branch
      %3786 = sbr.rel (%p3784) target = $region48
    $region47: #{residual_block_forward.4} parent=5 // pred_region
      %s3787 = ssub.s32 %s12, 2
      // Predicated region
      $region49: #{residual_block_forward.4} parent=47 // pred_check
        %p3788 = pneg %p130
      $region50: #{residual_block_forward.4} parent=47 // pred_check_branch
        %3790 = sbr.rel (%p3788) target = $region52
      $region51: #{residual_block_forward.4} parent=47 // pred_region
        %p3791 = scmp.lt.s32.totalorder %s18, 1
        %s3792 = scalar_select %p3791, %s18, 1
        %s3793 = smul.addr %s3792, 36
        %s3794 = smul.addr %s3793, 8
        %s3795 = scalar_lea.vmem %s4, %s3794
      $region52: #{residual_block_forward.4} parent=47 // pred_fallthru
        _
      // Predicated region
      $region53: #{residual_block_forward.4} parent=47 // pred_check
        %p3796 = pneg %p156
      $region54: #{residual_block_forward.4} parent=47 // pred_check_branch
        %3798 = sbr.rel (%p3796) target = $region56
      $region55: #{residual_block_forward.4} parent=47 // pred_region
        %p3799 = scmp.lt.s32.totalorder %s18, 1
        %s3800 = scalar_select %p3799, %s18, 1
        %s3801 = smul.addr %s3800, 2
        %s3802 = scalar_lea.vmem %s5, %s3801
      $region56: #{residual_block_forward.4} parent=47 // pred_fallthru
        _
    $region48: #{residual_block_forward.4} parent=5 // pred_fallthru
      _
  $region6: #{residual_block_forward.4} parent=0 // loop_footer
    %s16 = sadd.s32 1, %s12
  $region7: #{residual_block_forward.4} parent=0 // loop_footer_branch
    %11 = sbr.rel target = $region3
  $region8: #{residual_block_forward.4} parent=0 // loop_exit
    _

</llo_original>
